<compile_context>
chip_gen: v7x
topology: tpu7x:2x2x1
jax: 0.10.0
libtpu: 0.0.40
codegen_flags: <defaults>
</compile_context>

<pallas_src>
import jax
import jax.numpy as jnp
from jax.experimental import pallas as pl
from jax.experimental.pallas import tpu as pltpu

LN_EPS = 1e-5

# Rows of the packed small-parameter slab.
(ROW_BA1, ROW_WA2,
 ROW_BF1, ROW_G1, ROW_BE1,
 ROW_BF2, ROW_G2, ROW_BE2,
 ROW_BR1, ROW_G3, ROW_BE3,
 ROW_BR2, ROW_G4, ROW_BE4,
 ROW_BR3) = range(15)
N_VEC_ROWS = 16  # padded to a sublane multiple


def _round_up(x, m):
    return ((x + m - 1) // m) * m


def _layernorm(x, gamma, beta):
    mean = jnp.mean(x, axis=-1, keepdims=True)
    var = jnp.mean((x - mean) ** 2, axis=-1, keepdims=True)
    return (x - mean) * jax.lax.rsqrt(var + LN_EPS) * gamma + beta


def head_kernel(hs_ref, feat_ref, vec_ref,
                wa1_ref, wf1_ref, wf2_ref,
                wr1h_ref, wr1f_ref, wr2_ref, wr3_ref,
                out_ref):
    TB, S, H = hs_ref.shape
    D1 = wf1_ref.shape[1]          # 64
    D2 = wf2_ref.shape[1]          # 32
    H2 = wr2_ref.shape[1]          # H // 2
    Lp = out_ref.shape[1]          # padded num_labels

    def row(i, w):                 # (1, w) slice of the packed vector slab
        return vec_ref[i:i + 1, :w]

    # --- attention pooling: Linear(H,H) -> Tanh -> Linear(H,1) -> Softmax(seq)
    hs = hs_ref[...]                                         # (TB, S, H) f32/bf16
    if H % 128 == 0:
        # Lane-aligned H: fold batch*seq onto MXU rows; reshape is layout-free.
        a1 = jnp.tanh(
            jnp.dot(hs.reshape(TB * S, H), wa1_ref[...],
                    preferred_element_type=jnp.float32)
            + row(ROW_BA1, H)).reshape(TB, S, H)
    else:
        # Non-aligned H: keep batched to avoid a per-step VMEM relayout copy.
        a1 = jnp.tanh(
            jnp.einsum('bsh,hk->bsk', hs, wa1_ref[...],
                       preferred_element_type=jnp.float32)
            + row(ROW_BA1, H))
    scores = jnp.sum(a1 * row(ROW_WA2, H), axis=-1, keepdims=True)   # (TB, S, 1)
    # ba2 omitted: softmax over the sequence axis is shift-invariant.  Do NOT
    # expose raw attention scores from this kernel without re-adding it.
    m = jnp.max(scores, axis=1, keepdims=True)
    e = jnp.exp(scores - m)
    attn = e * pl.reciprocal(jnp.sum(e, axis=1, keepdims=True), approx=True)
    attended = jnp.sum(attn * hs, axis=1)                    # (TB, H) f32

    # --- feature processor (Dropout == identity in eval mode)
    f = feat_ref[...]                                        # (TB, 7)
    h1 = jnp.dot(f, wf1_ref[...],
                 preferred_element_type=jnp.float32) + row(ROW_BF1, D1)
    h1 = jnp.maximum(_layernorm(h1, row(ROW_G1, D1), row(ROW_BE1, D1)), 0.0)
    h2 = jnp.dot(h1, wf2_ref[...],
                 preferred_element_type=jnp.float32) + row(ROW_BF2, D2)
    h2 = jnp.maximum(_layernorm(h2, row(ROW_G2, D2), row(ROW_BE2, D2)), 0.0)

    # --- regressor; concat replaced by two dots into one accumulator
    r1 = (jnp.dot(attended.astype(wr1h_ref.dtype), wr1h_ref[...],
                  preferred_element_type=jnp.float32)
          + jnp.dot(h2, wr1f_ref[...], preferred_element_type=jnp.float32)
          + row(ROW_BR1, H))
    r1 = jnp.maximum(_layernorm(r1, row(ROW_G3, H), row(ROW_BE3, H)), 0.0)
    r2 = jnp.dot(r1.astype(wr2_ref.dtype), wr2_ref[...],
                 preferred_element_type=jnp.float32) + row(ROW_BR2, H2)
    r2 = jnp.maximum(_layernorm(r2, row(ROW_G4, H2), row(ROW_BE4, H2)), 0.0)
    out_ref[...] = (jnp.dot(r2, wr3_ref[...],
                            preferred_element_type=jnp.float32)
                    + row(ROW_BR3, Lp))                      # lane-dense (TB, Lp)


def _pack_vec_slab(p, PW):
    """Pack all small vectors into one (N_VEC_ROWS, PW) f32 slab."""
    slab = jnp.zeros((N_VEC_ROWS, PW), jnp.float32)

    def put(s, i, v):
        v = jnp.asarray(v, jnp.float32).reshape(-1)
        return s.at[i, :v.shape[0]].set(v)

    slab = put(slab, ROW_BA1, p["ba1"])
    slab = put(slab, ROW_WA2, p["wa2"])
    slab = put(slab, ROW_BF1, p["bf1"])
    slab = put(slab, ROW_G1, p["g1"])
    slab = put(slab, ROW_BE1, p["be1"])
    slab = put(slab, ROW_BF2, p["bf2"])
    slab = put(slab, ROW_G2, p["g2"])
    slab = put(slab, ROW_BE2, p["be2"])
    slab = put(slab, ROW_BR1, p["br1"])
    slab = put(slab, ROW_G3, p["g3"])
    slab = put(slab, ROW_BE3, p["be3"])
    slab = put(slab, ROW_BR2, p["br2"])
    slab = put(slab, ROW_G4, p["g4"])
    slab = put(slab, ROW_BE4, p["be4"])
    slab = put(slab, ROW_BR3, p["br3"])
    return slab


def _vmem_capacity_bytes():
    try:
        return int(pltpu.get_tpu_info().vmem_capacity_bytes)
    except Exception:
        return 64 * 1024 * 1024          # conservative (v7x per-TC)


def _vmem_estimate(TB, S, H, F, D1, D2, H2, Lp, PW, hs_item, w_item):
    """Rough VMEM footprint: single-buffered weights + double-buffered I/O +
    in-kernel f32 intermediates."""
    weights = (N_VEC_ROWS * PW * 4
               + H * H * w_item            # wa1
               + F * D1 * 4 + D1 * D2 * 4  # wf1, wf2
               + H * H * w_item            # wr1_h
               + D2 * H * 4                # wr1_f
               + H * H2 * w_item           # wr2
               + H2 * Lp * 4)              # wr3 (lane-padded)
    io_tiles = 2 * (TB * S * H * hs_item + TB * F * 4 + TB * Lp * 4)
    scratch = 3 * TB * S * H * 4           # a1 / attn*hs / misc f32 temporaries
    return weights + io_tiles + scratch


def _pick_block_b(B, S, H, F, D1, D2, H2, Lp, PW, hs_item, w_item, vmem_cap):
    """Largest multiple-of-8 batch tile that fits in ~half of physical VMEM
    (generation-aware: ~half the TB on v7x vs v5e/v6e), clipped to the batch,
    keeping grid length >= 2 when the batch allows (megacore-shardable)."""
    budget = vmem_cap // 2
    tb = 8
    for cand in range(256, 7, -8):
        if _vmem_estimate(cand, S, H, F, D1, D2, H2, Lp, PW,
                          hs_item, w_item) <= budget:
            tb = cand
            break
    tb = min(tb, _round_up(B, 8))
    if B > 8:
        tb = min(tb, max(8, _round_up(B, 16) // 2))
    return max(8, tb)


def multilabel_head(hidden_states, features, params, *, block_b=None, use_bf16=None):
    B, S, H = hidden_states.shape
    F = features.shape[1]
    D1 = params["wf1"].shape[1]
    D2 = params["wf2"].shape[1]
    H2 = params["wr2"].shape[1]
    L = params["wr3"].shape[1]
    Lp = _round_up(L, 128)                      # lane-dense output width
    PW = _round_up(max(H, D1, Lp), 128)         # packed-slab width

    if use_bf16 is None:
        # bf16 storage/MXU path when H is lane aligned (production-sized).
        use_bf16 = (H % 128 == 0)
    compute_dtype = jnp.bfloat16 if use_bf16 else jnp.float32
    hs_item = jnp.dtype(compute_dtype).itemsize
    w_item = hs_item

    vmem_cap = _vmem_capacity_bytes()
    TB = block_b if block_b is not None else _pick_block_b(
        B, S, H, F, D1, D2, H2, Lp, PW, hs_item, w_item, vmem_cap)

    Bp = _round_up(max(B, TB), TB)
    if Bp != B:                                 # pad batch to a tile multiple
        hidden_states = jnp.pad(hidden_states, ((0, Bp - B), (0, 0), (0, 0)))
        features = jnp.pad(features, ((0, Bp - B), (0, 0)))

    hidden_states = hidden_states.astype(compute_dtype)   # dominant HBM stream
    features = features.astype(jnp.float32)

    vec_slab = _pack_vec_slab(params, PW)
    wa1 = params["wa1"].astype(compute_dtype)
    wf1 = params["wf1"].astype(jnp.float32)
    wf2 = params["wf2"].astype(jnp.float32)
    wr1_h = params["wr1"][:H].astype(compute_dtype)        # (H, H)
    wr1_f = params["wr1"][H:].astype(jnp.float32)          # (32, H)
    wr2 = params["wr2"].astype(compute_dtype)
    wr3_p = jnp.zeros((H2, Lp), jnp.float32).at[:, :L].set(
        params["wr3"].astype(jnp.float32))

    est = _vmem_estimate(TB, S, H, F, D1, D2, H2, Lp, PW, hs_item, w_item)
    vmem_limit = int(min(max(vmem_cap * 3 // 4, 32 << 20),
                         max(32 << 20, 2 * est)))

    grid = (Bp // TB,)
    args = (hidden_states, features, vec_slab,
            wa1, wf1, wf2, wr1_h, wr1_f, wr2, wr3_p)

    def build(single_buffer_weights):
        wkw = dict(pipeline_mode=pl.Buffered(1)) if single_buffer_weights else {}

        def const2d(shape):
            # Constant index_map -> Pallas skips the re-DMA across grid steps;
            # Buffered(1) also drops the wasted second VMEM buffer.
            return pl.BlockSpec(shape, lambda b: (0, 0), **wkw)

        in_specs = [
            pl.BlockSpec((TB, S, H), lambda b: (b, 0, 0)),
            pl.BlockSpec((TB, F), lambda b: (b, 0)),
            const2d(vec_slab.shape),
            const2d(wa1.shape), const2d(wf1.shape), const2d(wf2.shape),
            const2d(wr1_h.shape), const2d(wr1_f.shape),
            const2d(wr2.shape), const2d(wr3_p.shape),
        ]
        out_specs = pl.BlockSpec((TB, Lp), lambda b: (b, 0))
        return pl.pallas_call(
            head_kernel,
            out_shape=jax.ShapeDtypeStruct((Bp, Lp), jnp.float32),
            grid=grid,
            in_specs=in_specs,
            out_specs=out_specs,
            compiler_params=pltpu.CompilerParams(
                dimension_semantics=("parallel",),
                vmem_limit_bytes=vmem_limit),
        )

    try:
        out = jax.block_until_ready(build(True)(*args))
    except Exception:
        # TODO(synk): pipeline_mode=pl.Buffered(1) not supported by this jax
        # version; fall back to default double-buffered weight specs.
        out = build(False)(*args)

    return out[:B, :L]


def reference_head(hidden_states, features, p):
    """Pure-JAX reference mirroring the PyTorch forward (eval mode)."""
    a1 = jnp.tanh(hidden_states @ p["wa1"] + p["ba1"])                        # (B,S,H)
    scores = jnp.sum(a1 * p["wa2"][None], axis=-1, keepdims=True) + p["ba2"]  # (B,S,1)
    attn = jax.nn.softmax(scores, axis=1)
    attended = jnp.sum(attn * hidden_states, axis=1)                          # (B,H)

    h1 = jnp.maximum(_layernorm(features @ p["wf1"] + p["bf1"], p["g1"], p["be1"]), 0.0)
    h2 = jnp.maximum(_layernorm(h1 @ p["wf2"] + p["bf2"], p["g2"], p["be2"]), 0.0)

    comb = jnp.concatenate([attended, h2], axis=1)
    r1 = jnp.maximum(_layernorm(comb @ p["wr1"] + p["br1"], p["g3"], p["be3"]), 0.0)
    r2 = jnp.maximum(_layernorm(r1 @ p["wr2"] + p["br2"], p["g4"], p["be4"]), 0.0)
    return r2 @ p["wr3"] + p["br3"]


def init_params(key, hidden_size, num_labels, feat_dim=7):
    H = hidden_size
    keys = jax.random.split(key, 12)

    def lin(k, fi, fo):
        kw, kb = jax.random.split(k)
        w = jax.random.normal(kw, (fi, fo), jnp.float32) / jnp.sqrt(float(fi))
        b = 0.01 * jax.random.normal(kb, (1, fo), jnp.float32)
        return w, b

    p = {}
    # attention: Linear(H,H), Linear(H,1)
    p["wa1"], p["ba1"] = lin(keys[0], H, H)
    wa2, ba2 = lin(keys[1], H, 1)
    p["wa2"], p["ba2"] = wa2.T, ba2            # (1, H) row / (1, 1)
    # feature processor: Linear(7,64)+LN(64), Linear(64,32)+LN(32)
    p["wf1"], p["bf1"] = lin(keys[2], feat_dim, 64)
    p["g1"], p["be1"] = jnp.ones((1, 64), jnp.float32), jnp.zeros((1, 64), jnp.float32)
    p["wf2"], p["bf2"] = lin(keys[3], 64, 32)
    p["g2"], p["be2"] = jnp.ones((1, 32), jnp.float32), jnp.zeros((1, 32), jnp.float32)
    # regressor: Linear(H+32,H)+LN(H), Linear(H,H//2)+LN(H//2), Linear(H//2,num_labels)
    p["wr1"], p["br1"] = lin(keys[4], H + 32, H)
    p["g3"], p["be3"] = jnp.ones((1, H), jnp.float32), jnp.zeros((1, H), jnp.float32)
    p["wr2"], p["br2"] = lin(keys[5], H, H // 2)
    p["g4"], p["be4"] = jnp.ones((1, H // 2), jnp.float32), jnp.zeros((1, H // 2), jnp.float32)
    p["wr3"], p["br3"] = lin(keys[6], H // 2, num_labels)
    return p


if __name__ == "__main__":
    B, S, H = 16, 8, 32          # batch, seq len, hidden_size
    NUM_LABELS, FEAT = 5, 7

    key = jax.random.PRNGKey(0)
    k_hs, k_ft, k_par = jax.random.split(key, 3)
    hidden_states = jax.random.normal(k_hs, (B, S, H), jnp.float32)   # backbone output
    features = jax.random.normal(k_ft, (B, FEAT), jnp.float32)
    params = init_params(k_par, H, NUM_LABELS, FEAT)

    ref = reference_head(hidden_states, features, params)

    # f32 path (auto-selected at non-lane-aligned toy H). The approx EUP
    # reciprocal in the softmax costs a few ulps -> tolerance 5e-3, not 1e-4.
    logits = multilabel_head(hidden_states, features, params)
    logits = jax.block_until_ready(logits)
    assert logits.shape == (B, NUM_LABELS)
    assert jnp.allclose(logits, ref, atol=5e-3, rtol=5e-3), (logits, ref)

    # bf16 storage / MXU path (what a production lane-aligned H would use);
    # compared against the f32 reference with a correspondingly loose tolerance.
    logits_bf16 = multilabel_head(hidden_states, features, params, use_bf16=True)
    logits_bf16 = jax.block_until_ready(logits_bf16)
    assert logits_bf16.shape == (B, NUM_LABELS)
    assert bool(jnp.all(jnp.isfinite(logits_bf16)))
    assert jnp.allclose(logits_bf16, ref, atol=2e-1, rtol=2e-1), (logits_bf16, ref)

    print("KERNEL_OK")
</pallas_src>

<mosaic_0001>
module attributes {stable_mosaic.version = 11 : i64} {
  func.func @head_kernel(%arg0: i32, %arg1: memref<8x8x32xf32, #tpu.memory_space<vmem>>, %arg2: memref<8x7xf32, #tpu.memory_space<vmem>>, %arg3: memref<16x128xf32, #tpu.memory_space<vmem>>, %arg4: memref<32x32xf32, #tpu.memory_space<vmem>>, %arg5: memref<7x64xf32, #tpu.memory_space<vmem>>, %arg6: memref<64x32xf32, #tpu.memory_space<vmem>>, %arg7: memref<32x32xf32, #tpu.memory_space<vmem>>, %arg8: memref<32x32xf32, #tpu.memory_space<vmem>>, %arg9: memref<32x16xf32, #tpu.memory_space<vmem>>, %arg10: memref<16x128xf32, #tpu.memory_space<vmem>>, %arg11: memref<8x128xf32, #tpu.memory_space<vmem>>) attributes {dimension_semantics = [#tpu.dimension_semantics<parallel>], iteration_bounds = array<i64: 2>, scalar_prefetch = 0 : i64, scratch_operands = 0 : i64, tpu.core_type = #tpu.core_type<tc>, window_params = [{transform_indices = @transform_0, window_bounds = array<i64: 8, 8, 32>}, {transform_indices = @transform_1, window_bounds = array<i64: 8, 7>}, {pipeline_mode = #tpu.pipeline_mode<synchronous>, transform_indices = @transform_2, window_bounds = array<i64: 16, 128>}, {pipeline_mode = #tpu.pipeline_mode<synchronous>, transform_indices = @transform_3, window_bounds = array<i64: 32, 32>}, {pipeline_mode = #tpu.pipeline_mode<synchronous>, transform_indices = @transform_4, window_bounds = array<i64: 7, 64>}, {pipeline_mode = #tpu.pipeline_mode<synchronous>, transform_indices = @transform_5, window_bounds = array<i64: 64, 32>}, {pipeline_mode = #tpu.pipeline_mode<synchronous>, transform_indices = @transform_6, window_bounds = array<i64: 32, 32>}, {pipeline_mode = #tpu.pipeline_mode<synchronous>, transform_indices = @transform_7, window_bounds = array<i64: 32, 32>}, {pipeline_mode = #tpu.pipeline_mode<synchronous>, transform_indices = @transform_8, window_bounds = array<i64: 32, 16>}, {pipeline_mode = #tpu.pipeline_mode<synchronous>, transform_indices = @transform_9, window_bounds = array<i64: 16, 128>}, {transform_indices = @transform_10, window_bounds = array<i64: 8, 128>}]} {
    %c0 = arith.constant 0 : index
    %c0_0 = arith.constant 0 : index
    %c0_1 = arith.constant 0 : index
    %0 = vector.load %arg1[%c0, %c0_0, %c0_1] : memref<8x8x32xf32, #tpu.memory_space<vmem>>, vector<8x8x32xf32>
    %c0_2 = arith.constant 0 : index
    %c0_3 = arith.constant 0 : index
    %1 = vector.load %arg4[%c0_2, %c0_3] : memref<32x32xf32, #tpu.memory_space<vmem>>, vector<32x32xf32>
    "tpu.trace_start"() <{level = 10 : i32, message = "bsh,hk->bsk"}> : () -> ()
    %cst = arith.constant dense<0.000000e+00> : vector<8x8x32xf32>
    %2 = tpu.matmul %0, %1, %cst {dimension_numbers = #tpu.dot_dimension_numbers<[2], [0], [0, 1], [1], [0, 0, 0, 1, 1, 1], [], []>} : vector<8x8x32xf32>, vector<32x32xf32>, vector<8x8x32xf32> -> vector<8x8x32xf32>
    "tpu.trace_stop"() : () -> ()
    %c0_4 = arith.constant 0 : index
    %c0_5 = arith.constant 0 : index
    %3 = vector.load %arg3[%c0_4, %c0_5] : memref<16x128xf32, #tpu.memory_space<vmem>>, vector<1x32xf32>
    %4 = vector.shape_cast %3 : vector<1x32xf32> to vector<1x1x32xf32>
    %5 = vector.broadcast %4 : vector<1x1x32xf32> to vector<8x8x32xf32>
    %6 = arith.addf %2, %5 : vector<8x8x32xf32>
    %7 = math.tanh %6 : vector<8x8x32xf32>
    %c1 = arith.constant 1 : index
    %c0_6 = arith.constant 0 : index
    %8 = vector.load %arg3[%c1, %c0_6] : memref<16x128xf32, #tpu.memory_space<vmem>>, vector<1x32xf32>
    %9 = vector.shape_cast %8 : vector<1x32xf32> to vector<1x1x32xf32>
    %10 = vector.broadcast %9 : vector<1x1x32xf32> to vector<8x8x32xf32>
    %11 = arith.mulf %7, %10 : vector<8x8x32xf32>
    %cst_7 = arith.constant dense<0.000000e+00> : vector<8x8xf32>
    %12 = vector.multi_reduction <add>, %11, %cst_7 [2] : vector<8x8x32xf32> to vector<8x8xf32>
    %13 = vector.shape_cast %12 : vector<8x8xf32> to vector<8x8x1xf32>
    %cst_8 = arith.constant dense<0xFF800000> : vector<8x1xf32>
    %14 = vector.multi_reduction <maximumf>, %13, %cst_8 [1] : vector<8x8x1xf32> to vector<8x1xf32>
    %15 = vector.shape_cast %14 : vector<8x1xf32> to vector<8x1x1xf32>
    %16 = vector.broadcast %15 : vector<8x1x1xf32> to vector<8x8x1xf32>
    %17 = arith.subf %13, %16 : vector<8x8x1xf32>
    %18 = math.exp %17 : vector<8x8x1xf32>
    %cst_9 = arith.constant dense<0.000000e+00> : vector<8x1xf32>
    %19 = vector.multi_reduction <add>, %18, %cst_9 [1] : vector<8x8x1xf32> to vector<8x1xf32>
    %20 = vector.shape_cast %19 : vector<8x1xf32> to vector<8x1x1xf32>
    %21 = tpu.reciprocal %20 {approx = true} : vector<8x1x1xf32> -> vector<8x1x1xf32>
    %22 = vector.broadcast %21 : vector<8x1x1xf32> to vector<8x8x1xf32>
    %23 = arith.mulf %18, %22 : vector<8x8x1xf32>
    %24 = vector.broadcast %23 : vector<8x8x1xf32> to vector<8x8x32xf32>
    %25 = arith.mulf %24, %0 : vector<8x8x32xf32>
    %cst_10 = arith.constant dense<0.000000e+00> : vector<8x32xf32>
    %26 = vector.multi_reduction <add>, %25, %cst_10 [1] : vector<8x8x32xf32> to vector<8x32xf32>
    %c0_11 = arith.constant 0 : index
    %c0_12 = arith.constant 0 : index
    %27 = vector.load %arg2[%c0_11, %c0_12] : memref<8x7xf32, #tpu.memory_space<vmem>>, vector<8x7xf32>
    %c0_13 = arith.constant 0 : index
    %c0_14 = arith.constant 0 : index
    %28 = vector.load %arg5[%c0_13, %c0_14] : memref<7x64xf32, #tpu.memory_space<vmem>>, vector<7x64xf32>
    %cst_15 = arith.constant dense<0.000000e+00> : vector<8x64xf32>
    %29 = tpu.matmul %27, %28, %cst_15 {dimension_numbers = #tpu.dot_dimension_numbers<[1], [0], [0], [1], [0, 0, 1, 1], [], []>} : vector<8x7xf32>, vector<7x64xf32>, vector<8x64xf32> -> vector<8x64xf32>
    %c2 = arith.constant 2 : index
    %c0_16 = arith.constant 0 : index
    %30 = vector.load %arg3[%c2, %c0_16] : memref<16x128xf32, #tpu.memory_space<vmem>>, vector<1x64xf32>
    %31 = vector.broadcast %30 : vector<1x64xf32> to vector<8x64xf32>
    %32 = arith.addf %29, %31 : vector<8x64xf32>
    %c3 = arith.constant 3 : index
    %c0_17 = arith.constant 0 : index
    %33 = vector.load %arg3[%c3, %c0_17] : memref<16x128xf32, #tpu.memory_space<vmem>>, vector<1x64xf32>
    %c4 = arith.constant 4 : index
    %c0_18 = arith.constant 0 : index
    %34 = vector.load %arg3[%c4, %c0_18] : memref<16x128xf32, #tpu.memory_space<vmem>>, vector<1x64xf32>
    %cst_19 = arith.constant dense<0.000000e+00> : vector<8xf32>
    %35 = vector.multi_reduction <add>, %32, %cst_19 [1] : vector<8x64xf32> to vector<8xf32>
    %36 = vector.shape_cast %35 : vector<8xf32> to vector<8x1xf32>
    %cst_20 = arith.constant 6.400000e+01 : f32
    %37 = vector.broadcast %cst_20 : f32 to vector<8x1xf32>
    %38 = arith.divf %36, %37 : vector<8x1xf32>
    %39 = vector.broadcast %38 : vector<8x1xf32> to vector<8x64xf32>
    %40 = arith.subf %32, %39 : vector<8x64xf32>
    %41 = arith.mulf %40, %40 : vector<8x64xf32>
    %cst_21 = arith.constant dense<0.000000e+00> : vector<8xf32>
    %42 = vector.multi_reduction <add>, %41, %cst_21 [1] : vector<8x64xf32> to vector<8xf32>
    %43 = vector.shape_cast %42 : vector<8xf32> to vector<8x1xf32>
    %cst_22 = arith.constant 6.400000e+01 : f32
    %44 = vector.broadcast %cst_22 : f32 to vector<8x1xf32>
    %45 = arith.divf %43, %44 : vector<8x1xf32>
    %46 = vector.broadcast %38 : vector<8x1xf32> to vector<8x64xf32>
    %47 = arith.subf %32, %46 : vector<8x64xf32>
    %cst_23 = arith.constant 9.99999974E-6 : f32
    %48 = vector.broadcast %cst_23 : f32 to vector<8x1xf32>
    %49 = arith.addf %45, %48 : vector<8x1xf32>
    %50 = math.rsqrt %49 : vector<8x1xf32>
    %51 = vector.broadcast %50 : vector<8x1xf32> to vector<8x64xf32>
    %52 = arith.mulf %47, %51 : vector<8x64xf32>
    %53 = vector.broadcast %33 : vector<1x64xf32> to vector<8x64xf32>
    %54 = arith.mulf %52, %53 : vector<8x64xf32>
    %55 = vector.broadcast %34 : vector<1x64xf32> to vector<8x64xf32>
    %56 = arith.addf %54, %55 : vector<8x64xf32>
    %cst_24 = arith.constant 0.000000e+00 : f32
    %57 = vector.broadcast %cst_24 : f32 to vector<8x64xf32>
    %58 = arith.maximumf %56, %57 : vector<8x64xf32>
    %c0_25 = arith.constant 0 : index
    %c0_26 = arith.constant 0 : index
    %59 = vector.load %arg6[%c0_25, %c0_26] : memref<64x32xf32, #tpu.memory_space<vmem>>, vector<64x32xf32>
    %cst_27 = arith.constant dense<0.000000e+00> : vector<8x32xf32>
    %60 = tpu.matmul %58, %59, %cst_27 {dimension_numbers = #tpu.dot_dimension_numbers<[1], [0], [0], [1], [0, 0, 1, 1], [], []>} : vector<8x64xf32>, vector<64x32xf32>, vector<8x32xf32> -> vector<8x32xf32>
    %c5 = arith.constant 5 : index
    %c0_28 = arith.constant 0 : index
    %61 = vector.load %arg3[%c5, %c0_28] : memref<16x128xf32, #tpu.memory_space<vmem>>, vector<1x32xf32>
    %62 = vector.broadcast %61 : vector<1x32xf32> to vector<8x32xf32>
    %63 = arith.addf %60, %62 : vector<8x32xf32>
    %c6 = arith.constant 6 : index
    %c0_29 = arith.constant 0 : index
    %64 = vector.load %arg3[%c6, %c0_29] : memref<16x128xf32, #tpu.memory_space<vmem>>, vector<1x32xf32>
    %c7 = arith.constant 7 : index
    %c0_30 = arith.constant 0 : index
    %65 = vector.load %arg3[%c7, %c0_30] : memref<16x128xf32, #tpu.memory_space<vmem>>, vector<1x32xf32>
    %cst_31 = arith.constant dense<0.000000e+00> : vector<8xf32>
    %66 = vector.multi_reduction <add>, %63, %cst_31 [1] : vector<8x32xf32> to vector<8xf32>
    %67 = vector.shape_cast %66 : vector<8xf32> to vector<8x1xf32>
    %cst_32 = arith.constant 3.200000e+01 : f32
    %68 = vector.broadcast %cst_32 : f32 to vector<8x1xf32>
    %69 = arith.divf %67, %68 : vector<8x1xf32>
    %70 = vector.broadcast %69 : vector<8x1xf32> to vector<8x32xf32>
    %71 = arith.subf %63, %70 : vector<8x32xf32>
    %72 = arith.mulf %71, %71 : vector<8x32xf32>
    %cst_33 = arith.constant dense<0.000000e+00> : vector<8xf32>
    %73 = vector.multi_reduction <add>, %72, %cst_33 [1] : vector<8x32xf32> to vector<8xf32>
    %74 = vector.shape_cast %73 : vector<8xf32> to vector<8x1xf32>
    %cst_34 = arith.constant 3.200000e+01 : f32
    %75 = vector.broadcast %cst_34 : f32 to vector<8x1xf32>
    %76 = arith.divf %74, %75 : vector<8x1xf32>
    %77 = vector.broadcast %69 : vector<8x1xf32> to vector<8x32xf32>
    %78 = arith.subf %63, %77 : vector<8x32xf32>
    %cst_35 = arith.constant 9.99999974E-6 : f32
    %79 = vector.broadcast %cst_35 : f32 to vector<8x1xf32>
    %80 = arith.addf %76, %79 : vector<8x1xf32>
    %81 = math.rsqrt %80 : vector<8x1xf32>
    %82 = vector.broadcast %81 : vector<8x1xf32> to vector<8x32xf32>
    %83 = arith.mulf %78, %82 : vector<8x32xf32>
    %84 = vector.broadcast %64 : vector<1x32xf32> to vector<8x32xf32>
    %85 = arith.mulf %83, %84 : vector<8x32xf32>
    %86 = vector.broadcast %65 : vector<1x32xf32> to vector<8x32xf32>
    %87 = arith.addf %85, %86 : vector<8x32xf32>
    %cst_36 = arith.constant 0.000000e+00 : f32
    %88 = vector.broadcast %cst_36 : f32 to vector<8x32xf32>
    %89 = arith.maximumf %87, %88 : vector<8x32xf32>
    %c0_37 = arith.constant 0 : index
    %c0_38 = arith.constant 0 : index
    %90 = vector.load %arg7[%c0_37, %c0_38] : memref<32x32xf32, #tpu.memory_space<vmem>>, vector<32x32xf32>
    %cst_39 = arith.constant dense<0.000000e+00> : vector<8x32xf32>
    %91 = tpu.matmul %26, %90, %cst_39 {dimension_numbers = #tpu.dot_dimension_numbers<[1], [0], [0], [1], [0, 0, 1, 1], [], []>} : vector<8x32xf32>, vector<32x32xf32>, vector<8x32xf32> -> vector<8x32xf32>
    %c0_40 = arith.constant 0 : index
    %c0_41 = arith.constant 0 : index
    %92 = vector.load %arg8[%c0_40, %c0_41] : memref<32x32xf32, #tpu.memory_space<vmem>>, vector<32x32xf32>
    %cst_42 = arith.constant dense<0.000000e+00> : vector<8x32xf32>
    %93 = tpu.matmul %89, %92, %cst_42 {dimension_numbers = #tpu.dot_dimension_numbers<[1], [0], [0], [1], [0, 0, 1, 1], [], []>} : vector<8x32xf32>, vector<32x32xf32>, vector<8x32xf32> -> vector<8x32xf32>
    %94 = arith.addf %91, %93 : vector<8x32xf32>
    %c8 = arith.constant 8 : index
    %c0_43 = arith.constant 0 : index
    %95 = vector.load %arg3[%c8, %c0_43] : memref<16x128xf32, #tpu.memory_space<vmem>>, vector<1x32xf32>
    %96 = vector.broadcast %95 : vector<1x32xf32> to vector<8x32xf32>
    %97 = arith.addf %94, %96 : vector<8x32xf32>
    %c9 = arith.constant 9 : index
    %c0_44 = arith.constant 0 : index
    %98 = vector.load %arg3[%c9, %c0_44] : memref<16x128xf32, #tpu.memory_space<vmem>>, vector<1x32xf32>
    %c10 = arith.constant 10 : index
    %c0_45 = arith.constant 0 : index
    %99 = vector.load %arg3[%c10, %c0_45] : memref<16x128xf32, #tpu.memory_space<vmem>>, vector<1x32xf32>
    %cst_46 = arith.constant dense<0.000000e+00> : vector<8xf32>
    %100 = vector.multi_reduction <add>, %97, %cst_46 [1] : vector<8x32xf32> to vector<8xf32>
    %101 = vector.shape_cast %100 : vector<8xf32> to vector<8x1xf32>
    %cst_47 = arith.constant 3.200000e+01 : f32
    %102 = vector.broadcast %cst_47 : f32 to vector<8x1xf32>
    %103 = arith.divf %101, %102 : vector<8x1xf32>
    %104 = vector.broadcast %103 : vector<8x1xf32> to vector<8x32xf32>
    %105 = arith.subf %97, %104 : vector<8x32xf32>
    %106 = arith.mulf %105, %105 : vector<8x32xf32>
    %cst_48 = arith.constant dense<0.000000e+00> : vector<8xf32>
    %107 = vector.multi_reduction <add>, %106, %cst_48 [1] : vector<8x32xf32> to vector<8xf32>
    %108 = vector.shape_cast %107 : vector<8xf32> to vector<8x1xf32>
    %cst_49 = arith.constant 3.200000e+01 : f32
    %109 = vector.broadcast %cst_49 : f32 to vector<8x1xf32>
    %110 = arith.divf %108, %109 : vector<8x1xf32>
    %111 = vector.broadcast %103 : vector<8x1xf32> to vector<8x32xf32>
    %112 = arith.subf %97, %111 : vector<8x32xf32>
    %cst_50 = arith.constant 9.99999974E-6 : f32
    %113 = vector.broadcast %cst_50 : f32 to vector<8x1xf32>
    %114 = arith.addf %110, %113 : vector<8x1xf32>
    %115 = math.rsqrt %114 : vector<8x1xf32>
    %116 = vector.broadcast %115 : vector<8x1xf32> to vector<8x32xf32>
    %117 = arith.mulf %112, %116 : vector<8x32xf32>
    %118 = vector.broadcast %98 : vector<1x32xf32> to vector<8x32xf32>
    %119 = arith.mulf %117, %118 : vector<8x32xf32>
    %120 = vector.broadcast %99 : vector<1x32xf32> to vector<8x32xf32>
    %121 = arith.addf %119, %120 : vector<8x32xf32>
    %cst_51 = arith.constant 0.000000e+00 : f32
    %122 = vector.broadcast %cst_51 : f32 to vector<8x32xf32>
    %123 = arith.maximumf %121, %122 : vector<8x32xf32>
    %c0_52 = arith.constant 0 : index
    %c0_53 = arith.constant 0 : index
    %124 = vector.load %arg9[%c0_52, %c0_53] : memref<32x16xf32, #tpu.memory_space<vmem>>, vector<32x16xf32>
    %cst_54 = arith.constant dense<0.000000e+00> : vector<8x16xf32>
    %125 = tpu.matmul %123, %124, %cst_54 {dimension_numbers = #tpu.dot_dimension_numbers<[1], [0], [0], [1], [0, 0, 1, 1], [], []>} : vector<8x32xf32>, vector<32x16xf32>, vector<8x16xf32> -> vector<8x16xf32>
    %c11 = arith.constant 11 : index
    %c0_55 = arith.constant 0 : index
    %126 = vector.load %arg3[%c11, %c0_55] : memref<16x128xf32, #tpu.memory_space<vmem>>, vector<1x16xf32>
    %127 = vector.broadcast %126 : vector<1x16xf32> to vector<8x16xf32>
    %128 = arith.addf %125, %127 : vector<8x16xf32>
    %c12 = arith.constant 12 : index
    %c0_56 = arith.constant 0 : index
    %129 = vector.load %arg3[%c12, %c0_56] : memref<16x128xf32, #tpu.memory_space<vmem>>, vector<1x16xf32>
    %c13 = arith.constant 13 : index
    %c0_57 = arith.constant 0 : index
    %130 = vector.load %arg3[%c13, %c0_57] : memref<16x128xf32, #tpu.memory_space<vmem>>, vector<1x16xf32>
    %cst_58 = arith.constant dense<0.000000e+00> : vector<8xf32>
    %131 = vector.multi_reduction <add>, %128, %cst_58 [1] : vector<8x16xf32> to vector<8xf32>
    %132 = vector.shape_cast %131 : vector<8xf32> to vector<8x1xf32>
    %cst_59 = arith.constant 1.600000e+01 : f32
    %133 = vector.broadcast %cst_59 : f32 to vector<8x1xf32>
    %134 = arith.divf %132, %133 : vector<8x1xf32>
    %135 = vector.broadcast %134 : vector<8x1xf32> to vector<8x16xf32>
    %136 = arith.subf %128, %135 : vector<8x16xf32>
    %137 = arith.mulf %136, %136 : vector<8x16xf32>
    %cst_60 = arith.constant dense<0.000000e+00> : vector<8xf32>
    %138 = vector.multi_reduction <add>, %137, %cst_60 [1] : vector<8x16xf32> to vector<8xf32>
    %139 = vector.shape_cast %138 : vector<8xf32> to vector<8x1xf32>
    %cst_61 = arith.constant 1.600000e+01 : f32
    %140 = vector.broadcast %cst_61 : f32 to vector<8x1xf32>
    %141 = arith.divf %139, %140 : vector<8x1xf32>
    %142 = vector.broadcast %134 : vector<8x1xf32> to vector<8x16xf32>
    %143 = arith.subf %128, %142 : vector<8x16xf32>
    %cst_62 = arith.constant 9.99999974E-6 : f32
    %144 = vector.broadcast %cst_62 : f32 to vector<8x1xf32>
    %145 = arith.addf %141, %144 : vector<8x1xf32>
    %146 = math.rsqrt %145 : vector<8x1xf32>
    %147 = vector.broadcast %146 : vector<8x1xf32> to vector<8x16xf32>
    %148 = arith.mulf %143, %147 : vector<8x16xf32>
    %149 = vector.broadcast %129 : vector<1x16xf32> to vector<8x16xf32>
    %150 = arith.mulf %148, %149 : vector<8x16xf32>
    %151 = vector.broadcast %130 : vector<1x16xf32> to vector<8x16xf32>
    %152 = arith.addf %150, %151 : vector<8x16xf32>
    %cst_63 = arith.constant 0.000000e+00 : f32
    %153 = vector.broadcast %cst_63 : f32 to vector<8x16xf32>
    %154 = arith.maximumf %152, %153 : vector<8x16xf32>
    %c0_64 = arith.constant 0 : index
    %c0_65 = arith.constant 0 : index
    %155 = vector.load %arg10[%c0_64, %c0_65] : memref<16x128xf32, #tpu.memory_space<vmem>>, vector<16x128xf32>
    %cst_66 = arith.constant dense<0.000000e+00> : vector<8x128xf32>
    %156 = tpu.matmul %154, %155, %cst_66 {dimension_numbers = #tpu.dot_dimension_numbers<[1], [0], [0], [1], [0, 0, 1, 1], [], []>} : vector<8x16xf32>, vector<16x128xf32>, vector<8x128xf32> -> vector<8x128xf32>
    %c14 = arith.constant 14 : index
    %c0_67 = arith.constant 0 : index
    %157 = vector.load %arg3[%c14, %c0_67] : memref<16x128xf32, #tpu.memory_space<vmem>>, vector<1x128xf32>
    %158 = vector.broadcast %157 : vector<1x128xf32> to vector<8x128xf32>
    %159 = arith.addf %156, %158 : vector<8x128xf32>
    %c0_68 = arith.constant 0 : index
    %c0_69 = arith.constant 0 : index
    %160 = vector.load %arg11[%c0_68, %c0_69] : memref<8x128xf32, #tpu.memory_space<vmem>>, vector<8x128xf32>
    tpu.vector_store %arg11[%c0_68, %c0_69], %159 {strides = array<i32>} : memref<8x128xf32, #tpu.memory_space<vmem>>, vector<8x128xf32>,
    return
  }
  func.func @transform_0(%arg0: i32) -> (i32, i32, i32) {
    %c0_i32 = arith.constant 0 : i32
    %c0_i32_0 = arith.constant 0 : i32
    %c0_i32_1 = arith.constant 0 : i32
    return %arg0, %c0_i32, %c0_i32_0 : i32, i32, i32
  }
  func.func @transform_1(%arg0: i32) -> (i32, i32) {
    %c0_i32 = arith.constant 0 : i32
    %c0_i32_0 = arith.constant 0 : i32
    return %arg0, %c0_i32 : i32, i32
  }
  func.func @transform_2(%arg0: i32) -> (i32, i32) {
    %c0_i32 = arith.constant 0 : i32
    %c0_i32_0 = arith.constant 0 : i32
    %c0_i32_1 = arith.constant 0 : i32
    return %c0_i32, %c0_i32_0 : i32, i32
  }
  func.func @transform_3(%arg0: i32) -> (i32, i32) {
    %c0_i32 = arith.constant 0 : i32
    %c0_i32_0 = arith.constant 0 : i32
    %c0_i32_1 = arith.constant 0 : i32
    return %c0_i32, %c0_i32_0 : i32, i32
  }
  func.func @transform_4(%arg0: i32) -> (i32, i32) {
    %c0_i32 = arith.constant 0 : i32
    %c0_i32_0 = arith.constant 0 : i32
    %c0_i32_1 = arith.constant 0 : i32
    return %c0_i32, %c0_i32_0 : i32, i32
  }
  func.func @transform_5(%arg0: i32) -> (i32, i32) {
    %c0_i32 = arith.constant 0 : i32
    %c0_i32_0 = arith.constant 0 : i32
    %c0_i32_1 = arith.constant 0 : i32
    return %c0_i32, %c0_i32_0 : i32, i32
  }
  func.func @transform_6(%arg0: i32) -> (i32, i32) {
    %c0_i32 = arith.constant 0 : i32
    %c0_i32_0 = arith.constant 0 : i32
    %c0_i32_1 = arith.constant 0 : i32
    return %c0_i32, %c0_i32_0 : i32, i32
  }
  func.func @transform_7(%arg0: i32) -> (i32, i32) {
    %c0_i32 = arith.constant 0 : i32
    %c0_i32_0 = arith.constant 0 : i32
    %c0_i32_1 = arith.constant 0 : i32
    return %c0_i32, %c0_i32_0 : i32, i32
  }
  func.func @transform_8(%arg0: i32) -> (i32, i32) {
    %c0_i32 = arith.constant 0 : i32
    %c0_i32_0 = arith.constant 0 : i32
    %c0_i32_1 = arith.constant 0 : i32
    return %c0_i32, %c0_i32_0 : i32, i32
  }
  func.func @transform_9(%arg0: i32) -> (i32, i32) {
    %c0_i32 = arith.constant 0 : i32
    %c0_i32_0 = arith.constant 0 : i32
    %c0_i32_1 = arith.constant 0 : i32
    return %c0_i32, %c0_i32_0 : i32, i32
  }
  func.func @transform_10(%arg0: i32) -> (i32, i32) {
    %c0_i32 = arith.constant 0 : i32
    %c0_i32_0 = arith.constant 0 : i32
    return %arg0, %c0_i32 : i32, i32
  }
}

module attributes {stable_mosaic.version = 11 : i64} {
  func.func @head_kernel(%arg0: i32, %arg1: memref<8x8x32xf32, #tpu.memory_space<vmem>>, %arg2: memref<8x7xf32, #tpu.memory_space<vmem>>, %arg3: memref<16x128xf32, #tpu.memory_space<vmem>>, %arg4: memref<32x32xf32, #tpu.memory_space<vmem>>, %arg5: memref<7x64xf32, #tpu.memory_space<vmem>>, %arg6: memref<64x32xf32, #tpu.memory_space<vmem>>, %arg7: memref<32x32xf32, #tpu.memory_space<vmem>>, %arg8: memref<32x32xf32, #tpu.memory_space<vmem>>, %arg9: memref<32x16xf32, #tpu.memory_space<vmem>>, %arg10: memref<16x128xf32, #tpu.memory_space<vmem>>, %arg11: memref<8x128xf32, #tpu.memory_space<vmem>>) attributes {dimension_semantics = [#tpu.dimension_semantics<parallel>], iteration_bounds = array<i64: 2>, scalar_prefetch = 0 : i64, scratch_operands = 0 : i64, tpu.core_type = #tpu.core_type<tc>, window_params = [{transform_indices = @transform_0, window_bounds = array<i64: 8, 8, 32>}, {transform_indices = @transform_1, window_bounds = array<i64: 8, 7>}, {pipeline_mode = #tpu.pipeline_mode<synchronous>, transform_indices = @transform_2, window_bounds = array<i64: 16, 128>}, {pipeline_mode = #tpu.pipeline_mode<synchronous>, transform_indices = @transform_3, window_bounds = array<i64: 32, 32>}, {pipeline_mode = #tpu.pipeline_mode<synchronous>, transform_indices = @transform_4, window_bounds = array<i64: 7, 64>}, {pipeline_mode = #tpu.pipeline_mode<synchronous>, transform_indices = @transform_5, window_bounds = array<i64: 64, 32>}, {pipeline_mode = #tpu.pipeline_mode<synchronous>, transform_indices = @transform_6, window_bounds = array<i64: 32, 32>}, {pipeline_mode = #tpu.pipeline_mode<synchronous>, transform_indices = @transform_7, window_bounds = array<i64: 32, 32>}, {pipeline_mode = #tpu.pipeline_mode<synchronous>, transform_indices = @transform_8, window_bounds = array<i64: 32, 16>}, {pipeline_mode = #tpu.pipeline_mode<synchronous>, transform_indices = @transform_9, window_bounds = array<i64: 16, 128>}, {transform_indices = @transform_10, window_bounds = array<i64: 8, 128>}]} {
    %c0 = arith.constant 0 : index
    %c0_0 = arith.constant 0 : index
    %c0_1 = arith.constant 0 : index
    %0 = vector.load %arg1[%c0, %c0_0, %c0_1] : memref<8x8x32xf32, #tpu.memory_space<vmem>>, vector<8x8x32xf32>
    %c0_2 = arith.constant 0 : index
    %c0_3 = arith.constant 0 : index
    %1 = vector.load %arg4[%c0_2, %c0_3] : memref<32x32xf32, #tpu.memory_space<vmem>>, vector<32x32xf32>
    "tpu.trace_start"() <{level = 10 : i32, message = "bsh,hk->bsk"}> : () -> ()
    %cst = arith.constant dense<0.000000e+00> : vector<8x8x32xf32>
    %2 = tpu.matmul %0, %1, %cst {dimension_numbers = #tpu.dot_dimension_numbers<[2], [0], [0, 1], [1], [0, 0, 0, 1, 1, 1], [], []>} : vector<8x8x32xf32>, vector<32x32xf32>, vector<8x8x32xf32> -> vector<8x8x32xf32>
    "tpu.trace_stop"() : () -> ()
    %c0_4 = arith.constant 0 : index
    %c0_5 = arith.constant 0 : index
    %3 = vector.load %arg3[%c0_4, %c0_5] : memref<16x128xf32, #tpu.memory_space<vmem>>, vector<1x32xf32>
    %4 = vector.shape_cast %3 : vector<1x32xf32> to vector<1x1x32xf32>
    %5 = vector.broadcast %4 : vector<1x1x32xf32> to vector<8x8x32xf32>
    %6 = arith.addf %2, %5 : vector<8x8x32xf32>
    %7 = math.tanh %6 : vector<8x8x32xf32>
    %c1 = arith.constant 1 : index
    %c0_6 = arith.constant 0 : index
    %8 = vector.load %arg3[%c1, %c0_6] : memref<16x128xf32, #tpu.memory_space<vmem>>, vector<1x32xf32>
    %9 = vector.shape_cast %8 : vector<1x32xf32> to vector<1x1x32xf32>
    %10 = vector.broadcast %9 : vector<1x1x32xf32> to vector<8x8x32xf32>
    %11 = arith.mulf %7, %10 : vector<8x8x32xf32>
    %cst_7 = arith.constant dense<0.000000e+00> : vector<8x8xf32>
    %12 = vector.multi_reduction <add>, %11, %cst_7 [2] : vector<8x8x32xf32> to vector<8x8xf32>
    %13 = vector.shape_cast %12 : vector<8x8xf32> to vector<8x8x1xf32>
    %cst_8 = arith.constant dense<0xFF800000> : vector<8x1xf32>
    %14 = vector.multi_reduction <maximumf>, %13, %cst_8 [1] : vector<8x8x1xf32> to vector<8x1xf32>
    %15 = vector.shape_cast %14 : vector<8x1xf32> to vector<8x1x1xf32>
    %16 = vector.broadcast %15 : vector<8x1x1xf32> to vector<8x8x1xf32>
    %17 = arith.subf %13, %16 : vector<8x8x1xf32>
    %18 = math.exp %17 : vector<8x8x1xf32>
    %cst_9 = arith.constant dense<0.000000e+00> : vector<8x1xf32>
    %19 = vector.multi_reduction <add>, %18, %cst_9 [1] : vector<8x8x1xf32> to vector<8x1xf32>
    %20 = vector.shape_cast %19 : vector<8x1xf32> to vector<8x1x1xf32>
    %21 = tpu.reciprocal %20 {approx = true} : vector<8x1x1xf32> -> vector<8x1x1xf32>
    %22 = vector.broadcast %21 : vector<8x1x1xf32> to vector<8x8x1xf32>
    %23 = arith.mulf %18, %22 : vector<8x8x1xf32>
    %24 = vector.broadcast %23 : vector<8x8x1xf32> to vector<8x8x32xf32>
    %25 = arith.mulf %24, %0 : vector<8x8x32xf32>
    %cst_10 = arith.constant dense<0.000000e+00> : vector<8x32xf32>
    %26 = vector.multi_reduction <add>, %25, %cst_10 [1] : vector<8x8x32xf32> to vector<8x32xf32>
    %c0_11 = arith.constant 0 : index
    %c0_12 = arith.constant 0 : index
    %27 = vector.load %arg2[%c0_11, %c0_12] : memref<8x7xf32, #tpu.memory_space<vmem>>, vector<8x7xf32>
    %c0_13 = arith.constant 0 : index
    %c0_14 = arith.constant 0 : index
    %28 = vector.load %arg5[%c0_13, %c0_14] : memref<7x64xf32, #tpu.memory_space<vmem>>, vector<7x64xf32>
    %cst_15 = arith.constant dense<0.000000e+00> : vector<8x64xf32>
    %29 = tpu.matmul %27, %28, %cst_15 {dimension_numbers = #tpu.dot_dimension_numbers<[1], [0], [0], [1], [0, 0, 1, 1], [], []>} : vector<8x7xf32>, vector<7x64xf32>, vector<8x64xf32> -> vector<8x64xf32>
    %c2 = arith.constant 2 : index
    %c0_16 = arith.constant 0 : index
    %30 = vector.load %arg3[%c2, %c0_16] : memref<16x128xf32, #tpu.memory_space<vmem>>, vector<1x64xf32>
    %31 = vector.broadcast %30 : vector<1x64xf32> to vector<8x64xf32>
    %32 = arith.addf %29, %31 : vector<8x64xf32>
    %c3 = arith.constant 3 : index
    %c0_17 = arith.constant 0 : index
    %33 = vector.load %arg3[%c3, %c0_17] : memref<16x128xf32, #tpu.memory_space<vmem>>, vector<1x64xf32>
    %c4 = arith.constant 4 : index
    %c0_18 = arith.constant 0 : index
    %34 = vector.load %arg3[%c4, %c0_18] : memref<16x128xf32, #tpu.memory_space<vmem>>, vector<1x64xf32>
    %cst_19 = arith.constant dense<0.000000e+00> : vector<8xf32>
    %35 = vector.multi_reduction <add>, %32, %cst_19 [1] : vector<8x64xf32> to vector<8xf32>
    %36 = vector.shape_cast %35 : vector<8xf32> to vector<8x1xf32>
    %cst_20 = arith.constant 6.400000e+01 : f32
    %37 = vector.broadcast %cst_20 : f32 to vector<8x1xf32>
    %38 = arith.divf %36, %37 : vector<8x1xf32>
    %39 = vector.broadcast %38 : vector<8x1xf32> to vector<8x64xf32>
    %40 = arith.subf %32, %39 : vector<8x64xf32>
    %41 = arith.mulf %40, %40 : vector<8x64xf32>
    %cst_21 = arith.constant dense<0.000000e+00> : vector<8xf32>
    %42 = vector.multi_reduction <add>, %41, %cst_21 [1] : vector<8x64xf32> to vector<8xf32>
    %43 = vector.shape_cast %42 : vector<8xf32> to vector<8x1xf32>
    %cst_22 = arith.constant 6.400000e+01 : f32
    %44 = vector.broadcast %cst_22 : f32 to vector<8x1xf32>
    %45 = arith.divf %43, %44 : vector<8x1xf32>
    %46 = vector.broadcast %38 : vector<8x1xf32> to vector<8x64xf32>
    %47 = arith.subf %32, %46 : vector<8x64xf32>
    %cst_23 = arith.constant 9.99999974E-6 : f32
    %48 = vector.broadcast %cst_23 : f32 to vector<8x1xf32>
    %49 = arith.addf %45, %48 : vector<8x1xf32>
    %50 = math.rsqrt %49 : vector<8x1xf32>
    %51 = vector.broadcast %50 : vector<8x1xf32> to vector<8x64xf32>
    %52 = arith.mulf %47, %51 : vector<8x64xf32>
    %53 = vector.broadcast %33 : vector<1x64xf32> to vector<8x64xf32>
    %54 = arith.mulf %52, %53 : vector<8x64xf32>
    %55 = vector.broadcast %34 : vector<1x64xf32> to vector<8x64xf32>
    %56 = arith.addf %54, %55 : vector<8x64xf32>
    %cst_24 = arith.constant 0.000000e+00 : f32
    %57 = vector.broadcast %cst_24 : f32 to vector<8x64xf32>
    %58 = arith.maximumf %56, %57 : vector<8x64xf32>
    %c0_25 = arith.constant 0 : index
    %c0_26 = arith.constant 0 : index
    %59 = vector.load %arg6[%c0_25, %c0_26] : memref<64x32xf32, #tpu.memory_space<vmem>>, vector<64x32xf32>
    %cst_27 = arith.constant dense<0.000000e+00> : vector<8x32xf32>
    %60 = tpu.matmul %58, %59, %cst_27 {dimension_numbers = #tpu.dot_dimension_numbers<[1], [0], [0], [1], [0, 0, 1, 1], [], []>} : vector<8x64xf32>, vector<64x32xf32>, vector<8x32xf32> -> vector<8x32xf32>
    %c5 = arith.constant 5 : index
    %c0_28 = arith.constant 0 : index
    %61 = vector.load %arg3[%c5, %c0_28] : memref<16x128xf32, #tpu.memory_space<vmem>>, vector<1x32xf32>
    %62 = vector.broadcast %61 : vector<1x32xf32> to vector<8x32xf32>
    %63 = arith.addf %60, %62 : vector<8x32xf32>
    %c6 = arith.constant 6 : index
    %c0_29 = arith.constant 0 : index
    %64 = vector.load %arg3[%c6, %c0_29] : memref<16x128xf32, #tpu.memory_space<vmem>>, vector<1x32xf32>
    %c7 = arith.constant 7 : index
    %c0_30 = arith.constant 0 : index
    %65 = vector.load %arg3[%c7, %c0_30] : memref<16x128xf32, #tpu.memory_space<vmem>>, vector<1x32xf32>
    %cst_31 = arith.constant dense<0.000000e+00> : vector<8xf32>
    %66 = vector.multi_reduction <add>, %63, %cst_31 [1] : vector<8x32xf32> to vector<8xf32>
    %67 = vector.shape_cast %66 : vector<8xf32> to vector<8x1xf32>
    %cst_32 = arith.constant 3.200000e+01 : f32
    %68 = vector.broadcast %cst_32 : f32 to vector<8x1xf32>
    %69 = arith.divf %67, %68 : vector<8x1xf32>
    %70 = vector.broadcast %69 : vector<8x1xf32> to vector<8x32xf32>
    %71 = arith.subf %63, %70 : vector<8x32xf32>
    %72 = arith.mulf %71, %71 : vector<8x32xf32>
    %cst_33 = arith.constant dense<0.000000e+00> : vector<8xf32>
    %73 = vector.multi_reduction <add>, %72, %cst_33 [1] : vector<8x32xf32> to vector<8xf32>
    %74 = vector.shape_cast %73 : vector<8xf32> to vector<8x1xf32>
    %cst_34 = arith.constant 3.200000e+01 : f32
    %75 = vector.broadcast %cst_34 : f32 to vector<8x1xf32>
    %76 = arith.divf %74, %75 : vector<8x1xf32>
    %77 = vector.broadcast %69 : vector<8x1xf32> to vector<8x32xf32>
    %78 = arith.subf %63, %77 : vector<8x32xf32>
    %cst_35 = arith.constant 9.99999974E-6 : f32
    %79 = vector.broadcast %cst_35 : f32 to vector<8x1xf32>
    %80 = arith.addf %76, %79 : vector<8x1xf32>
    %81 = math.rsqrt %80 : vector<8x1xf32>
    %82 = vector.broadcast %81 : vector<8x1xf32> to vector<8x32xf32>
    %83 = arith.mulf %78, %82 : vector<8x32xf32>
    %84 = vector.broadcast %64 : vector<1x32xf32> to vector<8x32xf32>
    %85 = arith.mulf %83, %84 : vector<8x32xf32>
    %86 = vector.broadcast %65 : vector<1x32xf32> to vector<8x32xf32>
    %87 = arith.addf %85, %86 : vector<8x32xf32>
    %cst_36 = arith.constant 0.000000e+00 : f32
    %88 = vector.broadcast %cst_36 : f32 to vector<8x32xf32>
    %89 = arith.maximumf %87, %88 : vector<8x32xf32>
    %c0_37 = arith.constant 0 : index
    %c0_38 = arith.constant 0 : index
    %90 = vector.load %arg7[%c0_37, %c0_38] : memref<32x32xf32, #tpu.memory_space<vmem>>, vector<32x32xf32>
    %cst_39 = arith.constant dense<0.000000e+00> : vector<8x32xf32>
    %91 = tpu.matmul %26, %90, %cst_39 {dimension_numbers = #tpu.dot_dimension_numbers<[1], [0], [0], [1], [0, 0, 1, 1], [], []>} : vector<8x32xf32>, vector<32x32xf32>, vector<8x32xf32> -> vector<8x32xf32>
    %c0_40 = arith.constant 0 : index
    %c0_41 = arith.constant 0 : index
    %92 = vector.load %arg8[%c0_40, %c0_41] : memref<32x32xf32, #tpu.memory_space<vmem>>, vector<32x32xf32>
    %cst_42 = arith.constant dense<0.000000e+00> : vector<8x32xf32>
    %93 = tpu.matmul %89, %92, %cst_42 {dimension_numbers = #tpu.dot_dimension_numbers<[1], [0], [0], [1], [0, 0, 1, 1], [], []>} : vector<8x32xf32>, vector<32x32xf32>, vector<8x32xf32> -> vector<8x32xf32>
    %94 = arith.addf %91, %93 : vector<8x32xf32>
    %c8 = arith.constant 8 : index
    %c0_43 = arith.constant 0 : index
    %95 = vector.load %arg3[%c8, %c0_43] : memref<16x128xf32, #tpu.memory_space<vmem>>, vector<1x32xf32>
    %96 = vector.broadcast %95 : vector<1x32xf32> to vector<8x32xf32>
    %97 = arith.addf %94, %96 : vector<8x32xf32>
    %c9 = arith.constant 9 : index
    %c0_44 = arith.constant 0 : index
    %98 = vector.load %arg3[%c9, %c0_44] : memref<16x128xf32, #tpu.memory_space<vmem>>, vector<1x32xf32>
    %c10 = arith.constant 10 : index
    %c0_45 = arith.constant 0 : index
    %99 = vector.load %arg3[%c10, %c0_45] : memref<16x128xf32, #tpu.memory_space<vmem>>, vector<1x32xf32>
    %cst_46 = arith.constant dense<0.000000e+00> : vector<8xf32>
    %100 = vector.multi_reduction <add>, %97, %cst_46 [1] : vector<8x32xf32> to vector<8xf32>
    %101 = vector.shape_cast %100 : vector<8xf32> to vector<8x1xf32>
    %cst_47 = arith.constant 3.200000e+01 : f32
    %102 = vector.broadcast %cst_47 : f32 to vector<8x1xf32>
    %103 = arith.divf %101, %102 : vector<8x1xf32>
    %104 = vector.broadcast %103 : vector<8x1xf32> to vector<8x32xf32>
    %105 = arith.subf %97, %104 : vector<8x32xf32>
    %106 = arith.mulf %105, %105 : vector<8x32xf32>
    %cst_48 = arith.constant dense<0.000000e+00> : vector<8xf32>
    %107 = vector.multi_reduction <add>, %106, %cst_48 [1] : vector<8x32xf32> to vector<8xf32>
    %108 = vector.shape_cast %107 : vector<8xf32> to vector<8x1xf32>
    %cst_49 = arith.constant 3.200000e+01 : f32
    %109 = vector.broadcast %cst_49 : f32 to vector<8x1xf32>
    %110 = arith.divf %108, %109 : vector<8x1xf32>
    %111 = vector.broadcast %103 : vector<8x1xf32> to vector<8x32xf32>
    %112 = arith.subf %97, %111 : vector<8x32xf32>
    %cst_50 = arith.constant 9.99999974E-6 : f32
    %113 = vector.broadcast %cst_50 : f32 to vector<8x1xf32>
    %114 = arith.addf %110, %113 : vector<8x1xf32>
    %115 = math.rsqrt %114 : vector<8x1xf32>
    %116 = vector.broadcast %115 : vector<8x1xf32> to vector<8x32xf32>
    %117 = arith.mulf %112, %116 : vector<8x32xf32>
    %118 = vector.broadcast %98 : vector<1x32xf32> to vector<8x32xf32>
    %119 = arith.mulf %117, %118 : vector<8x32xf32>
    %120 = vector.broadcast %99 : vector<1x32xf32> to vector<8x32xf32>
    %121 = arith.addf %119, %120 : vector<8x32xf32>
    %cst_51 = arith.constant 0.000000e+00 : f32
    %122 = vector.broadcast %cst_51 : f32 to vector<8x32xf32>
    %123 = arith.maximumf %121, %122 : vector<8x32xf32>
    %c0_52 = arith.constant 0 : index
    %c0_53 = arith.constant 0 : index
    %124 = vector.load %arg9[%c0_52, %c0_53] : memref<32x16xf32, #tpu.memory_space<vmem>>, vector<32x16xf32>
    %cst_54 = arith.constant dense<0.000000e+00> : vector<8x16xf32>
    %125 = tpu.matmul %123, %124, %cst_54 {dimension_numbers = #tpu.dot_dimension_numbers<[1], [0], [0], [1], [0, 0, 1, 1], [], []>} : vector<8x32xf32>, vector<32x16xf32>, vector<8x16xf32> -> vector<8x16xf32>
    %c11 = arith.constant 11 : index
    %c0_55 = arith.constant 0 : index
    %126 = vector.load %arg3[%c11, %c0_55] : memref<16x128xf32, #tpu.memory_space<vmem>>, vector<1x16xf32>
    %127 = vector.broadcast %126 : vector<1x16xf32> to vector<8x16xf32>
    %128 = arith.addf %125, %127 : vector<8x16xf32>
    %c12 = arith.constant 12 : index
    %c0_56 = arith.constant 0 : index
    %129 = vector.load %arg3[%c12, %c0_56] : memref<16x128xf32, #tpu.memory_space<vmem>>, vector<1x16xf32>
    %c13 = arith.constant 13 : index
    %c0_57 = arith.constant 0 : index
    %130 = vector.load %arg3[%c13, %c0_57] : memref<16x128xf32, #tpu.memory_space<vmem>>, vector<1x16xf32>
    %cst_58 = arith.constant dense<0.000000e+00> : vector<8xf32>
    %131 = vector.multi_reduction <add>, %128, %cst_58 [1] : vector<8x16xf32> to vector<8xf32>
    %132 = vector.shape_cast %131 : vector<8xf32> to vector<8x1xf32>
    %cst_59 = arith.constant 1.600000e+01 : f32
    %133 = vector.broadcast %cst_59 : f32 to vector<8x1xf32>
    %134 = arith.divf %132, %133 : vector<8x1xf32>
    %135 = vector.broadcast %134 : vector<8x1xf32> to vector<8x16xf32>
    %136 = arith.subf %128, %135 : vector<8x16xf32>
    %137 = arith.mulf %136, %136 : vector<8x16xf32>
    %cst_60 = arith.constant dense<0.000000e+00> : vector<8xf32>
    %138 = vector.multi_reduction <add>, %137, %cst_60 [1] : vector<8x16xf32> to vector<8xf32>
    %139 = vector.shape_cast %138 : vector<8xf32> to vector<8x1xf32>
    %cst_61 = arith.constant 1.600000e+01 : f32
    %140 = vector.broadcast %cst_61 : f32 to vector<8x1xf32>
    %141 = arith.divf %139, %140 : vector<8x1xf32>
    %142 = vector.broadcast %134 : vector<8x1xf32> to vector<8x16xf32>
    %143 = arith.subf %128, %142 : vector<8x16xf32>
    %cst_62 = arith.constant 9.99999974E-6 : f32
    %144 = vector.broadcast %cst_62 : f32 to vector<8x1xf32>
    %145 = arith.addf %141, %144 : vector<8x1xf32>
    %146 = math.rsqrt %145 : vector<8x1xf32>
    %147 = vector.broadcast %146 : vector<8x1xf32> to vector<8x16xf32>
    %148 = arith.mulf %143, %147 : vector<8x16xf32>
    %149 = vector.broadcast %129 : vector<1x16xf32> to vector<8x16xf32>
    %150 = arith.mulf %148, %149 : vector<8x16xf32>
    %151 = vector.broadcast %130 : vector<1x16xf32> to vector<8x16xf32>
    %152 = arith.addf %150, %151 : vector<8x16xf32>
    %cst_63 = arith.constant 0.000000e+00 : f32
    %153 = vector.broadcast %cst_63 : f32 to vector<8x16xf32>
    %154 = arith.maximumf %152, %153 : vector<8x16xf32>
    %c0_64 = arith.constant 0 : index
    %c0_65 = arith.constant 0 : index
    %155 = vector.load %arg10[%c0_64, %c0_65] : memref<16x128xf32, #tpu.memory_space<vmem>>, vector<16x128xf32>
    %cst_66 = arith.constant dense<0.000000e+00> : vector<8x128xf32>
    %156 = tpu.matmul %154, %155, %cst_66 {dimension_numbers = #tpu.dot_dimension_numbers<[1], [0], [0], [1], [0, 0, 1, 1], [], []>} : vector<8x16xf32>, vector<16x128xf32>, vector<8x128xf32> -> vector<8x128xf32>
    %c14 = arith.constant 14 : index
    %c0_67 = arith.constant 0 : index
    %157 = vector.load %arg3[%c14, %c0_67] : memref<16x128xf32, #tpu.memory_space<vmem>>, vector<1x128xf32>
    %158 = vector.broadcast %157 : vector<1x128xf32> to vector<8x128xf32>
    %159 = arith.addf %156, %158 : vector<8x128xf32>
    %c0_68 = arith.constant 0 : index
    %c0_69 = arith.constant 0 : index
    %160 = vector.load %arg11[%c0_68, %c0_69] : memref<8x128xf32, #tpu.memory_space<vmem>>, vector<8x128xf32>
    tpu.vector_store %arg11[%c0_68, %c0_69], %159 {strides = array<i32>} : memref<8x128xf32, #tpu.memory_space<vmem>>, vector<8x128xf32>,
    return
  }
  func.func @transform_0(%arg0: i32) -> (i32, i32, i32) {
    %c0_i32 = arith.constant 0 : i32
    %c0_i32_0 = arith.constant 0 : i32
    %c0_i32_1 = arith.constant 0 : i32
    return %arg0, %c0_i32, %c0_i32_0 : i32, i32, i32
  }
  func.func @transform_1(%arg0: i32) -> (i32, i32) {
    %c0_i32 = arith.constant 0 : i32
    %c0_i32_0 = arith.constant 0 : i32
    return %arg0, %c0_i32 : i32, i32
  }
  func.func @transform_2(%arg0: i32) -> (i32, i32) {
    %c0_i32 = arith.constant 0 : i32
    %c0_i32_0 = arith.constant 0 : i32
    %c0_i32_1 = arith.constant 0 : i32
    return %c0_i32, %c0_i32_0 : i32, i32
  }
  func.func @transform_3(%arg0: i32) -> (i32, i32) {
    %c0_i32 = arith.constant 0 : i32
    %c0_i32_0 = arith.constant 0 : i32
    %c0_i32_1 = arith.constant 0 : i32
    return %c0_i32, %c0_i32_0 : i32, i32
  }
  func.func @transform_4(%arg0: i32) -> (i32, i32) {
    %c0_i32 = arith.constant 0 : i32
    %c0_i32_0 = arith.constant 0 : i32
    %c0_i32_1 = arith.constant 0 : i32
    return %c0_i32, %c0_i32_0 : i32, i32
  }
  func.func @transform_5(%arg0: i32) -> (i32, i32) {
    %c0_i32 = arith.constant 0 : i32
    %c0_i32_0 = arith.constant 0 : i32
    %c0_i32_1 = arith.constant 0 : i32
    return %c0_i32, %c0_i32_0 : i32, i32
  }
  func.func @transform_6(%arg0: i32) -> (i32, i32) {
    %c0_i32 = arith.constant 0 : i32
    %c0_i32_0 = arith.constant 0 : i32
    %c0_i32_1 = arith.constant 0 : i32
    return %c0_i32, %c0_i32_0 : i32, i32
  }
  func.func @transform_7(%arg0: i32) -> (i32, i32) {
    %c0_i32 = arith.constant 0 : i32
    %c0_i32_0 = arith.constant 0 : i32
    %c0_i32_1 = arith.constant 0 : i32
    return %c0_i32, %c0_i32_0 : i32, i32
  }
  func.func @transform_8(%arg0: i32) -> (i32, i32) {
    %c0_i32 = arith.constant 0 : i32
    %c0_i32_0 = arith.constant 0 : i32
    %c0_i32_1 = arith.constant 0 : i32
    return %c0_i32, %c0_i32_0 : i32, i32
  }
  func.func @transform_9(%arg0: i32) -> (i32, i32) {
    %c0_i32 = arith.constant 0 : i32
    %c0_i32_0 = arith.constant 0 : i32
    %c0_i32_1 = arith.constant 0 : i32
    return %c0_i32, %c0_i32_0 : i32, i32
  }
  func.func @transform_10(%arg0: i32) -> (i32, i32) {
    %c0_i32 = arith.constant 0 : i32
    %c0_i32_0 = arith.constant 0 : i32
    return %arg0, %c0_i32 : i32, i32
  }
}

</mosaic_0001>

<llo_original>
// kernel: tpu_custom_call.1
$region0: #{tpu_custom_call.1}
  #allocation0 [shape = 'u32[]', space=smem, size = 0x4, offset = 0x4, fixed_abs, tag = 'smem constant byte address 0x4 - core index']
  #allocation1 [shape = 'u32[144,128]{1,0:T(1,128)}', space=vmem, size = 0x12000, scoped, tag = 'internal scratch']
  %s0 = inlined_call_operand.vmem [shape: f32[16,8,32], index: 0, kind: input, shape index: {}]
  %s1 = inlined_call_operand.vmem [shape: f32[16,7], index: 1, kind: input, shape index: {}]
  %s2 = inlined_call_operand.hbm [shape: f32[16,128], index: 2, kind: input, shape index: {}]
  %s3 = inlined_call_operand.hbm [shape: f32[32,32], index: 3, kind: input, shape index: {}]
  %s4 = inlined_call_operand.hbm [shape: f32[7,64], index: 4, kind: input, shape index: {}]
  %s5 = inlined_call_operand.vmem [shape: f32[64,32], index: 5, kind: input, shape index: {}]
  %s6 = inlined_call_operand.hbm [shape: f32[32,32], index: 6, kind: input, shape index: {}]
  %s7 = inlined_call_operand.vmem [shape: f32[32,32], index: 7, kind: input, shape index: {}]
  %s8 = inlined_call_operand.vmem [shape: f32[32,16], index: 8, kind: input, shape index: {}]
  %s9 = inlined_call_operand.hbm [shape: f32[16,128], index: 9, kind: input, shape index: {}]
  %s10 = inlined_call_operand.hbm [shape: f32[16,128], index: 10, kind: output, shape index: {}]
  %s11 = sld [smem:[#allocation0]]
  $region93: #{tpu_custom_call.1} parent=0
    _
  %s13 = ssub.s32 1, %s11
  %s14 = scalar_select 0, %s13, %s11
  $region1: #{tpu_custom_call.1} parent=0
    #allocation2 [shape = 'u8[8192]{0}', space=vmem, size = 0x2000, scoped, tag = 'input window, operand 2, single buffered']
    #allocation3 [shape = 's32[2]{0}', space=sflag, size = 0x8, scoped, tag = 'scoped memory for tpu_custom_call.1']
    #allocation4 [shape = 's32[2]{0}', space=sflag, size = 0x8, scoped, tag = 'scoped memory for tpu_custom_call.1']
    #allocation5 [shape = 'u8[16384]{0}', space=vmem, size = 0x4000, scoped, tag = 'input window, operand 3, single buffered']
    #allocation6 [shape = 's32[1]{0}', space=sflag, size = 0x4, scoped, tag = 'scoped memory for tpu_custom_call.1']
    #allocation7 [shape = 'u8[4096]{0}', space=vmem, size = 0x1000, scoped, tag = 'input window, operand 4, single buffered']
    #allocation8 [shape = 'u8[16384]{0}', space=vmem, size = 0x4000, scoped, tag = 'input window, operand 6, single buffered']
    #allocation9 [shape = 's32[1]{0}', space=sflag, size = 0x4, scoped, tag = 'scoped memory for tpu_custom_call.1']
    #allocation10 [shape = 'u8[8192]{0}', space=vmem, size = 0x2000, scoped, tag = 'input window, operand 9, single buffered']
    #allocation11 [shape = 'u8[8192]{0}', space=vmem, size = 0x2000, scoped, tag = 'output window, operand 0']
    %15 = vsyncpa [#allocation3], 0
    %16 = vsyncpa [#allocation6], 0
    %17 = vsyncpa [#allocation9], 0
    %18 = vsyncpa [#allocation4], 0
    %s19 = scalar_lea.sflag [#allocation4], 1
    %20 = vsyncpa %s19, 0
    loop: start=0, step=1, limit=4
    $region2: #{tpu_custom_call.1} parent=1 // loop_pre_header
      _
    $region3: #{tpu_custom_call.1} parent=1 // loop_header
      %s22 = sphi 0, %s26
      %p23 = scmp.ge.s32.totalorder %s22, 4
      %s32 = sphi 0, %s34
      %s35 = sphi 0, %s32
      %s36 = sphi 0, %s35
      %s52 = sphi 0, %s36
      %s58 = sphi 0, %s60
      %s61 = sphi 0, %s58
      %s62 = sphi 0, %s61
      %s78 = sphi 0, %s62
      %s82 = sphi 0, %s82
      %s84 = sphi 0, %s82
      %s85 = sphi 0, %s84
      %s99 = sphi 0, %s85
      %s103 = sphi 0, %s103
      %s105 = sphi 0, %s103
      %s106 = sphi 0, %s105
      %s120 = sphi 0, %s106
      %s124 = sphi 0, %s124
      %s126 = sphi 0, %s124
      %s127 = sphi 0, %s126
      %s141 = sphi 0, %s127
      %s145 = sphi 0, %s145
      %s147 = sphi 0, %s145
      %s148 = sphi 0, %s147
      %s162 = sphi 0, %s148
      %s166 = sphi 0, %s166
      %s168 = sphi 0, %s166
      %s169 = sphi 0, %s168
      %s183 = sphi 0, %s169
      %s187 = sphi 0, %s187
      %s189 = sphi 0, %s187
      %s190 = sphi 0, %s189
      %s204 = sphi 0, %s190
      %s208 = sphi 0, %s208
      %s210 = sphi 0, %s208
      %s211 = sphi 0, %s210
      %s225 = sphi 0, %s211
      %s229 = sphi 0, %s229
      %s231 = sphi 0, %s229
      %s232 = sphi 0, %s231
      %s246 = sphi 0, %s232
      %s252 = sphi 0, %s254
      %s255 = sphi 0, %s252
      %s256 = sphi 0, %s255
      %s272 = sphi 0, %s256
    $region4: #{tpu_custom_call.1} parent=1 // loop_header_branch
      %25 = sbr.rel (%p23) target = $region8
    $region5: #{tpu_custom_call.1} parent=1 // loop_body
      %s27 = ssub.s32 %s22, 1
      %s28 = ssub.s32 %s22, 2
      %s29 = sadd.s32 %s22, 1
      %s30 = ssub.s32 %s22, %s29
      %p31 = scmp.eq.s32.totalorder %s30, 0
      %s33 = sadd.s32 %s32, 1
      %s34 = scalar_select %p31, %s32, %s33
      %p37 = pneg %p31
      %p38 = scmp.eq.s32.totalorder %s22, 1
      %p39 = por %p37, %p38
      %p40 = scmp.ne.s32.totalorder %s32, %s35
      %p41 = scmp.eq.s32.totalorder %s22, 0
      %p42 = por %p40, %p41
      %p43 = scmp.ne.s32.totalorder %s32, %s35
      %p44 = scmp.eq.s32.totalorder %s27, 1
      %p45 = por %p43, %p44
      %p46 = scmp.ne.s32.totalorder %s35, %s36
      %p47 = scmp.eq.s32.totalorder %s27, 0
      %p48 = por %p46, %p47
      %p49 = scmp.ne.s32.totalorder %s35, %s36
      %p50 = scmp.eq.s32.totalorder %s28, 1
      %p51 = por %p49, %p50
      %p53 = scmp.ne.s32.totalorder %s36, %s52
      %p54 = scmp.eq.s32.totalorder %s28, 0
      %p55 = por %p53, %p54
      %s56 = ssub.s32 %s22, %s29
      %p57 = scmp.eq.s32.totalorder %s56, 0
      %s59 = sadd.s32 %s58, 1
      %s60 = scalar_select %p57, %s58, %s59
      %p63 = pneg %p57
      %p64 = scmp.eq.s32.totalorder %s22, 1
      %p65 = por %p63, %p64
      %p66 = scmp.ne.s32.totalorder %s58, %s61
      %p67 = scmp.eq.s32.totalorder %s22, 0
      %p68 = por %p66, %p67
      %p69 = scmp.ne.s32.totalorder %s58, %s61
      %p70 = scmp.eq.s32.totalorder %s27, 1
      %p71 = por %p69, %p70
      %p72 = scmp.ne.s32.totalorder %s61, %s62
      %p73 = scmp.eq.s32.totalorder %s27, 0
      %p74 = por %p72, %p73
      %p75 = scmp.ne.s32.totalorder %s61, %s62
      %p76 = scmp.eq.s32.totalorder %s28, 1
      %p77 = por %p75, %p76
      %p79 = scmp.ne.s32.totalorder %s62, %s78
      %p80 = scmp.eq.s32.totalorder %s28, 0
      %p81 = por %p79, %p80
      %s83 = sadd.s32 %s82, 1
      %p86 = scmp.eq.s32.totalorder %s22, 1
      %p87 = scmp.ne.s32.totalorder %s82, %s84
      %p88 = scmp.eq.s32.totalorder %s22, 0
      %p89 = por %p87, %p88
      %p90 = scmp.ne.s32.totalorder %s82, %s84
      %p91 = scmp.eq.s32.totalorder %s27, 1
      %p92 = por %p90, %p91
      %p93 = scmp.ne.s32.totalorder %s84, %s85
      %p94 = scmp.eq.s32.totalorder %s27, 0
      %p95 = por %p93, %p94
      %p96 = scmp.ne.s32.totalorder %s84, %s85
      %p97 = scmp.eq.s32.totalorder %s28, 1
      %p98 = por %p96, %p97
      %p100 = scmp.ne.s32.totalorder %s85, %s99
      %p101 = scmp.eq.s32.totalorder %s28, 0
      %p102 = por %p100, %p101
      %s104 = sadd.s32 %s103, 1
      %p107 = scmp.eq.s32.totalorder %s22, 1
      %p108 = scmp.ne.s32.totalorder %s103, %s105
      %p109 = scmp.eq.s32.totalorder %s22, 0
      %p110 = por %p108, %p109
      %p111 = scmp.ne.s32.totalorder %s103, %s105
      %p112 = scmp.eq.s32.totalorder %s27, 1
      %p113 = por %p111, %p112
      %p114 = scmp.ne.s32.totalorder %s105, %s106
      %p115 = scmp.eq.s32.totalorder %s27, 0
      %p116 = por %p114, %p115
      %p117 = scmp.ne.s32.totalorder %s105, %s106
      %p118 = scmp.eq.s32.totalorder %s28, 1
      %p119 = por %p117, %p118
      %p121 = scmp.ne.s32.totalorder %s106, %s120
      %p122 = scmp.eq.s32.totalorder %s28, 0
      %p123 = por %p121, %p122
      %s125 = sadd.s32 %s124, 1
      %p128 = scmp.eq.s32.totalorder %s22, 1
      %p129 = scmp.ne.s32.totalorder %s124, %s126
      %p130 = scmp.eq.s32.totalorder %s22, 0
      %p131 = por %p129, %p130
      %p132 = scmp.ne.s32.totalorder %s124, %s126
      %p133 = scmp.eq.s32.totalorder %s27, 1
      %p134 = por %p132, %p133
      %p135 = scmp.ne.s32.totalorder %s126, %s127
      %p136 = scmp.eq.s32.totalorder %s27, 0
      %p137 = por %p135, %p136
      %p138 = scmp.ne.s32.totalorder %s126, %s127
      %p139 = scmp.eq.s32.totalorder %s28, 1
      %p140 = por %p138, %p139
      %p142 = scmp.ne.s32.totalorder %s127, %s141
      %p143 = scmp.eq.s32.totalorder %s28, 0
      %p144 = por %p142, %p143
      %s146 = sadd.s32 %s145, 1
      %p149 = scmp.eq.s32.totalorder %s22, 1
      %p150 = scmp.ne.s32.totalorder %s145, %s147
      %p151 = scmp.eq.s32.totalorder %s22, 0
      %p152 = por %p150, %p151
      %p153 = scmp.ne.s32.totalorder %s145, %s147
      %p154 = scmp.eq.s32.totalorder %s27, 1
      %p155 = por %p153, %p154
      %p156 = scmp.ne.s32.totalorder %s147, %s148
      %p157 = scmp.eq.s32.totalorder %s27, 0
      %p158 = por %p156, %p157
      %p159 = scmp.ne.s32.totalorder %s147, %s148
      %p160 = scmp.eq.s32.totalorder %s28, 1
      %p161 = por %p159, %p160
      %p163 = scmp.ne.s32.totalorder %s148, %s162
      %p164 = scmp.eq.s32.totalorder %s28, 0
      %p165 = por %p163, %p164
      %s167 = sadd.s32 %s166, 1
      %p170 = scmp.eq.s32.totalorder %s22, 1
      %p171 = scmp.ne.s32.totalorder %s166, %s168
      %p172 = scmp.eq.s32.totalorder %s22, 0
      %p173 = por %p171, %p172
      %p174 = scmp.ne.s32.totalorder %s166, %s168
      %p175 = scmp.eq.s32.totalorder %s27, 1
      %p176 = por %p174, %p175
      %p177 = scmp.ne.s32.totalorder %s168, %s169
      %p178 = scmp.eq.s32.totalorder %s27, 0
      %p179 = por %p177, %p178
      %p180 = scmp.ne.s32.totalorder %s168, %s169
      %p181 = scmp.eq.s32.totalorder %s28, 1
      %p182 = por %p180, %p181
      %p184 = scmp.ne.s32.totalorder %s169, %s183
      %p185 = scmp.eq.s32.totalorder %s28, 0
      %p186 = por %p184, %p185
      %s188 = sadd.s32 %s187, 1
      %p191 = scmp.eq.s32.totalorder %s22, 1
      %p192 = scmp.ne.s32.totalorder %s187, %s189
      %p193 = scmp.eq.s32.totalorder %s22, 0
      %p194 = por %p192, %p193
      %p195 = scmp.ne.s32.totalorder %s187, %s189
      %p196 = scmp.eq.s32.totalorder %s27, 1
      %p197 = por %p195, %p196
      %p198 = scmp.ne.s32.totalorder %s189, %s190
      %p199 = scmp.eq.s32.totalorder %s27, 0
      %p200 = por %p198, %p199
      %p201 = scmp.ne.s32.totalorder %s189, %s190
      %p202 = scmp.eq.s32.totalorder %s28, 1
      %p203 = por %p201, %p202
      %p205 = scmp.ne.s32.totalorder %s190, %s204
      %p206 = scmp.eq.s32.totalorder %s28, 0
      %p207 = por %p205, %p206
      %s209 = sadd.s32 %s208, 1
      %p212 = scmp.eq.s32.totalorder %s22, 1
      %p213 = scmp.ne.s32.totalorder %s208, %s210
      %p214 = scmp.eq.s32.totalorder %s22, 0
      %p215 = por %p213, %p214
      %p216 = scmp.ne.s32.totalorder %s208, %s210
      %p217 = scmp.eq.s32.totalorder %s27, 1
      %p218 = por %p216, %p217
      %p219 = scmp.ne.s32.totalorder %s210, %s211
      %p220 = scmp.eq.s32.totalorder %s27, 0
      %p221 = por %p219, %p220
      %p222 = scmp.ne.s32.totalorder %s210, %s211
      %p223 = scmp.eq.s32.totalorder %s28, 1
      %p224 = por %p222, %p223
      %p226 = scmp.ne.s32.totalorder %s211, %s225
      %p227 = scmp.eq.s32.totalorder %s28, 0
      %p228 = por %p226, %p227
      %s230 = sadd.s32 %s229, 1
      %p233 = scmp.eq.s32.totalorder %s22, 1
      %p234 = scmp.ne.s32.totalorder %s229, %s231
      %p235 = scmp.eq.s32.totalorder %s22, 0
      %p236 = por %p234, %p235
      %p237 = scmp.ne.s32.totalorder %s229, %s231
      %p238 = scmp.eq.s32.totalorder %s27, 1
      %p239 = por %p237, %p238
      %p240 = scmp.ne.s32.totalorder %s231, %s232
      %p241 = scmp.eq.s32.totalorder %s27, 0
      %p242 = por %p240, %p241
      %p243 = scmp.ne.s32.totalorder %s231, %s232
      %p244 = scmp.eq.s32.totalorder %s28, 1
      %p245 = por %p243, %p244
      %p247 = scmp.ne.s32.totalorder %s232, %s246
      %p248 = scmp.eq.s32.totalorder %s28, 0
      %p249 = por %p247, %p248
      %s250 = ssub.s32 %s22, %s29
      %p251 = scmp.eq.s32.totalorder %s250, 0
      %s253 = sadd.s32 %s252, 1
      %s254 = scalar_select %p251, %s252, %s253
      %p257 = pneg %p251
      %p258 = scmp.eq.s32.totalorder %s22, 1
      %p259 = por %p257, %p258
      %p260 = scmp.ne.s32.totalorder %s252, %s255
      %p261 = scmp.eq.s32.totalorder %s22, 0
      %p262 = por %p260, %p261
      %p263 = scmp.ne.s32.totalorder %s252, %s255
      %p264 = scmp.eq.s32.totalorder %s27, 1
      %p265 = por %p263, %p264
      %p266 = scmp.ne.s32.totalorder %s255, %s256
      %p267 = scmp.eq.s32.totalorder %s27, 0
      %p268 = por %p266, %p267
      %p269 = scmp.ne.s32.totalorder %s255, %s256
      %p270 = scmp.eq.s32.totalorder %s28, 1
      %p271 = por %p269, %p270
      %p273 = scmp.ne.s32.totalorder %s256, %s272
      %p274 = scmp.eq.s32.totalorder %s28, 0
      %p275 = por %p273, %p274
      %p276 = scmp.le.s32.totalorder 1, %s22
      %p277 = scmp.lt.s32.totalorder %s22, 3
      %p278 = pnand %p276, %p277
      %p279 = pneg %p278
      // Predicated region
      $region9: #{tpu_custom_call.1} parent=5 // pred_check
        _
      $region10: #{tpu_custom_call.1} parent=5 // pred_check_branch
        %281 = sbr.rel (%p278) target = $region12
      $region11: #{tpu_custom_call.1} parent=5 // pred_region
        %s282 = ssub.s32 %s22, 1
        // Predicated region
        $region13: #{tpu_custom_call.1} parent=11 // pred_check
          %p283 = pneg %p95
        $region14: #{tpu_custom_call.1} parent=11 // pred_check_branch
          %285 = sbr.rel (%p283) target = $region16
        $region15: #{tpu_custom_call.1} parent=11 // pred_region
          %s287 = ssub.s32 256, 256
          %288 = vsyncadd [#allocation3], %s287
          %s289 = sshll.u32 [#allocation2], 4
          %s290 = int_to_ptr.vmem [resolvable:$true] %s289
          %295 = dma.hbm_to_vmem [thread:$0]  %s2, 256, %s290, [#allocation3], 128, 128, 8
        $region16: #{tpu_custom_call.1} parent=11 // pred_fallthru
          _
        // Predicated region
        $region17: #{tpu_custom_call.1} parent=11 // pred_check
          %p296 = pneg %p116
        $region18: #{tpu_custom_call.1} parent=11 // pred_check_branch
          %298 = sbr.rel (%p296) target = $region20
        $region19: #{tpu_custom_call.1} parent=11 // pred_region
          %s300 = ssub.s32 512, 512
          %301 = vsyncadd [#allocation6], %s300
          %s302 = sshll.u32 [#allocation5], 4
          %s303 = int_to_ptr.vmem [resolvable:$true] %s302
          %308 = dma.hbm_to_vmem [thread:$0]  %s3, 512, %s303, [#allocation6], 128, 128, 8
        $region20: #{tpu_custom_call.1} parent=11 // pred_fallthru
          _
        // Predicated region
        $region21: #{tpu_custom_call.1} parent=11 // pred_check
          %p309 = pneg %p137
        $region22: #{tpu_custom_call.1} parent=11 // pred_check_branch
          %311 = sbr.rel (%p309) target = $region24
        $region23: #{tpu_custom_call.1} parent=11 // pred_region
          %s313 = ssub.s32 128, 128
          %314 = vsyncadd [#allocation6], %s313
          %s316 = sshll.u32 [#allocation7], 4
          %s317 = int_to_ptr.vmem [resolvable:$true] %s316
          %319 = dma.hbm_to_vmem [thread:$0]  %s4, 128, %s317, [#allocation6]
        $region24: #{tpu_custom_call.1} parent=11 // pred_fallthru
          _
        // Predicated region
        $region25: #{tpu_custom_call.1} parent=11 // pred_check
          %p320 = pneg %p158
        $region26: #{tpu_custom_call.1} parent=11 // pred_check_branch
          %322 = sbr.rel (%p320) target = $region28
        $region27: #{tpu_custom_call.1} parent=11 // pred_region
          _
        $region28: #{tpu_custom_call.1} parent=11 // pred_fallthru
          _
        // Predicated region
        $region29: #{tpu_custom_call.1} parent=11 // pred_check
          %p323 = pneg %p179
        $region30: #{tpu_custom_call.1} parent=11 // pred_check_branch
          %325 = sbr.rel (%p323) target = $region32
        $region31: #{tpu_custom_call.1} parent=11 // pred_region
          %s327 = ssub.s32 512, 512
          %328 = vsyncadd [#allocation9], %s327
          %s329 = sshll.u32 [#allocation8], 4
          %s330 = int_to_ptr.vmem [resolvable:$true] %s329
          %335 = dma.hbm_to_vmem [thread:$0]  %s6, 512, %s330, [#allocation9], 128, 128, 8
        $region32: #{tpu_custom_call.1} parent=11 // pred_fallthru
          _
        // Predicated region
        $region33: #{tpu_custom_call.1} parent=11 // pred_check
          %p336 = pneg %p200
        $region34: #{tpu_custom_call.1} parent=11 // pred_check_branch
          %338 = sbr.rel (%p336) target = $region36
        $region35: #{tpu_custom_call.1} parent=11 // pred_region
          _
        $region36: #{tpu_custom_call.1} parent=11 // pred_fallthru
          _
        // Predicated region
        $region37: #{tpu_custom_call.1} parent=11 // pred_check
          %p339 = pneg %p221
        $region38: #{tpu_custom_call.1} parent=11 // pred_check_branch
          %341 = sbr.rel (%p339) target = $region40
        $region39: #{tpu_custom_call.1} parent=11 // pred_region
          _
        $region40: #{tpu_custom_call.1} parent=11 // pred_fallthru
          _
        // Predicated region
        $region41: #{tpu_custom_call.1} parent=11 // pred_check
          %p342 = pneg %p242
        $region42: #{tpu_custom_call.1} parent=11 // pred_check_branch
          %344 = sbr.rel (%p342) target = $region44
        $region43: #{tpu_custom_call.1} parent=11 // pred_region
          %s346 = ssub.s32 256, 256
          %347 = vsyncadd [#allocation9], %s346
          %s348 = sshll.u32 [#allocation10], 4
          %s349 = int_to_ptr.vmem [resolvable:$true] %s348
          %354 = dma.hbm_to_vmem [thread:$0]  %s9, 256, %s349, [#allocation9], 128, 128, 8
        $region44: #{tpu_custom_call.1} parent=11 // pred_fallthru
          _
      $region12: #{tpu_custom_call.1} parent=5 // pred_fallthru
        _
      %p355 = scmp.lt.s32.totalorder %s22, 2
      // Predicated region
      $region45: #{tpu_custom_call.1} parent=5 // pred_check
        %p356 = pneg %p355
      $region46: #{tpu_custom_call.1} parent=5 // pred_check_branch
        %358 = sbr.rel (%p356) target = $region48
      $region47: #{tpu_custom_call.1} parent=5 // pred_region
        // Predicated region
        $region49: #{tpu_custom_call.1} parent=47 // pred_check
          %p359 = pneg %p42
        $region50: #{tpu_custom_call.1} parent=47 // pred_check_branch
          %361 = sbr.rel (%p359) target = $region52
        $region51: #{tpu_custom_call.1} parent=47 // pred_region
          %s362 = smul.u32 8, %s22
          %p363 = scmp.lt.s32.totalorder %s362, 15
          %s364 = scalar_select %p363, %s362, 15
          %s365 = smul.addr %s364, 8
          %s366 = scalar_lea.vmem %s0, %s365
          %s367 = smul.u32 8, %s22
        $region52: #{tpu_custom_call.1} parent=47 // pred_fallthru
          _
        // Predicated region
        $region53: #{tpu_custom_call.1} parent=47 // pred_check
          %p368 = pneg %p68
        $region54: #{tpu_custom_call.1} parent=47 // pred_check_branch
          %370 = sbr.rel (%p368) target = $region56
        $region55: #{tpu_custom_call.1} parent=47 // pred_region
          %p371 = scmp.lt.s32.totalorder %s22, 1
          %s372 = scalar_select %p371, %s22, 1
          %s373 = smul.addr %s372, 8
          %s374 = scalar_lea.vmem %s1, %s373
        $region56: #{tpu_custom_call.1} parent=47 // pred_fallthru
          _
      $region48: #{tpu_custom_call.1} parent=5 // pred_fallthru
        _
      %p375 = scmp.le.s32.totalorder 1, %s22
      %p376 = scmp.lt.s32.totalorder %s22, 3
      %p377 = pnand %p375, %p376
      %p378 = pneg %p377
      // Predicated region
      $region57: #{tpu_custom_call.1} parent=5 // pred_check
        _
      $region58: #{tpu_custom_call.1} parent=5 // pred_check_branch
        %380 = sbr.rel (%p377) target = $region60
      $region59: #{tpu_custom_call.1} parent=5 // pred_region
        %s381 = ssub.s32 %s22, 1
        // Predicated region
        $region61: #{tpu_custom_call.1} parent=59 // pred_check
          %p382 = pneg %p95
        $region62: #{tpu_custom_call.1} parent=59 // pred_check_branch
          %384 = sbr.rel (%p382) target = $region64
        $region63: #{tpu_custom_call.1} parent=59 // pred_region
          %385 = dma.done [#allocation3], 256
        $region64: #{tpu_custom_call.1} parent=59 // pred_fallthru
          _
        // Predicated region
        $region65: #{tpu_custom_call.1} parent=59 // pred_check
          %p386 = pneg %p116
        $region66: #{tpu_custom_call.1} parent=59 // pred_check_branch
          %388 = sbr.rel (%p386) target = $region68
        $region67: #{tpu_custom_call.1} parent=59 // pred_region
          %389 = dma.done [#allocation6], 512
        $region68: #{tpu_custom_call.1} parent=59 // pred_fallthru
          _
        // Predicated region
        $region69: #{tpu_custom_call.1} parent=59 // pred_check
          %p390 = pneg %p137
        $region70: #{tpu_custom_call.1} parent=59 // pred_check_branch
          %392 = sbr.rel (%p390) target = $region72
        $region71: #{tpu_custom_call.1} parent=59 // pred_region
          %393 = dma.done [#allocation6], 128
        $region72: #{tpu_custom_call.1} parent=59 // pred_fallthru
          _
        // Predicated region
        $region73: #{tpu_custom_call.1} parent=59 // pred_check
          %p394 = pneg %p179
        $region74: #{tpu_custom_call.1} parent=59 // pred_check_branch
          %396 = sbr.rel (%p394) target = $region76
        $region75: #{tpu_custom_call.1} parent=59 // pred_region
          %397 = dma.done [#allocation9], 512
        $region76: #{tpu_custom_call.1} parent=59 // pred_fallthru
          _
        // Predicated region
        $region77: #{tpu_custom_call.1} parent=59 // pred_check
          %p398 = pneg %p242
        $region78: #{tpu_custom_call.1} parent=59 // pred_check_branch
          %400 = sbr.rel (%p398) target = $region80
        $region79: #{tpu_custom_call.1} parent=59 // pred_region
          %401 = dma.done [#allocation9], 256
        $region80: #{tpu_custom_call.1} parent=59 // pred_fallthru
          _
        %s402 = smul.u32 8, %s27
        %p403 = scmp.lt.s32.totalorder %s402, 15
        %s404 = scalar_select %p403, %s402, 15
        %s405 = smul.addr %s404, 8
        %s406 = scalar_lea.vmem %s0, %s405
        %p407 = pneg %p48
        %p408 = pneg %p45
        %p409 = scmp.lt.s32.totalorder %s27, 1
        %s410 = scalar_select %p409, %s27, 1
        %s411 = smul.addr %s410, 8
        %s412 = scalar_lea.vmem %s1, %s411
        %p413 = pneg %p74
        %p414 = pneg %p71
        %p415 = pneg %p95
        %p416 = pneg %p92
        %p417 = pneg %p116
        %p418 = pneg %p113
        %p419 = pneg %p137
        %p420 = pneg %p134
        %p421 = pneg %p158
        %p422 = pneg %p155
        %p423 = pneg %p179
        %p424 = pneg %p176
        %p425 = pneg %p200
        %p426 = pneg %p197
        %p427 = pneg %p221
        %p428 = pneg %p218
        %p429 = pneg %p242
        %p430 = pneg %p239
        %p431 = pneg %p268
        %p432 = pneg %p265
        %s433 = sand.u32 %s255, 1
        %s434 = scalar_lea.sflag [#allocation4], %s433
        %s435 = sand.u32 %s255, 1
        %s436 = smul.addr %s435, 8
        %s437 = scalar_lea.vmem [#allocation11], %s436
        %s438 = smul.u32 8, %s27
        %p439 = scmp.lt.s32.totalorder %s438, 15
        %s440 = scalar_select %p439, %s438, 15
        %s441 = smul.addr %s440, 8
        %s442 = scalar_lea.vmem %s0, %s441
        %s443 = smul.u32 8, %s27
        %p444 = scmp.lt.s32.totalorder %s27, 1
        %s445 = scalar_select %p444, %s27, 1
        %s446 = smul.addr %s445, 8
        %s447 = scalar_lea.vmem %s1, %s446
        %v448 = vld [vmem:[%s442] sm:$0xff]
        %v449 = vld [vmem:[%s442 + $0x8] sm:$0xff]
        %v450 = vld [vmem:[%s442 + $0x10] sm:$0xff]
        %v451 = vld [vmem:[%s442 + $0x18] sm:$0xff]
        %v452 = vld [vmem:[%s442 + $0x20] sm:$0xff]
        %v453 = vld [vmem:[%s442 + $0x28] sm:$0xff]
        %v454 = vld [vmem:[%s442 + $0x30] sm:$0xff]
        %v455 = vld [vmem:[%s442 + $0x38] sm:$0xff]
        %v456 = vld [vmem:[#allocation5] sm:$0xff]
        %v457 = vld [vmem:[#allocation5 + $0x8] sm:$0xff]
        %v458 = vld [vmem:[#allocation5 + $0x10] sm:$0xff]
        %v459 = vld [vmem:[#allocation5 + $0x18] sm:$0xff]
        %v460 = vld [vmem:[#allocation2] sm:$0x1]
        %v461 = vlaneseq
        %v462 = vshrl.u32 %v461, 7
        %v463 = vsub.s32 0, %v462
        %v464 = vrot.slane %v460, %v463
        %vm465 = vcmask 261120
        %v467 = vsel %vm465, %v448, 0
        %v470 = vsel %vm465, %v449, 0
        %v473 = vsel %vm465, %v450, 0
        %v476 = vsel %vm465, %v451, 0
        %v479 = vsel %vm465, %v452, 0
        %v482 = vsel %vm465, %v453, 0
        %v485 = vsel %vm465, %v454, 0
        %v488 = vsel %vm465, %v455, 0
        %490 = vmatprep.subr.mxu0 0.0
        %491 = vmatpush1.msra.mxu0 %v456
        %492 = vmatprep.subr.mxu0 0.0
        %493 = vmatpush1.msra.mxu0 %v457
        %494 = vmatprep.subr.mxu0 0.0
        %495 = vmatpush1.msra.mxu0 %v458
        %496 = vmatprep.subr.mxu0 0.0
        %497 = vmatpush1.msra.mxu0 %v459
        %498 = vmatprep.subr.mxu0 0.0
        %499 = vmatpush1.msra.mxu0 0.0
        %500 = vmatprep.subr.mxu0 0.0
        %501 = vmatpush1.msra.mxu0 0.0
        %502 = vmatprep.subr.mxu0 0.0
        %503 = vmatpush1.msra.mxu0 0.0
        %504 = vmatprep.subr.mxu0 0.0
        %505 = vmatpush1.msra.mxu0 0.0
        %506 = vmatprep.subr.mxu0 0.0
        %507 = vmatpush1.msra.mxu0 0.0
        %508 = vmatprep.subr.mxu0 0.0
        %509 = vmatpush1.msra.mxu0 0.0
        %510 = vmatprep.subr.mxu0 0.0
        %511 = vmatpush1.msra.mxu0 0.0
        %512 = vmatprep.subr.mxu0 0.0
        %513 = vmatpush1.msra.mxu0 0.0
        %514 = vmatprep.subr.mxu0 0.0
        %515 = vmatpush1.msra.mxu0 0.0
        %516 = vmatprep.subr.mxu0 0.0
        %517 = vmatpush1.msra.mxu0 0.0
        %518 = vmatprep.subr.mxu0 0.0
        %519 = vmatpush1.msra.mxu0 0.0
        %520 = vmatprep.subr.mxu0 0.0
        %521 = vmatpush1.msra.mxu0 0.0
        %522 = vmatprep.subr.mxu0 0.0
        %523 = vmatpush1.msra.mxu0 0.0
        %524 = vmatprep.subr.mxu0 0.0
        %525 = vmatpush1.msra.mxu0 0.0
        %526 = vmatprep.subr.mxu0 0.0
        %527 = vmatpush1.msra.mxu0 0.0
        %528 = vmatprep.subr.mxu0 0.0
        %529 = vmatpush1.msra.mxu0 0.0
        %530 = vmatprep.subr.mxu0 0.0
        %531 = vmatpush1.msra.mxu0 0.0
        %532 = vmatprep.subr.mxu0 0.0
        %533 = vmatpush1.msra.mxu0 0.0
        %534 = vmatprep.subr.mxu0 0.0
        %535 = vmatpush1.msra.mxu0 0.0
        %536 = vmatprep.subr.mxu0 0.0
        %537 = vmatpush1.msra.mxu0 0.0
        %538 = vmatprep.subr.mxu0 0.0
        %539 = vmatpush1.msra.mxu0 0.0
        %540 = vmatprep.subr.mxu0 0.0
        %541 = vmatpush1.msra.mxu0 0.0
        %542 = vmatprep.subr.mxu0 0.0
        %543 = vmatpush1.msra.mxu0 0.0
        %544 = vmatprep.subr.mxu0 0.0
        %545 = vmatpush1.msra.mxu0 0.0
        %546 = vmatprep.subr.mxu0 0.0
        %547 = vmatpush1.msra.mxu0 0.0
        %548 = vmatprep.subr.mxu0 0.0
        %549 = vmatpush1.msra.mxu0 0.0
        %550 = vmatprep.subr.mxu0 0.0
        %551 = vmatpush1.msra.mxu0 0.0
        %552 = vmatprep.subr.mxu0 0.0
        %553 = vmatpush1.msra.mxu0 0.0
        %554 = vmatprep.mubr.f32.mxu0 0.0
        %555 = vmatmul.mubr.f32.gmra.mrb[0].mxu0 %v467
        %v556 = vpop.f32.mrb[0].mxu0
        %v557 = vadd.f32 %v464, %v556
        %v558 = vpop.f32.mrb[0].mxu0
        %559 = vmatprep.mubr.f32.mxu0 0.0
        %560 = vmatmul.mubr.f32.gmra.mrb[0].mxu0 %v470
        %v561 = vpop.f32.mrb[0].mxu0
        %v562 = vadd.f32 %v464, %v561
        %v563 = vpop.f32.mrb[0].mxu0
        %564 = vmatprep.mubr.f32.mxu0 0.0
        %565 = vmatmul.mubr.f32.gmra.mrb[0].mxu0 %v473
        %v566 = vpop.f32.mrb[0].mxu0
        %v567 = vadd.f32 %v464, %v566
        %v568 = vpop.f32.mrb[0].mxu0
        %569 = vmatprep.mubr.f32.mxu0 0.0
        %570 = vmatmul.mubr.f32.gmra.mrb[0].mxu0 %v476
        %v571 = vpop.f32.mrb[0].mxu0
        %v572 = vadd.f32 %v464, %v571
        %v573 = vpop.f32.mrb[0].mxu0
        %574 = vmatprep.mubr.f32.mxu0 0.0
        %575 = vmatmul.mubr.f32.gmra.mrb[0].mxu0 %v479
        %v576 = vpop.f32.mrb[0].mxu0
        %v577 = vadd.f32 %v464, %v576
        %v578 = vpop.f32.mrb[0].mxu0
        %579 = vmatprep.mubr.f32.mxu0 0.0
        %580 = vmatmul.mubr.f32.gmra.mrb[0].mxu0 %v482
        %v581 = vpop.f32.mrb[0].mxu0
        %v582 = vadd.f32 %v464, %v581
        %v583 = vpop.f32.mrb[0].mxu0
        %584 = vmatprep.mubr.f32.mxu0 0.0
        %585 = vmatmul.mubr.f32.gmra.mrb[0].mxu0 %v485
        %v586 = vpop.f32.mrb[0].mxu0
        %v587 = vadd.f32 %v464, %v586
        %v588 = vpop.f32.mrb[0].mxu0
        %589 = vmatprep.mubr.f32.mxu0 0.0
        %590 = vmatmul.mubr.f32.gmra.mrb[0].mxu0 %v488
        %v591 = vpop.f32.mrb[0].mxu0
        %v592 = vadd.f32 %v464, %v591
        %v593 = vpop.f32.mrb[0].mxu0
        %594 = vdwg.mxu0
        %v595 = vtanh.pop %v557
        %v596 = vtanh.pop %v562
        %v597 = vtanh.pop %v567
        %v598 = vtanh.pop %v572
        %v599 = vtanh.pop %v577
        %v600 = vtanh.pop %v582
        %v601 = vtanh.pop %v587
        %v602 = vtanh.pop %v592
        %v603 = vld [vmem:[#allocation2 + $0x1] sm:$0x1]
        %v604 = vlaneseq
        %v605 = vshrl.u32 %v604, 7
        %v606 = vsub.s32 0, %v605
        %v607 = vrot.slane %v603, %v606
        %v608 = vmul.f32 %v595, %v607
        %v609 = vmul.f32 %v596, %v607
        %v610 = vmul.f32 %v597, %v607
        %v611 = vmul.f32 %v598, %v607
        %v612 = vmul.f32 %v599, %v607
        %v613 = vmul.f32 %v600, %v607
        %v614 = vmul.f32 %v601, %v607
        %v615 = vmul.f32 %v602, %v607
        %v616 = vsel %vm465, %v608, 0.0
        %617 = vadd.xlane.f32.xlu0 %v616
        %v618 = vpop.xlane.xlu0 %617
        %v619 = vsel %vm465, %v609, 0.0
        %620 = vadd.xlane.f32.xlu0 %v619
        %v621 = vpop.xlane.xlu0 %620
        %v622 = vsel %vm465, %v610, 0.0
        %623 = vadd.xlane.f32.xlu0 %v622
        %v624 = vpop.xlane.xlu0 %623
        %v625 = vsel %vm465, %v611, 0.0
        %626 = vadd.xlane.f32.xlu0 %v625
        %v627 = vpop.xlane.xlu0 %626
        %v628 = vsel %vm465, %v612, 0.0
        %629 = vadd.xlane.f32.xlu0 %v628
        %v630 = vpop.xlane.xlu0 %629
        %v631 = vsel %vm465, %v613, 0.0
        %632 = vadd.xlane.f32.xlu0 %v631
        %v633 = vpop.xlane.xlu0 %632
        %v634 = vsel %vm465, %v614, 0.0
        %635 = vadd.xlane.f32.xlu0 %v634
        %v636 = vpop.xlane.xlu0 %635
        %v637 = vsel %vm465, %v615, 0.0
        %638 = vadd.xlane.f32.xlu0 %v637
        %v639 = vpop.xlane.xlu0 %638
        %v640 = vrot.slane %v618, 4
        %v641 = vmax.f32 %v618, %v640
        %v642 = vrot.slane %v641, 2
        %v643 = vmax.f32 %v641, %v642
        %v644 = vrot.slane %v643, 1
        %v645 = vmax.f32 %v643, %v644
        %v646 = vrot.slane %v621, 4
        %v647 = vmax.f32 %v621, %v646
        %v648 = vrot.slane %v647, 2
        %v649 = vmax.f32 %v647, %v648
        %v650 = vrot.slane %v649, 1
        %v651 = vmax.f32 %v649, %v650
        %v652 = vrot.slane %v624, 4
        %v653 = vmax.f32 %v624, %v652
        %v654 = vrot.slane %v653, 2
        %v655 = vmax.f32 %v653, %v654
        %v656 = vrot.slane %v655, 1
        %v657 = vmax.f32 %v655, %v656
        %v658 = vrot.slane %v627, 4
        %v659 = vmax.f32 %v627, %v658
        %v660 = vrot.slane %v659, 2
        %v661 = vmax.f32 %v659, %v660
        %v662 = vrot.slane %v661, 1
        %v663 = vmax.f32 %v661, %v662
        %v664 = vrot.slane %v630, 4
        %v665 = vmax.f32 %v630, %v664
        %v666 = vrot.slane %v665, 2
        %v667 = vmax.f32 %v665, %v666
        %v668 = vrot.slane %v667, 1
        %v669 = vmax.f32 %v667, %v668
        %v670 = vrot.slane %v633, 4
        %v671 = vmax.f32 %v633, %v670
        %v672 = vrot.slane %v671, 2
        %v673 = vmax.f32 %v671, %v672
        %v674 = vrot.slane %v673, 1
        %v675 = vmax.f32 %v673, %v674
        %v676 = vrot.slane %v636, 4
        %v677 = vmax.f32 %v636, %v676
        %v678 = vrot.slane %v677, 2
        %v679 = vmax.f32 %v677, %v678
        %v680 = vrot.slane %v679, 1
        %v681 = vmax.f32 %v679, %v680
        %v682 = vrot.slane %v639, 4
        %v683 = vmax.f32 %v639, %v682
        %v684 = vrot.slane %v683, 2
        %v685 = vmax.f32 %v683, %v684
        %v686 = vrot.slane %v685, 1
        %v687 = vmax.f32 %v685, %v686
        %v688 = vsub.f32 %v618, %v645
        %v689 = vsub.f32 %v621, %v651
        %v690 = vsub.f32 %v624, %v657
        %v691 = vsub.f32 %v627, %v663
        %v692 = vsub.f32 %v630, %v669
        %v693 = vsub.f32 %v633, %v675
        %v694 = vsub.f32 %v636, %v681
        %v695 = vsub.f32 %v639, %v687
        %v696 = vmul.f32 %v688, 1.442695
        %v697 = vpow.pop %v696
        %v698 = vmul.f32 %v689, 1.442695
        %v699 = vpow.pop %v698
        %v700 = vmul.f32 %v690, 1.442695
        %v701 = vpow.pop %v700
        %v702 = vmul.f32 %v691, 1.442695
        %v703 = vpow.pop %v702
        %v704 = vmul.f32 %v692, 1.442695
        %v705 = vpow.pop %v704
        %v706 = vmul.f32 %v693, 1.442695
        %v707 = vpow.pop %v706
        %v708 = vmul.f32 %v694, 1.442695
        %v709 = vpow.pop %v708
        %v710 = vmul.f32 %v695, 1.442695
        %v711 = vpow.pop %v710
        %v712 = vrot.slane %v697, 4
        %v713 = vadd.f32 %v697, %v712
        %v714 = vrot.slane %v713, 2
        %v715 = vadd.f32 %v713, %v714
        %v716 = vrot.slane %v715, 1
        %v717 = vadd.f32 %v715, %v716
        %v718 = vrot.slane %v699, 4
        %v719 = vadd.f32 %v699, %v718
        %v720 = vrot.slane %v719, 2
        %v721 = vadd.f32 %v719, %v720
        %v722 = vrot.slane %v721, 1
        %v723 = vadd.f32 %v721, %v722
        %v724 = vrot.slane %v701, 4
        %v725 = vadd.f32 %v701, %v724
        %v726 = vrot.slane %v725, 2
        %v727 = vadd.f32 %v725, %v726
        %v728 = vrot.slane %v727, 1
        %v729 = vadd.f32 %v727, %v728
        %v730 = vrot.slane %v703, 4
        %v731 = vadd.f32 %v703, %v730
        %v732 = vrot.slane %v731, 2
        %v733 = vadd.f32 %v731, %v732
        %v734 = vrot.slane %v733, 1
        %v735 = vadd.f32 %v733, %v734
        %v736 = vrot.slane %v705, 4
        %v737 = vadd.f32 %v705, %v736
        %v738 = vrot.slane %v737, 2
        %v739 = vadd.f32 %v737, %v738
        %v740 = vrot.slane %v739, 1
        %v741 = vadd.f32 %v739, %v740
        %v742 = vrot.slane %v707, 4
        %v743 = vadd.f32 %v707, %v742
        %v744 = vrot.slane %v743, 2
        %v745 = vadd.f32 %v743, %v744
        %v746 = vrot.slane %v745, 1
        %v747 = vadd.f32 %v745, %v746
        %v748 = vrot.slane %v709, 4
        %v749 = vadd.f32 %v709, %v748
        %v750 = vrot.slane %v749, 2
        %v751 = vadd.f32 %v749, %v750
        %v752 = vrot.slane %v751, 1
        %v753 = vadd.f32 %v751, %v752
        %v754 = vrot.slane %v711, 4
        %v755 = vadd.f32 %v711, %v754
        %v756 = vrot.slane %v755, 2
        %v757 = vadd.f32 %v755, %v756
        %v758 = vrot.slane %v757, 1
        %v759 = vadd.f32 %v757, %v758
        %v760 = vrcp.pop %v717
        %v761 = vrcp.pop %v723
        %v762 = vrcp.pop %v729
        %v763 = vrcp.pop %v735
        %v764 = vrcp.pop %v741
        %v765 = vrcp.pop %v747
        %v766 = vrcp.pop %v753
        %v767 = vrcp.pop %v759
        %v768 = vmul.f32 %v697, %v760
        %v769 = vmul.f32 %v699, %v761
        %v770 = vmul.f32 %v701, %v762
        %v771 = vmul.f32 %v703, %v763
        %v772 = vmul.f32 %v705, %v764
        %v773 = vmul.f32 %v707, %v765
        %v774 = vmul.f32 %v709, %v766
        %v775 = vmul.f32 %v711, %v767
        %v776 = vmul.f32 %v768, %v448
        %v777 = vmul.f32 %v769, %v449
        %v778 = vmul.f32 %v770, %v450
        %v779 = vmul.f32 %v771, %v451
        %v780 = vmul.f32 %v772, %v452
        %v781 = vmul.f32 %v773, %v453
        %v782 = vmul.f32 %v774, %v454
        %v783 = vmul.f32 %v775, %v455
        %v784 = vsel %vm465, %v776, 0.0
        %v785 = vrot.slane %v784, 4
        %v786 = vadd.f32 %v784, %v785
        %v787 = vrot.slane %v786, 2
        %v788 = vadd.f32 %v786, %v787
        %v789 = vrot.slane %v788, 1
        %v790 = vadd.f32 %v788, %v789
        %v791 = vsel %vm465, %v777, 0.0
        %v792 = vrot.slane %v791, 4
        %v793 = vadd.f32 %v791, %v792
        %v794 = vrot.slane %v793, 2
        %v795 = vadd.f32 %v793, %v794
        %v796 = vrot.slane %v795, 1
        %v797 = vadd.f32 %v795, %v796
        %v798 = vsel %vm465, %v778, 0.0
        %v799 = vrot.slane %v798, 4
        %v800 = vadd.f32 %v798, %v799
        %v801 = vrot.slane %v800, 2
        %v802 = vadd.f32 %v800, %v801
        %v803 = vrot.slane %v802, 1
        %v804 = vadd.f32 %v802, %v803
        %v805 = vsel %vm465, %v779, 0.0
        %v806 = vrot.slane %v805, 4
        %v807 = vadd.f32 %v805, %v806
        %v808 = vrot.slane %v807, 2
        %v809 = vadd.f32 %v807, %v808
        %v810 = vrot.slane %v809, 1
        %v811 = vadd.f32 %v809, %v810
        %v812 = vsel %vm465, %v780, 0.0
        %v813 = vrot.slane %v812, 4
        %v814 = vadd.f32 %v812, %v813
        %v815 = vrot.slane %v814, 2
        %v816 = vadd.f32 %v814, %v815
        %v817 = vrot.slane %v816, 1
        %v818 = vadd.f32 %v816, %v817
        %v819 = vsel %vm465, %v781, 0.0
        %v820 = vrot.slane %v819, 4
        %v821 = vadd.f32 %v819, %v820
        %v822 = vrot.slane %v821, 2
        %v823 = vadd.f32 %v821, %v822
        %v824 = vrot.slane %v823, 1
        %v825 = vadd.f32 %v823, %v824
        %v826 = vsel %vm465, %v782, 0.0
        %v827 = vrot.slane %v826, 4
        %v828 = vadd.f32 %v826, %v827
        %v829 = vrot.slane %v828, 2
        %v830 = vadd.f32 %v828, %v829
        %v831 = vrot.slane %v830, 1
        %v832 = vadd.f32 %v830, %v831
        %v833 = vsel %vm465, %v783, 0.0
        %v834 = vrot.slane %v833, 4
        %v835 = vadd.f32 %v833, %v834
        %v836 = vrot.slane %v835, 2
        %v837 = vadd.f32 %v835, %v836
        %v838 = vrot.slane %v837, 1
        %v839 = vadd.f32 %v837, %v838
        %v840 = vld [vmem:[%s447] sm:$0xff]
        %v841 = vld [vmem:[#allocation7] sm:$0x7f]
        %v842 = vld [vmem:[#allocation2 + $0x2] sm:$0x1]
        %v843 = vlaneseq
        %v844 = vshrl.u32 %v843, 7
        %v845 = vsub.s32 0, %v844
        %v846 = vrot.slane %v842, %v845
        %vm847 = vcmask 56320
        %v849 = vsel %vm847, %v840, 0
        %vm851 = vcmask 1046528
        %v853 = vsel %vm851, %v841, 0
        %855 = vmatprep.subr.mxu0 0.0
        %856 = vmatpush1.msra.mxu0 %v853
        %857 = vmatprep.subr.mxu0 0.0
        %858 = vmatpush1.msra.mxu0 0.0
        %859 = vmatprep.subr.mxu0 0.0
        %860 = vmatpush1.msra.mxu0 0.0
        %861 = vmatprep.subr.mxu0 0.0
        %862 = vmatpush1.msra.mxu0 0.0
        %863 = vmatprep.subr.mxu0 0.0
        %864 = vmatpush1.msra.mxu0 0.0
        %865 = vmatprep.subr.mxu0 0.0
        %866 = vmatpush1.msra.mxu0 0.0
        %867 = vmatprep.subr.mxu0 0.0
        %868 = vmatpush1.msra.mxu0 0.0
        %869 = vmatprep.subr.mxu0 0.0
        %870 = vmatpush1.msra.mxu0 0.0
        %871 = vmatprep.subr.mxu0 0.0
        %872 = vmatpush1.msra.mxu0 0.0
        %873 = vmatprep.subr.mxu0 0.0
        %874 = vmatpush1.msra.mxu0 0.0
        %875 = vmatprep.subr.mxu0 0.0
        %876 = vmatpush1.msra.mxu0 0.0
        %877 = vmatprep.subr.mxu0 0.0
        %878 = vmatpush1.msra.mxu0 0.0
        %879 = vmatprep.subr.mxu0 0.0
        %880 = vmatpush1.msra.mxu0 0.0
        %881 = vmatprep.subr.mxu0 0.0
        %882 = vmatpush1.msra.mxu0 0.0
        %883 = vmatprep.subr.mxu0 0.0
        %884 = vmatpush1.msra.mxu0 0.0
        %885 = vmatprep.subr.mxu0 0.0
        %886 = vmatpush1.msra.mxu0 0.0
        %887 = vmatprep.subr.mxu0 0.0
        %888 = vmatpush1.msra.mxu0 0.0
        %889 = vmatprep.subr.mxu0 0.0
        %890 = vmatpush1.msra.mxu0 0.0
        %891 = vmatprep.subr.mxu0 0.0
        %892 = vmatpush1.msra.mxu0 0.0
        %893 = vmatprep.subr.mxu0 0.0
        %894 = vmatpush1.msra.mxu0 0.0
        %895 = vmatprep.subr.mxu0 0.0
        %896 = vmatpush1.msra.mxu0 0.0
        %897 = vmatprep.subr.mxu0 0.0
        %898 = vmatpush1.msra.mxu0 0.0
        %899 = vmatprep.subr.mxu0 0.0
        %900 = vmatpush1.msra.mxu0 0.0
        %901 = vmatprep.subr.mxu0 0.0
        %902 = vmatpush1.msra.mxu0 0.0
        %903 = vmatprep.subr.mxu0 0.0
        %904 = vmatpush1.msra.mxu0 0.0
        %905 = vmatprep.subr.mxu0 0.0
        %906 = vmatpush1.msra.mxu0 0.0
        %907 = vmatprep.subr.mxu0 0.0
        %908 = vmatpush1.msra.mxu0 0.0
        %909 = vmatprep.subr.mxu0 0.0
        %910 = vmatpush1.msra.mxu0 0.0
        %911 = vmatprep.subr.mxu0 0.0
        %912 = vmatpush1.msra.mxu0 0.0
        %913 = vmatprep.subr.mxu0 0.0
        %914 = vmatpush1.msra.mxu0 0.0
        %915 = vmatprep.subr.mxu0 0.0
        %916 = vmatpush1.msra.mxu0 0.0
        %917 = vmatprep.subr.mxu0 0.0
        %918 = vmatpush1.msra.mxu0 0.0
        %919 = vmatprep.mubr.f32.mxu0 0.0
        %920 = vmatmul.mubr.f32.gmra.mrb[0].mxu0 %v849
        %v921 = vpop.f32.mrb[0].mxu0
        %v922 = vadd.f32 %v846, %v921
        %v923 = vpop.f32.mrb[0].mxu0
        %924 = vdwg.mxu0
        %v925 = vld [vmem:[#allocation2 + $0x3] sm:$0x1]
        %v926 = vld [vmem:[#allocation2 + $0x4] sm:$0x1]
        %vm927 = vcmask 523264
        %v928 = vsel %vm927, %v922, 0.0
        %929 = vadd.xlane.f32.xlu0 %v928
        %v930 = vpop.xlane.xlu0 %929
        %v931 = vrcp.pop 64.0
        %v932 = vmul.f32 %v930, %v931
        %v933 = vsub.f32 %v922, %v932
        %v934 = vmul.f32 %v933, %v933
        %v935 = vsel %vm927, %v934, 0.0
        %936 = vadd.xlane.f32.xlu0 %v935
        %v937 = vpop.xlane.xlu0 %936
        %v938 = vmul.f32 %v937, %v931
        %v939 = vadd.f32 %v938, 1e-05
        %v940 = vrsqrt.pop %v939
        %v941 = vmul.f32 %v933, %v940
        %v942 = vlaneseq
        %v943 = vshrl.u32 %v942, 7
        %v944 = vsub.s32 0, %v943
        %v945 = vrot.slane %v925, %v944
        %v946 = vmul.f32 %v941, %v945
        %v947 = vlaneseq
        %v948 = vshrl.u32 %v947, 7
        %v949 = vsub.s32 0, %v948
        %v950 = vrot.slane %v926, %v949
        %v951 = vadd.f32 %v946, %v950
        %v952 = vmax.f32 %v951, 0.0
        %v953 = vld [vmem:[%s5] sm:$0xff]
        %v954 = vld [vmem:[%s5 + $0x8] sm:$0xff]
        %v955 = vld [vmem:[%s5 + $0x10] sm:$0xff]
        %v956 = vld [vmem:[%s5 + $0x18] sm:$0xff]
        %v957 = vld [vmem:[%s5 + $0x20] sm:$0xff]
        %v958 = vld [vmem:[%s5 + $0x28] sm:$0xff]
        %v959 = vld [vmem:[%s5 + $0x30] sm:$0xff]
        %v960 = vld [vmem:[%s5 + $0x38] sm:$0xff]
        %v961 = vld [vmem:[#allocation2 + $0x5] sm:$0x1]
        %v962 = vlaneseq
        %v963 = vshrl.u32 %v962, 7
        %v964 = vsub.s32 0, %v963
        %v965 = vrot.slane %v961, %v964
        %v967 = vsel %vm927, %v952, 0
        %969 = vmatprep.subr.mxu0 0.0
        %970 = vmatpush1.msra.mxu0 %v953
        %971 = vmatprep.subr.mxu0 0.0
        %972 = vmatpush1.msra.mxu0 %v954
        %973 = vmatprep.subr.mxu0 0.0
        %974 = vmatpush1.msra.mxu0 %v955
        %975 = vmatprep.subr.mxu0 0.0
        %976 = vmatpush1.msra.mxu0 %v956
        %977 = vmatprep.subr.mxu0 0.0
        %978 = vmatpush1.msra.mxu0 %v957
        %979 = vmatprep.subr.mxu0 0.0
        %980 = vmatpush1.msra.mxu0 %v958
        %981 = vmatprep.subr.mxu0 0.0
        %982 = vmatpush1.msra.mxu0 %v959
        %983 = vmatprep.subr.mxu0 0.0
        %984 = vmatpush1.msra.mxu0 %v960
        %985 = vmatprep.subr.mxu0 0.0
        %986 = vmatpush1.msra.mxu0 0.0
        %987 = vmatprep.subr.mxu0 0.0
        %988 = vmatpush1.msra.mxu0 0.0
        %989 = vmatprep.subr.mxu0 0.0
        %990 = vmatpush1.msra.mxu0 0.0
        %991 = vmatprep.subr.mxu0 0.0
        %992 = vmatpush1.msra.mxu0 0.0
        %993 = vmatprep.subr.mxu0 0.0
        %994 = vmatpush1.msra.mxu0 0.0
        %995 = vmatprep.subr.mxu0 0.0
        %996 = vmatpush1.msra.mxu0 0.0
        %997 = vmatprep.subr.mxu0 0.0
        %998 = vmatpush1.msra.mxu0 0.0
        %999 = vmatprep.subr.mxu0 0.0
        %1000 = vmatpush1.msra.mxu0 0.0
        %1001 = vmatprep.subr.mxu0 0.0
        %1002 = vmatpush1.msra.mxu0 0.0
        %1003 = vmatprep.subr.mxu0 0.0
        %1004 = vmatpush1.msra.mxu0 0.0
        %1005 = vmatprep.subr.mxu0 0.0
        %1006 = vmatpush1.msra.mxu0 0.0
        %1007 = vmatprep.subr.mxu0 0.0
        %1008 = vmatpush1.msra.mxu0 0.0
        %1009 = vmatprep.subr.mxu0 0.0
        %1010 = vmatpush1.msra.mxu0 0.0
        %1011 = vmatprep.subr.mxu0 0.0
        %1012 = vmatpush1.msra.mxu0 0.0
        %1013 = vmatprep.subr.mxu0 0.0
        %1014 = vmatpush1.msra.mxu0 0.0
        %1015 = vmatprep.subr.mxu0 0.0
        %1016 = vmatpush1.msra.mxu0 0.0
        %1017 = vmatprep.subr.mxu0 0.0
        %1018 = vmatpush1.msra.mxu0 0.0
        %1019 = vmatprep.subr.mxu0 0.0
        %1020 = vmatpush1.msra.mxu0 0.0
        %1021 = vmatprep.subr.mxu0 0.0
        %1022 = vmatpush1.msra.mxu0 0.0
        %1023 = vmatprep.subr.mxu0 0.0
        %1024 = vmatpush1.msra.mxu0 0.0
        %1025 = vmatprep.subr.mxu0 0.0
        %1026 = vmatpush1.msra.mxu0 0.0
        %1027 = vmatprep.subr.mxu0 0.0
        %1028 = vmatpush1.msra.mxu0 0.0
        %1029 = vmatprep.subr.mxu0 0.0
        %1030 = vmatpush1.msra.mxu0 0.0
        %1031 = vmatprep.subr.mxu0 0.0
        %1032 = vmatpush1.msra.mxu0 0.0
        %1033 = vmatprep.mubr.f32.mxu0 0.0
        %1034 = vmatmul.mubr.f32.gmra.mrb[0].mxu0 %v967
        %v1035 = vpop.f32.mrb[0].mxu0
        %v1036 = vadd.f32 %v965, %v1035
        %v1037 = vpop.f32.mrb[0].mxu0
        %1038 = vdwg.mxu0
        %v1039 = vld [vmem:[#allocation2 + $0x6] sm:$0x1]
        %v1040 = vld [vmem:[#allocation2 + $0x7] sm:$0x1]
        %v1041 = vsel %vm465, %v1036, 0.0
        %1042 = vadd.xlane.f32.xlu0 %v1041
        %v1043 = vpop.xlane.xlu0 %1042
        %v1044 = vrcp.pop 32.0
        %v1045 = vmul.f32 %v1043, %v1044
        %v1046 = vsub.f32 %v1036, %v1045
        %v1047 = vmul.f32 %v1046, %v1046
        %v1048 = vsel %vm465, %v1047, 0.0
        %1049 = vadd.xlane.f32.xlu0 %v1048
        %v1050 = vpop.xlane.xlu0 %1049
        %v1051 = vmul.f32 %v1050, %v1044
        %v1052 = vadd.f32 %v1051, 1e-05
        %v1053 = vrsqrt.pop %v1052
        %v1054 = vmul.f32 %v1046, %v1053
        %v1055 = vlaneseq
        %v1056 = vshrl.u32 %v1055, 7
        %v1057 = vsub.s32 0, %v1056
        %v1058 = vrot.slane %v1039, %v1057
        %v1059 = vmul.f32 %v1054, %v1058
        %v1060 = vlaneseq
        %v1061 = vshrl.u32 %v1060, 7
        %v1062 = vsub.s32 0, %v1061
        %v1063 = vrot.slane %v1040, %v1062
        %v1064 = vadd.f32 %v1059, %v1063
        %v1065 = vmax.f32 %v1064, 0.0
        %v1066 = vld [vmem:[#allocation8] sm:$0xff]
        %v1067 = vld [vmem:[#allocation8 + $0x8] sm:$0xff]
        %v1068 = vld [vmem:[#allocation8 + $0x10] sm:$0xff]
        %v1069 = vld [vmem:[#allocation8 + $0x18] sm:$0xff]
        %v1070 = vld [vmem:[%s7] sm:$0xff]
        %v1071 = vld [vmem:[%s7 + $0x8] sm:$0xff]
        %v1072 = vld [vmem:[%s7 + $0x10] sm:$0xff]
        %v1073 = vld [vmem:[%s7 + $0x18] sm:$0xff]
        %v1075 = vsel %vm465, %v1065, 0
        %1077 = vmatprep.subr.mxu0 0.0
        %1078 = vmatpush1.msra.mxu0 %v1070
        %1079 = vmatprep.subr.mxu0 0.0
        %1080 = vmatpush1.msra.mxu0 %v1071
        %1081 = vmatprep.subr.mxu0 0.0
        %1082 = vmatpush1.msra.mxu0 %v1072
        %1083 = vmatprep.subr.mxu0 0.0
        %1084 = vmatpush1.msra.mxu0 %v1073
        %1085 = vmatprep.subr.mxu0 0.0
        %1086 = vmatpush1.msra.mxu0 0.0
        %1087 = vmatprep.subr.mxu0 0.0
        %1088 = vmatpush1.msra.mxu0 0.0
        %1089 = vmatprep.subr.mxu0 0.0
        %1090 = vmatpush1.msra.mxu0 0.0
        %1091 = vmatprep.subr.mxu0 0.0
        %1092 = vmatpush1.msra.mxu0 0.0
        %1093 = vmatprep.subr.mxu0 0.0
        %1094 = vmatpush1.msra.mxu0 0.0
        %1095 = vmatprep.subr.mxu0 0.0
        %1096 = vmatpush1.msra.mxu0 0.0
        %1097 = vmatprep.subr.mxu0 0.0
        %1098 = vmatpush1.msra.mxu0 0.0
        %1099 = vmatprep.subr.mxu0 0.0
        %1100 = vmatpush1.msra.mxu0 0.0
        %1101 = vmatprep.subr.mxu0 0.0
        %1102 = vmatpush1.msra.mxu0 0.0
        %1103 = vmatprep.subr.mxu0 0.0
        %1104 = vmatpush1.msra.mxu0 0.0
        %1105 = vmatprep.subr.mxu0 0.0
        %1106 = vmatpush1.msra.mxu0 0.0
        %1107 = vmatprep.subr.mxu0 0.0
        %1108 = vmatpush1.msra.mxu0 0.0
        %1109 = vmatprep.subr.mxu0 0.0
        %1110 = vmatpush1.msra.mxu0 0.0
        %1111 = vmatprep.subr.mxu0 0.0
        %1112 = vmatpush1.msra.mxu0 0.0
        %1113 = vmatprep.subr.mxu0 0.0
        %1114 = vmatpush1.msra.mxu0 0.0
        %1115 = vmatprep.subr.mxu0 0.0
        %1116 = vmatpush1.msra.mxu0 0.0
        %1117 = vmatprep.subr.mxu0 0.0
        %1118 = vmatpush1.msra.mxu0 0.0
        %1119 = vmatprep.subr.mxu0 0.0
        %1120 = vmatpush1.msra.mxu0 0.0
        %1121 = vmatprep.subr.mxu0 0.0
        %1122 = vmatpush1.msra.mxu0 0.0
        %1123 = vmatprep.subr.mxu0 0.0
        %1124 = vmatpush1.msra.mxu0 0.0
        %1125 = vmatprep.subr.mxu0 0.0
        %1126 = vmatpush1.msra.mxu0 0.0
        %1127 = vmatprep.subr.mxu0 0.0
        %1128 = vmatpush1.msra.mxu0 0.0
        %1129 = vmatprep.subr.mxu0 0.0
        %1130 = vmatpush1.msra.mxu0 0.0
        %1131 = vmatprep.subr.mxu0 0.0
        %1132 = vmatpush1.msra.mxu0 0.0
        %1133 = vmatprep.subr.mxu0 0.0
        %1134 = vmatpush1.msra.mxu0 0.0
        %1135 = vmatprep.subr.mxu0 0.0
        %1136 = vmatpush1.msra.mxu0 0.0
        %1137 = vmatprep.subr.mxu0 0.0
        %1138 = vmatpush1.msra.mxu0 0.0
        %1139 = vmatprep.subr.mxu0 0.0
        %1140 = vmatpush1.msra.mxu0 0.0
        %1141 = vmatprep.mubr.f32.mxu0 0.0
        %1142 = vmatmul.mubr.f32.gmra.mrb[0].mxu0 %v1075
        %v1143 = vpop.f32.mrb[0].mxu0
        %v1144 = vadd.f32 0.0, %v1143
        %v1145 = vpop.f32.mrb[0].mxu0
        %1146 = vdwg.mxu0
        %vm1155 = vcmask 1041409
        %v1156 = vsel %vm1155, %v797, %v790
        %vm1157 = vcmask 1042434
        %v1158 = vsel %vm1157, %v804, %v1156
        %vm1159 = vcmask 1043459
        %v1160 = vsel %vm1159, %v811, %v1158
        %vm1161 = vcmask 1044484
        %v1162 = vsel %vm1161, %v818, %v1160
        %vm1163 = vcmask 1045509
        %v1164 = vsel %vm1163, %v825, %v1162
        %vm1165 = vcmask 1046534
        %v1166 = vsel %vm1165, %v832, %v1164
        %vm1167 = vcmask 1047559
        %v1168 = vsel %vm1167, %v839, %v1166
        %v1169 = vsel %vm465, %v1168, 0
        %1171 = vmatprep.subr.mxu0 0.0
        %1172 = vmatpush1.msra.mxu0 %v1066
        %1173 = vmatprep.subr.mxu0 0.0
        %1174 = vmatpush1.msra.mxu0 %v1067
        %1175 = vmatprep.subr.mxu0 0.0
        %1176 = vmatpush1.msra.mxu0 %v1068
        %1177 = vmatprep.subr.mxu0 0.0
        %1178 = vmatpush1.msra.mxu0 %v1069
        %1179 = vmatprep.subr.mxu0 0.0
        %1180 = vmatpush1.msra.mxu0 0.0
        %1181 = vmatprep.subr.mxu0 0.0
        %1182 = vmatpush1.msra.mxu0 0.0
        %1183 = vmatprep.subr.mxu0 0.0
        %1184 = vmatpush1.msra.mxu0 0.0
        %1185 = vmatprep.subr.mxu0 0.0
        %1186 = vmatpush1.msra.mxu0 0.0
        %1187 = vmatprep.subr.mxu0 0.0
        %1188 = vmatpush1.msra.mxu0 0.0
        %1189 = vmatprep.subr.mxu0 0.0
        %1190 = vmatpush1.msra.mxu0 0.0
        %1191 = vmatprep.subr.mxu0 0.0
        %1192 = vmatpush1.msra.mxu0 0.0
        %1193 = vmatprep.subr.mxu0 0.0
        %1194 = vmatpush1.msra.mxu0 0.0
        %1195 = vmatprep.subr.mxu0 0.0
        %1196 = vmatpush1.msra.mxu0 0.0
        %1197 = vmatprep.subr.mxu0 0.0
        %1198 = vmatpush1.msra.mxu0 0.0
        %1199 = vmatprep.subr.mxu0 0.0
        %1200 = vmatpush1.msra.mxu0 0.0
        %1201 = vmatprep.subr.mxu0 0.0
        %1202 = vmatpush1.msra.mxu0 0.0
        %1203 = vmatprep.subr.mxu0 0.0
        %1204 = vmatpush1.msra.mxu0 0.0
        %1205 = vmatprep.subr.mxu0 0.0
        %1206 = vmatpush1.msra.mxu0 0.0
        %1207 = vmatprep.subr.mxu0 0.0
        %1208 = vmatpush1.msra.mxu0 0.0
        %1209 = vmatprep.subr.mxu0 0.0
        %1210 = vmatpush1.msra.mxu0 0.0
        %1211 = vmatprep.subr.mxu0 0.0
        %1212 = vmatpush1.msra.mxu0 0.0
        %1213 = vmatprep.subr.mxu0 0.0
        %1214 = vmatpush1.msra.mxu0 0.0
        %1215 = vmatprep.subr.mxu0 0.0
        %1216 = vmatpush1.msra.mxu0 0.0
        %1217 = vmatprep.subr.mxu0 0.0
        %1218 = vmatpush1.msra.mxu0 0.0
        %1219 = vmatprep.subr.mxu0 0.0
        %1220 = vmatpush1.msra.mxu0 0.0
        %1221 = vmatprep.subr.mxu0 0.0
        %1222 = vmatpush1.msra.mxu0 0.0
        %1223 = vmatprep.subr.mxu0 0.0
        %1224 = vmatpush1.msra.mxu0 0.0
        %1225 = vmatprep.subr.mxu0 0.0
        %1226 = vmatpush1.msra.mxu0 0.0
        %1227 = vmatprep.subr.mxu0 0.0
        %1228 = vmatpush1.msra.mxu0 0.0
        %1229 = vmatprep.subr.mxu0 0.0
        %1230 = vmatpush1.msra.mxu0 0.0
        %1231 = vmatprep.subr.mxu0 0.0
        %1232 = vmatpush1.msra.mxu0 0.0
        %1233 = vmatprep.subr.mxu0 0.0
        %1234 = vmatpush1.msra.mxu0 0.0
        %1235 = vmatprep.mubr.f32.mxu0 0.0
        %1236 = vmatmul.mubr.f32.gmra.mrb[0].mxu0 %v1169
        %v1237 = vpop.f32.mrb[0].mxu0
        %v1238 = vadd.f32 %v1144, %v1237
        %v1239 = vpop.f32.mrb[0].mxu0
        %1240 = vdwg.mxu0
        %v1241 = vld [vmem:[#allocation2 + $0x8] sm:$0x1]
        %v1242 = vlaneseq
        %v1243 = vshrl.u32 %v1242, 7
        %v1244 = vsub.s32 0, %v1243
        %v1245 = vrot.slane %v1241, %v1244
        %v1246 = vadd.f32 %v1238, %v1245
        %v1247 = vld [vmem:[#allocation2 + $0x9] sm:$0x1]
        %v1248 = vld [vmem:[#allocation2 + $0xa] sm:$0x1]
        %v1249 = vsel %vm465, %v1246, 0.0
        %1250 = vadd.xlane.f32.xlu0 %v1249
        %v1251 = vpop.xlane.xlu0 %1250
        %v1252 = vmul.f32 %v1251, %v1044
        %v1253 = vsub.f32 %v1246, %v1252
        %v1254 = vmul.f32 %v1253, %v1253
        %v1255 = vsel %vm465, %v1254, 0.0
        %1256 = vadd.xlane.f32.xlu0 %v1255
        %v1257 = vpop.xlane.xlu0 %1256
        %v1258 = vmul.f32 %v1257, %v1044
        %v1259 = vadd.f32 %v1258, 1e-05
        %v1260 = vrsqrt.pop %v1259
        %v1261 = vmul.f32 %v1253, %v1260
        %v1262 = vlaneseq
        %v1263 = vshrl.u32 %v1262, 7
        %v1264 = vsub.s32 0, %v1263
        %v1265 = vrot.slane %v1247, %v1264
        %v1266 = vmul.f32 %v1261, %v1265
        %v1267 = vlaneseq
        %v1268 = vshrl.u32 %v1267, 7
        %v1269 = vsub.s32 0, %v1268
        %v1270 = vrot.slane %v1248, %v1269
        %v1271 = vadd.f32 %v1266, %v1270
        %v1272 = vmax.f32 %v1271, 0.0
        %v1273 = vld [vmem:[%s8] sm:$0xff]
        %v1274 = vld [vmem:[%s8 + $0x8] sm:$0xff]
        %v1275 = vld [vmem:[%s8 + $0x10] sm:$0xff]
        %v1276 = vld [vmem:[%s8 + $0x18] sm:$0xff]
        %v1277 = vld [vmem:[#allocation2 + $0xb] sm:$0x1]
        %v1278 = vlaneseq
        %v1279 = vshrl.u32 %v1278, 7
        %v1280 = vsub.s32 0, %v1279
        %v1281 = vrot.slane %v1277, %v1280
        %v1283 = vsel %vm465, %v1272, 0
        %1285 = vmatprep.subr.mxu0 0.0
        %1286 = vmatpush1.msra.mxu0 %v1273
        %1287 = vmatprep.subr.mxu0 0.0
        %1288 = vmatpush1.msra.mxu0 %v1274
        %1289 = vmatprep.subr.mxu0 0.0
        %1290 = vmatpush1.msra.mxu0 %v1275
        %1291 = vmatprep.subr.mxu0 0.0
        %1292 = vmatpush1.msra.mxu0 %v1276
        %1293 = vmatprep.subr.mxu0 0.0
        %1294 = vmatpush1.msra.mxu0 0.0
        %1295 = vmatprep.subr.mxu0 0.0
        %1296 = vmatpush1.msra.mxu0 0.0
        %1297 = vmatprep.subr.mxu0 0.0
        %1298 = vmatpush1.msra.mxu0 0.0
        %1299 = vmatprep.subr.mxu0 0.0
        %1300 = vmatpush1.msra.mxu0 0.0
        %1301 = vmatprep.subr.mxu0 0.0
        %1302 = vmatpush1.msra.mxu0 0.0
        %1303 = vmatprep.subr.mxu0 0.0
        %1304 = vmatpush1.msra.mxu0 0.0
        %1305 = vmatprep.subr.mxu0 0.0
        %1306 = vmatpush1.msra.mxu0 0.0
        %1307 = vmatprep.subr.mxu0 0.0
        %1308 = vmatpush1.msra.mxu0 0.0
        %1309 = vmatprep.subr.mxu0 0.0
        %1310 = vmatpush1.msra.mxu0 0.0
        %1311 = vmatprep.subr.mxu0 0.0
        %1312 = vmatpush1.msra.mxu0 0.0
        %1313 = vmatprep.subr.mxu0 0.0
        %1314 = vmatpush1.msra.mxu0 0.0
        %1315 = vmatprep.subr.mxu0 0.0
        %1316 = vmatpush1.msra.mxu0 0.0
        %1317 = vmatprep.subr.mxu0 0.0
        %1318 = vmatpush1.msra.mxu0 0.0
        %1319 = vmatprep.subr.mxu0 0.0
        %1320 = vmatpush1.msra.mxu0 0.0
        %1321 = vmatprep.subr.mxu0 0.0
        %1322 = vmatpush1.msra.mxu0 0.0
        %1323 = vmatprep.subr.mxu0 0.0
        %1324 = vmatpush1.msra.mxu0 0.0
        %1325 = vmatprep.subr.mxu0 0.0
        %1326 = vmatpush1.msra.mxu0 0.0
        %1327 = vmatprep.subr.mxu0 0.0
        %1328 = vmatpush1.msra.mxu0 0.0
        %1329 = vmatprep.subr.mxu0 0.0
        %1330 = vmatpush1.msra.mxu0 0.0
        %1331 = vmatprep.subr.mxu0 0.0
        %1332 = vmatpush1.msra.mxu0 0.0
        %1333 = vmatprep.subr.mxu0 0.0
        %1334 = vmatpush1.msra.mxu0 0.0
        %1335 = vmatprep.subr.mxu0 0.0
        %1336 = vmatpush1.msra.mxu0 0.0
        %1337 = vmatprep.subr.mxu0 0.0
        %1338 = vmatpush1.msra.mxu0 0.0
        %1339 = vmatprep.subr.mxu0 0.0
        %1340 = vmatpush1.msra.mxu0 0.0
        %1341 = vmatprep.subr.mxu0 0.0
        %1342 = vmatpush1.msra.mxu0 0.0
        %1343 = vmatprep.subr.mxu0 0.0
        %1344 = vmatpush1.msra.mxu0 0.0
        %1345 = vmatprep.subr.mxu0 0.0
        %1346 = vmatpush1.msra.mxu0 0.0
        %1347 = vmatprep.subr.mxu0 0.0
        %1348 = vmatpush1.msra.mxu0 0.0
        %1349 = vmatprep.mubr.f32.mxu0 0.0
        %1350 = vmatmul.mubr.f32.gmra.mrb[0].mxu0 %v1283
        %v1351 = vpop.f32.mrb[0].mxu0
        %v1352 = vadd.f32 %v1281, %v1351
        %v1353 = vpop.f32.mrb[0].mxu0
        %1354 = vdwg.mxu0
        %v1355 = vld [vmem:[#allocation2 + $0xc] sm:$0x1]
        %v1356 = vld [vmem:[#allocation2 + $0xd] sm:$0x1]
        %vm1357 = vcmask 130048
        %v1358 = vsel %vm1357, %v1352, 0.0
        %1359 = vadd.xlane.f32.xlu0 %v1358
        %v1360 = vpop.xlane.xlu0 %1359
        %v1361 = vrcp.pop 16.0
        %v1362 = vmul.f32 %v1360, %v1361
        %v1363 = vsub.f32 %v1352, %v1362
        %v1364 = vmul.f32 %v1363, %v1363
        %v1365 = vsel %vm1357, %v1364, 0.0
        %1366 = vadd.xlane.f32.xlu0 %v1365
        %v1367 = vpop.xlane.xlu0 %1366
        %v1368 = vmul.f32 %v1367, %v1361
        %v1369 = vadd.f32 %v1368, 1e-05
        %v1370 = vrsqrt.pop %v1369
        %v1371 = vmul.f32 %v1363, %v1370
        %v1372 = vlaneseq
        %v1373 = vshrl.u32 %v1372, 7
        %v1374 = vsub.s32 0, %v1373
        %v1375 = vrot.slane %v1355, %v1374
        %v1376 = vmul.f32 %v1371, %v1375
        %v1377 = vlaneseq
        %v1378 = vshrl.u32 %v1377, 7
        %v1379 = vsub.s32 0, %v1378
        %v1380 = vrot.slane %v1356, %v1379
        %v1381 = vadd.f32 %v1376, %v1380
        %v1382 = vmax.f32 %v1381, 0.0
        %v1383 = vld [vmem:[#allocation10] sm:$0xff]
        %v1384 = vld [vmem:[#allocation10 + $0x8] sm:$0xff]
        %v1385 = vld [vmem:[#allocation2 + $0xe] sm:$0x1]
        %v1386 = vlaneseq
        %v1387 = vshrl.u32 %v1386, 7
        %v1388 = vsub.s32 0, %v1387
        %v1389 = vrot.slane %v1385, %v1388
        %v1391 = vsel %vm1357, %v1382, 0
        %1393 = vmatprep.subr.mxu0 0.0
        %1394 = vmatpush1.msra.mxu0 %v1383
        %1395 = vmatprep.subr.mxu0 0.0
        %1396 = vmatpush1.msra.mxu0 %v1384
        %1397 = vmatprep.subr.mxu0 0.0
        %1398 = vmatpush1.msra.mxu0 0.0
        %1399 = vmatprep.subr.mxu0 0.0
        %1400 = vmatpush1.msra.mxu0 0.0
        %1401 = vmatprep.subr.mxu0 0.0
        %1402 = vmatpush1.msra.mxu0 0.0
        %1403 = vmatprep.subr.mxu0 0.0
        %1404 = vmatpush1.msra.mxu0 0.0
        %1405 = vmatprep.subr.mxu0 0.0
        %1406 = vmatpush1.msra.mxu0 0.0
        %1407 = vmatprep.subr.mxu0 0.0
        %1408 = vmatpush1.msra.mxu0 0.0
        %1409 = vmatprep.subr.mxu0 0.0
        %1410 = vmatpush1.msra.mxu0 0.0
        %1411 = vmatprep.subr.mxu0 0.0
        %1412 = vmatpush1.msra.mxu0 0.0
        %1413 = vmatprep.subr.mxu0 0.0
        %1414 = vmatpush1.msra.mxu0 0.0
        %1415 = vmatprep.subr.mxu0 0.0
        %1416 = vmatpush1.msra.mxu0 0.0
        %1417 = vmatprep.subr.mxu0 0.0
        %1418 = vmatpush1.msra.mxu0 0.0
        %1419 = vmatprep.subr.mxu0 0.0
        %1420 = vmatpush1.msra.mxu0 0.0
        %1421 = vmatprep.subr.mxu0 0.0
        %1422 = vmatpush1.msra.mxu0 0.0
        %1423 = vmatprep.subr.mxu0 0.0
        %1424 = vmatpush1.msra.mxu0 0.0
        %1425 = vmatprep.subr.mxu0 0.0
        %1426 = vmatpush1.msra.mxu0 0.0
        %1427 = vmatprep.subr.mxu0 0.0
        %1428 = vmatpush1.msra.mxu0 0.0
        %1429 = vmatprep.subr.mxu0 0.0
        %1430 = vmatpush1.msra.mxu0 0.0
        %1431 = vmatprep.subr.mxu0 0.0
        %1432 = vmatpush1.msra.mxu0 0.0
        %1433 = vmatprep.subr.mxu0 0.0
        %1434 = vmatpush1.msra.mxu0 0.0
        %1435 = vmatprep.subr.mxu0 0.0
        %1436 = vmatpush1.msra.mxu0 0.0
        %1437 = vmatprep.subr.mxu0 0.0
        %1438 = vmatpush1.msra.mxu0 0.0
        %1439 = vmatprep.subr.mxu0 0.0
        %1440 = vmatpush1.msra.mxu0 0.0
        %1441 = vmatprep.subr.mxu0 0.0
        %1442 = vmatpush1.msra.mxu0 0.0
        %1443 = vmatprep.subr.mxu0 0.0
        %1444 = vmatpush1.msra.mxu0 0.0
        %1445 = vmatprep.subr.mxu0 0.0
        %1446 = vmatpush1.msra.mxu0 0.0
        %1447 = vmatprep.subr.mxu0 0.0
        %1448 = vmatpush1.msra.mxu0 0.0
        %1449 = vmatprep.subr.mxu0 0.0
        %1450 = vmatpush1.msra.mxu0 0.0
        %1451 = vmatprep.subr.mxu0 0.0
        %1452 = vmatpush1.msra.mxu0 0.0
        %1453 = vmatprep.subr.mxu0 0.0
        %1454 = vmatpush1.msra.mxu0 0.0
        %1455 = vmatprep.subr.mxu0 0.0
        %1456 = vmatpush1.msra.mxu0 0.0
        %1457 = vmatprep.mubr.f32.mxu0 0.0
        %1458 = vmatmul.mubr.f32.gmra.mrb[0].mxu0 %v1391
        %v1459 = vpop.f32.mrb[0].mxu0
        %v1460 = vadd.f32 %v1389, %v1459
        %v1461 = vpop.f32.mrb[0].mxu0
        %1462 = vdwg.mxu0
        %1463 = vst [vmem:[%s437] sm:$0xff] %v1460
        %s1464 = sand.u32 %s255, 1
        %s1465 = scalar_lea.sflag [#allocation4], %s1464
        %s1466 = sand.u32 %s255, 1
        %s1467 = smul.addr %s1466, 8
        %s1468 = scalar_lea.vmem [#allocation11], %s1467
        // Predicated region
        $region81: #{tpu_custom_call.1} parent=59 // pred_check
          %p1469 = pneg %p265
        $region82: #{tpu_custom_call.1} parent=59 // pred_check_branch
          %1471 = sbr.rel (%p1469) target = $region84
        $region83: #{tpu_custom_call.1} parent=59 // pred_region
          %s1473 = ssub.s32 128, 128
          %1474 = vsyncadd %s1465, %s1473
          %s1475 = smul.addr %s27, 128
          %s1476 = scalar_lea.hbm %s10, %s1475
          %s1478 = sshll.u32 %s1468, 4
          %s1479 = int_to_ptr.vmem [resolvable:$true] %s1478
          %1481 = dma.vmem_to_hbm [thread:$0]  %s1479, 128, %s1476, %s1465
        $region84: #{tpu_custom_call.1} parent=59 // pred_fallthru
          _
      $region60: #{tpu_custom_call.1} parent=5 // pred_fallthru
        _
      %p1482 = scmp.le.s32.totalorder 2, %s22
      // Predicated region
      $region85: #{tpu_custom_call.1} parent=5 // pred_check
        %p1483 = pneg %p1482
      $region86: #{tpu_custom_call.1} parent=5 // pred_check_branch
        %1485 = sbr.rel (%p1483) target = $region88
      $region87: #{tpu_custom_call.1} parent=5 // pred_region
        %s1486 = ssub.s32 %s22, 2
        // Predicated region
        $region89: #{tpu_custom_call.1} parent=87 // pred_check
          %p1487 = pneg %p271
        $region90: #{tpu_custom_call.1} parent=87 // pred_check_branch
          %1489 = sbr.rel (%p1487) target = $region92
        $region91: #{tpu_custom_call.1} parent=87 // pred_region
          %s1490 = sand.u32 %s256, 1
          %s1491 = scalar_lea.sflag [#allocation4], %s1490
          %s1492 = sand.u32 %s256, 1
          %s1493 = smul.addr %s1492, 8
          %s1494 = scalar_lea.vmem [#allocation11], %s1493
          %1495 = dma.done %s1491, 128
        $region92: #{tpu_custom_call.1} parent=87 // pred_fallthru
          _
      $region88: #{tpu_custom_call.1} parent=5 // pred_fallthru
        _
    $region6: #{tpu_custom_call.1} parent=1 // loop_footer
      %s26 = sadd.s32 1, %s22
    $region7: #{tpu_custom_call.1} parent=1 // loop_footer_branch
      %21 = sbr.rel target = $region3
    $region8: #{tpu_custom_call.1} parent=1 // loop_exit
      _
    %1496 = vsyncpa [#allocation3], 1
    %s1497 = scalar_lea.sflag [#allocation3], 1
    %1498 = vsyncpa %s1497, 1
    %1499 = vsyncpa [#allocation6], 1
    %1500 = vsyncpa [#allocation9], 1
    %1501 = vsyncpa [#allocation4], 1
    %s1502 = scalar_lea.sflag [#allocation4], 1
    %1503 = vsyncpa %s1502, 1

// kernel: tpu_custom_call.1
$region0: #{tpu_custom_call.1}
  #allocation0 [shape = 'u32[]', space=smem, size = 0x4, offset = 0x4, fixed_abs, tag = 'smem constant byte address 0x4 - core index']
  #allocation1 [shape = 'u32[144,128]{1,0:T(1,128)}', space=vmem, size = 0x12000, scoped, tag = 'internal scratch']
  %s0 = inlined_call_operand.vmem [shape: f32[16,8,32], index: 0, kind: input, shape index: {}]
  %s1 = inlined_call_operand.vmem [shape: f32[16,7], index: 1, kind: input, shape index: {}]
  %s2 = inlined_call_operand.hbm [shape: f32[16,128], index: 2, kind: input, shape index: {}]
  %s3 = inlined_call_operand.hbm [shape: f32[32,32], index: 3, kind: input, shape index: {}]
  %s4 = inlined_call_operand.hbm [shape: f32[7,64], index: 4, kind: input, shape index: {}]
  %s5 = inlined_call_operand.vmem [shape: f32[64,32], index: 5, kind: input, shape index: {}]
  %s6 = inlined_call_operand.hbm [shape: f32[32,32], index: 6, kind: input, shape index: {}]
  %s7 = inlined_call_operand.vmem [shape: f32[32,32], index: 7, kind: input, shape index: {}]
  %s8 = inlined_call_operand.vmem [shape: f32[32,16], index: 8, kind: input, shape index: {}]
  %s9 = inlined_call_operand.hbm [shape: f32[16,128], index: 9, kind: input, shape index: {}]
  %s10 = inlined_call_operand.hbm [shape: f32[16,128], index: 10, kind: output, shape index: {}]
  %s11 = sld [smem:[#allocation0]]
  $region93: #{tpu_custom_call.1} parent=0
    _
  %s13 = ssub.s32 1, %s11
  %s14 = scalar_select 0, %s13, %s11
  $region1: #{tpu_custom_call.1} parent=0
    #allocation2 [shape = 'u8[8192]{0}', space=vmem, size = 0x2000, scoped, tag = 'input window, operand 2, single buffered']
    #allocation3 [shape = 's32[2]{0}', space=sflag, size = 0x8, scoped, tag = 'scoped memory for tpu_custom_call.1']
    #allocation4 [shape = 's32[2]{0}', space=sflag, size = 0x8, scoped, tag = 'scoped memory for tpu_custom_call.1']
    #allocation5 [shape = 'u8[16384]{0}', space=vmem, size = 0x4000, scoped, tag = 'input window, operand 3, single buffered']
    #allocation6 [shape = 's32[1]{0}', space=sflag, size = 0x4, scoped, tag = 'scoped memory for tpu_custom_call.1']
    #allocation7 [shape = 'u8[4096]{0}', space=vmem, size = 0x1000, scoped, tag = 'input window, operand 4, single buffered']
    #allocation8 [shape = 'u8[16384]{0}', space=vmem, size = 0x4000, scoped, tag = 'input window, operand 6, single buffered']
    #allocation9 [shape = 's32[1]{0}', space=sflag, size = 0x4, scoped, tag = 'scoped memory for tpu_custom_call.1']
    #allocation10 [shape = 'u8[8192]{0}', space=vmem, size = 0x2000, scoped, tag = 'input window, operand 9, single buffered']
    #allocation11 [shape = 'u8[8192]{0}', space=vmem, size = 0x2000, scoped, tag = 'output window, operand 0']
    %15 = vsyncpa [#allocation3], 0
    %16 = vsyncpa [#allocation6], 0
    %17 = vsyncpa [#allocation9], 0
    %18 = vsyncpa [#allocation4], 0
    %s19 = scalar_lea.sflag [#allocation4], 1
    %20 = vsyncpa %s19, 0
    loop: start=0, step=1, limit=4
    $region2: #{tpu_custom_call.1} parent=1 // loop_pre_header
      _
    $region3: #{tpu_custom_call.1} parent=1 // loop_header
      %s22 = sphi 0, %s26
      %p23 = scmp.ge.s32.totalorder %s22, 4
      %s32 = sphi 0, %s34
      %s35 = sphi 0, %s32
      %s36 = sphi 0, %s35
      %s52 = sphi 0, %s36
      %s58 = sphi 0, %s60
      %s61 = sphi 0, %s58
      %s62 = sphi 0, %s61
      %s78 = sphi 0, %s62
      %s82 = sphi 0, %s82
      %s84 = sphi 0, %s82
      %s85 = sphi 0, %s84
      %s99 = sphi 0, %s85
      %s103 = sphi 0, %s103
      %s105 = sphi 0, %s103
      %s106 = sphi 0, %s105
      %s120 = sphi 0, %s106
      %s124 = sphi 0, %s124
      %s126 = sphi 0, %s124
      %s127 = sphi 0, %s126
      %s141 = sphi 0, %s127
      %s145 = sphi 0, %s145
      %s147 = sphi 0, %s145
      %s148 = sphi 0, %s147
      %s162 = sphi 0, %s148
      %s166 = sphi 0, %s166
      %s168 = sphi 0, %s166
      %s169 = sphi 0, %s168
      %s183 = sphi 0, %s169
      %s187 = sphi 0, %s187
      %s189 = sphi 0, %s187
      %s190 = sphi 0, %s189
      %s204 = sphi 0, %s190
      %s208 = sphi 0, %s208
      %s210 = sphi 0, %s208
      %s211 = sphi 0, %s210
      %s225 = sphi 0, %s211
      %s229 = sphi 0, %s229
      %s231 = sphi 0, %s229
      %s232 = sphi 0, %s231
      %s246 = sphi 0, %s232
      %s252 = sphi 0, %s254
      %s255 = sphi 0, %s252
      %s256 = sphi 0, %s255
      %s272 = sphi 0, %s256
    $region4: #{tpu_custom_call.1} parent=1 // loop_header_branch
      %25 = sbr.rel (%p23) target = $region8
    $region5: #{tpu_custom_call.1} parent=1 // loop_body
      %s27 = ssub.s32 %s22, 1
      %s28 = ssub.s32 %s22, 2
      %s29 = sadd.s32 %s22, 1
      %s30 = ssub.s32 %s22, %s29
      %p31 = scmp.eq.s32.totalorder %s30, 0
      %s33 = sadd.s32 %s32, 1
      %s34 = scalar_select %p31, %s32, %s33
      %p37 = pneg %p31
      %p38 = scmp.eq.s32.totalorder %s22, 1
      %p39 = por %p37, %p38
      %p40 = scmp.ne.s32.totalorder %s32, %s35
      %p41 = scmp.eq.s32.totalorder %s22, 0
      %p42 = por %p40, %p41
      %p43 = scmp.ne.s32.totalorder %s32, %s35
      %p44 = scmp.eq.s32.totalorder %s27, 1
      %p45 = por %p43, %p44
      %p46 = scmp.ne.s32.totalorder %s35, %s36
      %p47 = scmp.eq.s32.totalorder %s27, 0
      %p48 = por %p46, %p47
      %p49 = scmp.ne.s32.totalorder %s35, %s36
      %p50 = scmp.eq.s32.totalorder %s28, 1
      %p51 = por %p49, %p50
      %p53 = scmp.ne.s32.totalorder %s36, %s52
      %p54 = scmp.eq.s32.totalorder %s28, 0
      %p55 = por %p53, %p54
      %s56 = ssub.s32 %s22, %s29
      %p57 = scmp.eq.s32.totalorder %s56, 0
      %s59 = sadd.s32 %s58, 1
      %s60 = scalar_select %p57, %s58, %s59
      %p63 = pneg %p57
      %p64 = scmp.eq.s32.totalorder %s22, 1
      %p65 = por %p63, %p64
      %p66 = scmp.ne.s32.totalorder %s58, %s61
      %p67 = scmp.eq.s32.totalorder %s22, 0
      %p68 = por %p66, %p67
      %p69 = scmp.ne.s32.totalorder %s58, %s61
      %p70 = scmp.eq.s32.totalorder %s27, 1
      %p71 = por %p69, %p70
      %p72 = scmp.ne.s32.totalorder %s61, %s62
      %p73 = scmp.eq.s32.totalorder %s27, 0
      %p74 = por %p72, %p73
      %p75 = scmp.ne.s32.totalorder %s61, %s62
      %p76 = scmp.eq.s32.totalorder %s28, 1
      %p77 = por %p75, %p76
      %p79 = scmp.ne.s32.totalorder %s62, %s78
      %p80 = scmp.eq.s32.totalorder %s28, 0
      %p81 = por %p79, %p80
      %s83 = sadd.s32 %s82, 1
      %p86 = scmp.eq.s32.totalorder %s22, 1
      %p87 = scmp.ne.s32.totalorder %s82, %s84
      %p88 = scmp.eq.s32.totalorder %s22, 0
      %p89 = por %p87, %p88
      %p90 = scmp.ne.s32.totalorder %s82, %s84
      %p91 = scmp.eq.s32.totalorder %s27, 1
      %p92 = por %p90, %p91
      %p93 = scmp.ne.s32.totalorder %s84, %s85
      %p94 = scmp.eq.s32.totalorder %s27, 0
      %p95 = por %p93, %p94
      %p96 = scmp.ne.s32.totalorder %s84, %s85
      %p97 = scmp.eq.s32.totalorder %s28, 1
      %p98 = por %p96, %p97
      %p100 = scmp.ne.s32.totalorder %s85, %s99
      %p101 = scmp.eq.s32.totalorder %s28, 0
      %p102 = por %p100, %p101
      %s104 = sadd.s32 %s103, 1
      %p107 = scmp.eq.s32.totalorder %s22, 1
      %p108 = scmp.ne.s32.totalorder %s103, %s105
      %p109 = scmp.eq.s32.totalorder %s22, 0
      %p110 = por %p108, %p109
      %p111 = scmp.ne.s32.totalorder %s103, %s105
      %p112 = scmp.eq.s32.totalorder %s27, 1
      %p113 = por %p111, %p112
      %p114 = scmp.ne.s32.totalorder %s105, %s106
      %p115 = scmp.eq.s32.totalorder %s27, 0
      %p116 = por %p114, %p115
      %p117 = scmp.ne.s32.totalorder %s105, %s106
      %p118 = scmp.eq.s32.totalorder %s28, 1
      %p119 = por %p117, %p118
      %p121 = scmp.ne.s32.totalorder %s106, %s120
      %p122 = scmp.eq.s32.totalorder %s28, 0
      %p123 = por %p121, %p122
      %s125 = sadd.s32 %s124, 1
      %p128 = scmp.eq.s32.totalorder %s22, 1
      %p129 = scmp.ne.s32.totalorder %s124, %s126
      %p130 = scmp.eq.s32.totalorder %s22, 0
      %p131 = por %p129, %p130
      %p132 = scmp.ne.s32.totalorder %s124, %s126
      %p133 = scmp.eq.s32.totalorder %s27, 1
      %p134 = por %p132, %p133
      %p135 = scmp.ne.s32.totalorder %s126, %s127
      %p136 = scmp.eq.s32.totalorder %s27, 0
      %p137 = por %p135, %p136
      %p138 = scmp.ne.s32.totalorder %s126, %s127
      %p139 = scmp.eq.s32.totalorder %s28, 1
      %p140 = por %p138, %p139
      %p142 = scmp.ne.s32.totalorder %s127, %s141
      %p143 = scmp.eq.s32.totalorder %s28, 0
      %p144 = por %p142, %p143
      %s146 = sadd.s32 %s145, 1
      %p149 = scmp.eq.s32.totalorder %s22, 1
      %p150 = scmp.ne.s32.totalorder %s145, %s147
      %p151 = scmp.eq.s32.totalorder %s22, 0
      %p152 = por %p150, %p151
      %p153 = scmp.ne.s32.totalorder %s145, %s147
      %p154 = scmp.eq.s32.totalorder %s27, 1
      %p155 = por %p153, %p154
      %p156 = scmp.ne.s32.totalorder %s147, %s148
      %p157 = scmp.eq.s32.totalorder %s27, 0
      %p158 = por %p156, %p157
      %p159 = scmp.ne.s32.totalorder %s147, %s148
      %p160 = scmp.eq.s32.totalorder %s28, 1
      %p161 = por %p159, %p160
      %p163 = scmp.ne.s32.totalorder %s148, %s162
      %p164 = scmp.eq.s32.totalorder %s28, 0
      %p165 = por %p163, %p164
      %s167 = sadd.s32 %s166, 1
      %p170 = scmp.eq.s32.totalorder %s22, 1
      %p171 = scmp.ne.s32.totalorder %s166, %s168
      %p172 = scmp.eq.s32.totalorder %s22, 0
      %p173 = por %p171, %p172
      %p174 = scmp.ne.s32.totalorder %s166, %s168
      %p175 = scmp.eq.s32.totalorder %s27, 1
      %p176 = por %p174, %p175
      %p177 = scmp.ne.s32.totalorder %s168, %s169
      %p178 = scmp.eq.s32.totalorder %s27, 0
      %p179 = por %p177, %p178
      %p180 = scmp.ne.s32.totalorder %s168, %s169
      %p181 = scmp.eq.s32.totalorder %s28, 1
      %p182 = por %p180, %p181
      %p184 = scmp.ne.s32.totalorder %s169, %s183
      %p185 = scmp.eq.s32.totalorder %s28, 0
      %p186 = por %p184, %p185
      %s188 = sadd.s32 %s187, 1
      %p191 = scmp.eq.s32.totalorder %s22, 1
      %p192 = scmp.ne.s32.totalorder %s187, %s189
      %p193 = scmp.eq.s32.totalorder %s22, 0
      %p194 = por %p192, %p193
      %p195 = scmp.ne.s32.totalorder %s187, %s189
      %p196 = scmp.eq.s32.totalorder %s27, 1
      %p197 = por %p195, %p196
      %p198 = scmp.ne.s32.totalorder %s189, %s190
      %p199 = scmp.eq.s32.totalorder %s27, 0
      %p200 = por %p198, %p199
      %p201 = scmp.ne.s32.totalorder %s189, %s190
      %p202 = scmp.eq.s32.totalorder %s28, 1
      %p203 = por %p201, %p202
      %p205 = scmp.ne.s32.totalorder %s190, %s204
      %p206 = scmp.eq.s32.totalorder %s28, 0
      %p207 = por %p205, %p206
      %s209 = sadd.s32 %s208, 1
      %p212 = scmp.eq.s32.totalorder %s22, 1
      %p213 = scmp.ne.s32.totalorder %s208, %s210
      %p214 = scmp.eq.s32.totalorder %s22, 0
      %p215 = por %p213, %p214
      %p216 = scmp.ne.s32.totalorder %s208, %s210
      %p217 = scmp.eq.s32.totalorder %s27, 1
      %p218 = por %p216, %p217
      %p219 = scmp.ne.s32.totalorder %s210, %s211
      %p220 = scmp.eq.s32.totalorder %s27, 0
      %p221 = por %p219, %p220
      %p222 = scmp.ne.s32.totalorder %s210, %s211
      %p223 = scmp.eq.s32.totalorder %s28, 1
      %p224 = por %p222, %p223
      %p226 = scmp.ne.s32.totalorder %s211, %s225
      %p227 = scmp.eq.s32.totalorder %s28, 0
      %p228 = por %p226, %p227
      %s230 = sadd.s32 %s229, 1
      %p233 = scmp.eq.s32.totalorder %s22, 1
      %p234 = scmp.ne.s32.totalorder %s229, %s231
      %p235 = scmp.eq.s32.totalorder %s22, 0
      %p236 = por %p234, %p235
      %p237 = scmp.ne.s32.totalorder %s229, %s231
      %p238 = scmp.eq.s32.totalorder %s27, 1
      %p239 = por %p237, %p238
      %p240 = scmp.ne.s32.totalorder %s231, %s232
      %p241 = scmp.eq.s32.totalorder %s27, 0
      %p242 = por %p240, %p241
      %p243 = scmp.ne.s32.totalorder %s231, %s232
      %p244 = scmp.eq.s32.totalorder %s28, 1
      %p245 = por %p243, %p244
      %p247 = scmp.ne.s32.totalorder %s232, %s246
      %p248 = scmp.eq.s32.totalorder %s28, 0
      %p249 = por %p247, %p248
      %s250 = ssub.s32 %s22, %s29
      %p251 = scmp.eq.s32.totalorder %s250, 0
      %s253 = sadd.s32 %s252, 1
      %s254 = scalar_select %p251, %s252, %s253
      %p257 = pneg %p251
      %p258 = scmp.eq.s32.totalorder %s22, 1
      %p259 = por %p257, %p258
      %p260 = scmp.ne.s32.totalorder %s252, %s255
      %p261 = scmp.eq.s32.totalorder %s22, 0
      %p262 = por %p260, %p261
      %p263 = scmp.ne.s32.totalorder %s252, %s255
      %p264 = scmp.eq.s32.totalorder %s27, 1
      %p265 = por %p263, %p264
      %p266 = scmp.ne.s32.totalorder %s255, %s256
      %p267 = scmp.eq.s32.totalorder %s27, 0
      %p268 = por %p266, %p267
      %p269 = scmp.ne.s32.totalorder %s255, %s256
      %p270 = scmp.eq.s32.totalorder %s28, 1
      %p271 = por %p269, %p270
      %p273 = scmp.ne.s32.totalorder %s256, %s272
      %p274 = scmp.eq.s32.totalorder %s28, 0
      %p275 = por %p273, %p274
      %p276 = scmp.le.s32.totalorder 1, %s22
      %p277 = scmp.lt.s32.totalorder %s22, 3
      %p278 = pnand %p276, %p277
      %p279 = pneg %p278
      // Predicated region
      $region9: #{tpu_custom_call.1} parent=5 // pred_check
        _
      $region10: #{tpu_custom_call.1} parent=5 // pred_check_branch
        %281 = sbr.rel (%p278) target = $region12
      $region11: #{tpu_custom_call.1} parent=5 // pred_region
        %s282 = ssub.s32 %s22, 1
        // Predicated region
        $region13: #{tpu_custom_call.1} parent=11 // pred_check
          %p283 = pneg %p95
        $region14: #{tpu_custom_call.1} parent=11 // pred_check_branch
          %285 = sbr.rel (%p283) target = $region16
        $region15: #{tpu_custom_call.1} parent=11 // pred_region
          %s287 = ssub.s32 256, 256
          %288 = vsyncadd [#allocation3], %s287
          %s289 = sshll.u32 [#allocation2], 4
          %s290 = int_to_ptr.vmem [resolvable:$true] %s289
          %295 = dma.hbm_to_vmem [thread:$0]  %s2, 256, %s290, [#allocation3], 128, 128, 8
        $region16: #{tpu_custom_call.1} parent=11 // pred_fallthru
          _
        // Predicated region
        $region17: #{tpu_custom_call.1} parent=11 // pred_check
          %p296 = pneg %p116
        $region18: #{tpu_custom_call.1} parent=11 // pred_check_branch
          %298 = sbr.rel (%p296) target = $region20
        $region19: #{tpu_custom_call.1} parent=11 // pred_region
          %s300 = ssub.s32 512, 512
          %301 = vsyncadd [#allocation6], %s300
          %s302 = sshll.u32 [#allocation5], 4
          %s303 = int_to_ptr.vmem [resolvable:$true] %s302
          %308 = dma.hbm_to_vmem [thread:$0]  %s3, 512, %s303, [#allocation6], 128, 128, 8
        $region20: #{tpu_custom_call.1} parent=11 // pred_fallthru
          _
        // Predicated region
        $region21: #{tpu_custom_call.1} parent=11 // pred_check
          %p309 = pneg %p137
        $region22: #{tpu_custom_call.1} parent=11 // pred_check_branch
          %311 = sbr.rel (%p309) target = $region24
        $region23: #{tpu_custom_call.1} parent=11 // pred_region
          %s313 = ssub.s32 128, 128
          %314 = vsyncadd [#allocation6], %s313
          %s316 = sshll.u32 [#allocation7], 4
          %s317 = int_to_ptr.vmem [resolvable:$true] %s316
          %319 = dma.hbm_to_vmem [thread:$0]  %s4, 128, %s317, [#allocation6]
        $region24: #{tpu_custom_call.1} parent=11 // pred_fallthru
          _
        // Predicated region
        $region25: #{tpu_custom_call.1} parent=11 // pred_check
          %p320 = pneg %p158
        $region26: #{tpu_custom_call.1} parent=11 // pred_check_branch
          %322 = sbr.rel (%p320) target = $region28
        $region27: #{tpu_custom_call.1} parent=11 // pred_region
          _
        $region28: #{tpu_custom_call.1} parent=11 // pred_fallthru
          _
        // Predicated region
        $region29: #{tpu_custom_call.1} parent=11 // pred_check
          %p323 = pneg %p179
        $region30: #{tpu_custom_call.1} parent=11 // pred_check_branch
          %325 = sbr.rel (%p323) target = $region32
        $region31: #{tpu_custom_call.1} parent=11 // pred_region
          %s327 = ssub.s32 512, 512
          %328 = vsyncadd [#allocation9], %s327
          %s329 = sshll.u32 [#allocation8], 4
          %s330 = int_to_ptr.vmem [resolvable:$true] %s329
          %335 = dma.hbm_to_vmem [thread:$0]  %s6, 512, %s330, [#allocation9], 128, 128, 8
        $region32: #{tpu_custom_call.1} parent=11 // pred_fallthru
          _
        // Predicated region
        $region33: #{tpu_custom_call.1} parent=11 // pred_check
          %p336 = pneg %p200
        $region34: #{tpu_custom_call.1} parent=11 // pred_check_branch
          %338 = sbr.rel (%p336) target = $region36
        $region35: #{tpu_custom_call.1} parent=11 // pred_region
          _
        $region36: #{tpu_custom_call.1} parent=11 // pred_fallthru
          _
        // Predicated region
        $region37: #{tpu_custom_call.1} parent=11 // pred_check
          %p339 = pneg %p221
        $region38: #{tpu_custom_call.1} parent=11 // pred_check_branch
          %341 = sbr.rel (%p339) target = $region40
        $region39: #{tpu_custom_call.1} parent=11 // pred_region
          _
        $region40: #{tpu_custom_call.1} parent=11 // pred_fallthru
          _
        // Predicated region
        $region41: #{tpu_custom_call.1} parent=11 // pred_check
          %p342 = pneg %p242
        $region42: #{tpu_custom_call.1} parent=11 // pred_check_branch
          %344 = sbr.rel (%p342) target = $region44
        $region43: #{tpu_custom_call.1} parent=11 // pred_region
          %s346 = ssub.s32 256, 256
          %347 = vsyncadd [#allocation9], %s346
          %s348 = sshll.u32 [#allocation10], 4
          %s349 = int_to_ptr.vmem [resolvable:$true] %s348
          %354 = dma.hbm_to_vmem [thread:$0]  %s9, 256, %s349, [#allocation9], 128, 128, 8
        $region44: #{tpu_custom_call.1} parent=11 // pred_fallthru
          _
      $region12: #{tpu_custom_call.1} parent=5 // pred_fallthru
        _
      %p355 = scmp.lt.s32.totalorder %s22, 2
      // Predicated region
      $region45: #{tpu_custom_call.1} parent=5 // pred_check
        %p356 = pneg %p355
      $region46: #{tpu_custom_call.1} parent=5 // pred_check_branch
        %358 = sbr.rel (%p356) target = $region48
      $region47: #{tpu_custom_call.1} parent=5 // pred_region
        // Predicated region
        $region49: #{tpu_custom_call.1} parent=47 // pred_check
          %p359 = pneg %p42
        $region50: #{tpu_custom_call.1} parent=47 // pred_check_branch
          %361 = sbr.rel (%p359) target = $region52
        $region51: #{tpu_custom_call.1} parent=47 // pred_region
          %s362 = smul.u32 8, %s22
          %p363 = scmp.lt.s32.totalorder %s362, 15
          %s364 = scalar_select %p363, %s362, 15
          %s365 = smul.addr %s364, 8
          %s366 = scalar_lea.vmem %s0, %s365
          %s367 = smul.u32 8, %s22
        $region52: #{tpu_custom_call.1} parent=47 // pred_fallthru
          _
        // Predicated region
        $region53: #{tpu_custom_call.1} parent=47 // pred_check
          %p368 = pneg %p68
        $region54: #{tpu_custom_call.1} parent=47 // pred_check_branch
          %370 = sbr.rel (%p368) target = $region56
        $region55: #{tpu_custom_call.1} parent=47 // pred_region
          %p371 = scmp.lt.s32.totalorder %s22, 1
          %s372 = scalar_select %p371, %s22, 1
          %s373 = smul.addr %s372, 8
          %s374 = scalar_lea.vmem %s1, %s373
        $region56: #{tpu_custom_call.1} parent=47 // pred_fallthru
          _
      $region48: #{tpu_custom_call.1} parent=5 // pred_fallthru
        _
      %p375 = scmp.le.s32.totalorder 1, %s22
      %p376 = scmp.lt.s32.totalorder %s22, 3
      %p377 = pnand %p375, %p376
      %p378 = pneg %p377
      // Predicated region
      $region57: #{tpu_custom_call.1} parent=5 // pred_check
        _
      $region58: #{tpu_custom_call.1} parent=5 // pred_check_branch
        %380 = sbr.rel (%p377) target = $region60
      $region59: #{tpu_custom_call.1} parent=5 // pred_region
        %s381 = ssub.s32 %s22, 1
        // Predicated region
        $region61: #{tpu_custom_call.1} parent=59 // pred_check
          %p382 = pneg %p95
        $region62: #{tpu_custom_call.1} parent=59 // pred_check_branch
          %384 = sbr.rel (%p382) target = $region64
        $region63: #{tpu_custom_call.1} parent=59 // pred_region
          %385 = dma.done [#allocation3], 256
        $region64: #{tpu_custom_call.1} parent=59 // pred_fallthru
          _
        // Predicated region
        $region65: #{tpu_custom_call.1} parent=59 // pred_check
          %p386 = pneg %p116
        $region66: #{tpu_custom_call.1} parent=59 // pred_check_branch
          %388 = sbr.rel (%p386) target = $region68
        $region67: #{tpu_custom_call.1} parent=59 // pred_region
          %389 = dma.done [#allocation6], 512
        $region68: #{tpu_custom_call.1} parent=59 // pred_fallthru
          _
        // Predicated region
        $region69: #{tpu_custom_call.1} parent=59 // pred_check
          %p390 = pneg %p137
        $region70: #{tpu_custom_call.1} parent=59 // pred_check_branch
          %392 = sbr.rel (%p390) target = $region72
        $region71: #{tpu_custom_call.1} parent=59 // pred_region
          %393 = dma.done [#allocation6], 128
        $region72: #{tpu_custom_call.1} parent=59 // pred_fallthru
          _
        // Predicated region
        $region73: #{tpu_custom_call.1} parent=59 // pred_check
          %p394 = pneg %p179
        $region74: #{tpu_custom_call.1} parent=59 // pred_check_branch
          %396 = sbr.rel (%p394) target = $region76
        $region75: #{tpu_custom_call.1} parent=59 // pred_region
          %397 = dma.done [#allocation9], 512
        $region76: #{tpu_custom_call.1} parent=59 // pred_fallthru
          _
        // Predicated region
        $region77: #{tpu_custom_call.1} parent=59 // pred_check
          %p398 = pneg %p242
        $region78: #{tpu_custom_call.1} parent=59 // pred_check_branch
          %400 = sbr.rel (%p398) target = $region80
        $region79: #{tpu_custom_call.1} parent=59 // pred_region
          %401 = dma.done [#allocation9], 256
        $region80: #{tpu_custom_call.1} parent=59 // pred_fallthru
          _
        %s402 = smul.u32 8, %s27
        %p403 = scmp.lt.s32.totalorder %s402, 15
        %s404 = scalar_select %p403, %s402, 15
        %s405 = smul.addr %s404, 8
        %s406 = scalar_lea.vmem %s0, %s405
        %p407 = pneg %p48
        %p408 = pneg %p45
        %p409 = scmp.lt.s32.totalorder %s27, 1
        %s410 = scalar_select %p409, %s27, 1
        %s411 = smul.addr %s410, 8
        %s412 = scalar_lea.vmem %s1, %s411
        %p413 = pneg %p74
        %p414 = pneg %p71
        %p415 = pneg %p95
        %p416 = pneg %p92
        %p417 = pneg %p116
        %p418 = pneg %p113
        %p419 = pneg %p137
        %p420 = pneg %p134
        %p421 = pneg %p158
        %p422 = pneg %p155
        %p423 = pneg %p179
        %p424 = pneg %p176
        %p425 = pneg %p200
        %p426 = pneg %p197
        %p427 = pneg %p221
        %p428 = pneg %p218
        %p429 = pneg %p242
        %p430 = pneg %p239
        %p431 = pneg %p268
        %p432 = pneg %p265
        %s433 = sand.u32 %s255, 1
        %s434 = scalar_lea.sflag [#allocation4], %s433
        %s435 = sand.u32 %s255, 1
        %s436 = smul.addr %s435, 8
        %s437 = scalar_lea.vmem [#allocation11], %s436
        %s438 = smul.u32 8, %s27
        %p439 = scmp.lt.s32.totalorder %s438, 15
        %s440 = scalar_select %p439, %s438, 15
        %s441 = smul.addr %s440, 8
        %s442 = scalar_lea.vmem %s0, %s441
        %s443 = smul.u32 8, %s27
        %p444 = scmp.lt.s32.totalorder %s27, 1
        %s445 = scalar_select %p444, %s27, 1
        %s446 = smul.addr %s445, 8
        %s447 = scalar_lea.vmem %s1, %s446
        %v448 = vld [vmem:[%s442] sm:$0xff]
        %v449 = vld [vmem:[%s442 + $0x8] sm:$0xff]
        %v450 = vld [vmem:[%s442 + $0x10] sm:$0xff]
        %v451 = vld [vmem:[%s442 + $0x18] sm:$0xff]
        %v452 = vld [vmem:[%s442 + $0x20] sm:$0xff]
        %v453 = vld [vmem:[%s442 + $0x28] sm:$0xff]
        %v454 = vld [vmem:[%s442 + $0x30] sm:$0xff]
        %v455 = vld [vmem:[%s442 + $0x38] sm:$0xff]
        %v456 = vld [vmem:[#allocation5] sm:$0xff]
        %v457 = vld [vmem:[#allocation5 + $0x8] sm:$0xff]
        %v458 = vld [vmem:[#allocation5 + $0x10] sm:$0xff]
        %v459 = vld [vmem:[#allocation5 + $0x18] sm:$0xff]
        %v460 = vld [vmem:[#allocation2] sm:$0x1]
        %v461 = vlaneseq
        %v462 = vshrl.u32 %v461, 7
        %v463 = vsub.s32 0, %v462
        %v464 = vrot.slane %v460, %v463
        %vm465 = vcmask 261120
        %v467 = vsel %vm465, %v448, 0
        %v470 = vsel %vm465, %v449, 0
        %v473 = vsel %vm465, %v450, 0
        %v476 = vsel %vm465, %v451, 0
        %v479 = vsel %vm465, %v452, 0
        %v482 = vsel %vm465, %v453, 0
        %v485 = vsel %vm465, %v454, 0
        %v488 = vsel %vm465, %v455, 0
        %490 = vmatprep.subr.mxu0 0.0
        %491 = vmatpush1.msra.mxu0 %v456
        %492 = vmatprep.subr.mxu0 0.0
        %493 = vmatpush1.msra.mxu0 %v457
        %494 = vmatprep.subr.mxu0 0.0
        %495 = vmatpush1.msra.mxu0 %v458
        %496 = vmatprep.subr.mxu0 0.0
        %497 = vmatpush1.msra.mxu0 %v459
        %498 = vmatprep.subr.mxu0 0.0
        %499 = vmatpush1.msra.mxu0 0.0
        %500 = vmatprep.subr.mxu0 0.0
        %501 = vmatpush1.msra.mxu0 0.0
        %502 = vmatprep.subr.mxu0 0.0
        %503 = vmatpush1.msra.mxu0 0.0
        %504 = vmatprep.subr.mxu0 0.0
        %505 = vmatpush1.msra.mxu0 0.0
        %506 = vmatprep.subr.mxu0 0.0
        %507 = vmatpush1.msra.mxu0 0.0
        %508 = vmatprep.subr.mxu0 0.0
        %509 = vmatpush1.msra.mxu0 0.0
        %510 = vmatprep.subr.mxu0 0.0
        %511 = vmatpush1.msra.mxu0 0.0
        %512 = vmatprep.subr.mxu0 0.0
        %513 = vmatpush1.msra.mxu0 0.0
        %514 = vmatprep.subr.mxu0 0.0
        %515 = vmatpush1.msra.mxu0 0.0
        %516 = vmatprep.subr.mxu0 0.0
        %517 = vmatpush1.msra.mxu0 0.0
        %518 = vmatprep.subr.mxu0 0.0
        %519 = vmatpush1.msra.mxu0 0.0
        %520 = vmatprep.subr.mxu0 0.0
        %521 = vmatpush1.msra.mxu0 0.0
        %522 = vmatprep.subr.mxu0 0.0
        %523 = vmatpush1.msra.mxu0 0.0
        %524 = vmatprep.subr.mxu0 0.0
        %525 = vmatpush1.msra.mxu0 0.0
        %526 = vmatprep.subr.mxu0 0.0
        %527 = vmatpush1.msra.mxu0 0.0
        %528 = vmatprep.subr.mxu0 0.0
        %529 = vmatpush1.msra.mxu0 0.0
        %530 = vmatprep.subr.mxu0 0.0
        %531 = vmatpush1.msra.mxu0 0.0
        %532 = vmatprep.subr.mxu0 0.0
        %533 = vmatpush1.msra.mxu0 0.0
        %534 = vmatprep.subr.mxu0 0.0
        %535 = vmatpush1.msra.mxu0 0.0
        %536 = vmatprep.subr.mxu0 0.0
        %537 = vmatpush1.msra.mxu0 0.0
        %538 = vmatprep.subr.mxu0 0.0
        %539 = vmatpush1.msra.mxu0 0.0
        %540 = vmatprep.subr.mxu0 0.0
        %541 = vmatpush1.msra.mxu0 0.0
        %542 = vmatprep.subr.mxu0 0.0
        %543 = vmatpush1.msra.mxu0 0.0
        %544 = vmatprep.subr.mxu0 0.0
        %545 = vmatpush1.msra.mxu0 0.0
        %546 = vmatprep.subr.mxu0 0.0
        %547 = vmatpush1.msra.mxu0 0.0
        %548 = vmatprep.subr.mxu0 0.0
        %549 = vmatpush1.msra.mxu0 0.0
        %550 = vmatprep.subr.mxu0 0.0
        %551 = vmatpush1.msra.mxu0 0.0
        %552 = vmatprep.subr.mxu0 0.0
        %553 = vmatpush1.msra.mxu0 0.0
        %554 = vmatprep.mubr.f32.mxu0 0.0
        %555 = vmatmul.mubr.f32.gmra.mrb[0].mxu0 %v467
        %v556 = vpop.f32.mrb[0].mxu0
        %v557 = vadd.f32 %v464, %v556
        %v558 = vpop.f32.mrb[0].mxu0
        %559 = vmatprep.mubr.f32.mxu0 0.0
        %560 = vmatmul.mubr.f32.gmra.mrb[0].mxu0 %v470
        %v561 = vpop.f32.mrb[0].mxu0
        %v562 = vadd.f32 %v464, %v561
        %v563 = vpop.f32.mrb[0].mxu0
        %564 = vmatprep.mubr.f32.mxu0 0.0
        %565 = vmatmul.mubr.f32.gmra.mrb[0].mxu0 %v473
        %v566 = vpop.f32.mrb[0].mxu0
        %v567 = vadd.f32 %v464, %v566
        %v568 = vpop.f32.mrb[0].mxu0
        %569 = vmatprep.mubr.f32.mxu0 0.0
        %570 = vmatmul.mubr.f32.gmra.mrb[0].mxu0 %v476
        %v571 = vpop.f32.mrb[0].mxu0
        %v572 = vadd.f32 %v464, %v571
        %v573 = vpop.f32.mrb[0].mxu0
        %574 = vmatprep.mubr.f32.mxu0 0.0
        %575 = vmatmul.mubr.f32.gmra.mrb[0].mxu0 %v479
        %v576 = vpop.f32.mrb[0].mxu0
        %v577 = vadd.f32 %v464, %v576
        %v578 = vpop.f32.mrb[0].mxu0
        %579 = vmatprep.mubr.f32.mxu0 0.0
        %580 = vmatmul.mubr.f32.gmra.mrb[0].mxu0 %v482
        %v581 = vpop.f32.mrb[0].mxu0
        %v582 = vadd.f32 %v464, %v581
        %v583 = vpop.f32.mrb[0].mxu0
        %584 = vmatprep.mubr.f32.mxu0 0.0
        %585 = vmatmul.mubr.f32.gmra.mrb[0].mxu0 %v485
        %v586 = vpop.f32.mrb[0].mxu0
        %v587 = vadd.f32 %v464, %v586
        %v588 = vpop.f32.mrb[0].mxu0
        %589 = vmatprep.mubr.f32.mxu0 0.0
        %590 = vmatmul.mubr.f32.gmra.mrb[0].mxu0 %v488
        %v591 = vpop.f32.mrb[0].mxu0
        %v592 = vadd.f32 %v464, %v591
        %v593 = vpop.f32.mrb[0].mxu0
        %594 = vdwg.mxu0
        %v595 = vtanh.pop %v557
        %v596 = vtanh.pop %v562
        %v597 = vtanh.pop %v567
        %v598 = vtanh.pop %v572
        %v599 = vtanh.pop %v577
        %v600 = vtanh.pop %v582
        %v601 = vtanh.pop %v587
        %v602 = vtanh.pop %v592
        %v603 = vld [vmem:[#allocation2 + $0x1] sm:$0x1]
        %v604 = vlaneseq
        %v605 = vshrl.u32 %v604, 7
        %v606 = vsub.s32 0, %v605
        %v607 = vrot.slane %v603, %v606
        %v608 = vmul.f32 %v595, %v607
        %v609 = vmul.f32 %v596, %v607
        %v610 = vmul.f32 %v597, %v607
        %v611 = vmul.f32 %v598, %v607
        %v612 = vmul.f32 %v599, %v607
        %v613 = vmul.f32 %v600, %v607
        %v614 = vmul.f32 %v601, %v607
        %v615 = vmul.f32 %v602, %v607
        %v616 = vsel %vm465, %v608, 0.0
        %617 = vadd.xlane.f32.xlu0 %v616
        %v618 = vpop.xlane.xlu0 %617
        %v619 = vsel %vm465, %v609, 0.0
        %620 = vadd.xlane.f32.xlu0 %v619
        %v621 = vpop.xlane.xlu0 %620
        %v622 = vsel %vm465, %v610, 0.0
        %623 = vadd.xlane.f32.xlu0 %v622
        %v624 = vpop.xlane.xlu0 %623
        %v625 = vsel %vm465, %v611, 0.0
        %626 = vadd.xlane.f32.xlu0 %v625
        %v627 = vpop.xlane.xlu0 %626
        %v628 = vsel %vm465, %v612, 0.0
        %629 = vadd.xlane.f32.xlu0 %v628
        %v630 = vpop.xlane.xlu0 %629
        %v631 = vsel %vm465, %v613, 0.0
        %632 = vadd.xlane.f32.xlu0 %v631
        %v633 = vpop.xlane.xlu0 %632
        %v634 = vsel %vm465, %v614, 0.0
        %635 = vadd.xlane.f32.xlu0 %v634
        %v636 = vpop.xlane.xlu0 %635
        %v637 = vsel %vm465, %v615, 0.0
        %638 = vadd.xlane.f32.xlu0 %v637
        %v639 = vpop.xlane.xlu0 %638
        %v640 = vrot.slane %v618, 4
        %v641 = vmax.f32 %v618, %v640
        %v642 = vrot.slane %v641, 2
        %v643 = vmax.f32 %v641, %v642
        %v644 = vrot.slane %v643, 1
        %v645 = vmax.f32 %v643, %v644
        %v646 = vrot.slane %v621, 4
        %v647 = vmax.f32 %v621, %v646
        %v648 = vrot.slane %v647, 2
        %v649 = vmax.f32 %v647, %v648
        %v650 = vrot.slane %v649, 1
        %v651 = vmax.f32 %v649, %v650
        %v652 = vrot.slane %v624, 4
        %v653 = vmax.f32 %v624, %v652
        %v654 = vrot.slane %v653, 2
        %v655 = vmax.f32 %v653, %v654
        %v656 = vrot.slane %v655, 1
        %v657 = vmax.f32 %v655, %v656
        %v658 = vrot.slane %v627, 4
        %v659 = vmax.f32 %v627, %v658
        %v660 = vrot.slane %v659, 2
        %v661 = vmax.f32 %v659, %v660
        %v662 = vrot.slane %v661, 1
        %v663 = vmax.f32 %v661, %v662
        %v664 = vrot.slane %v630, 4
        %v665 = vmax.f32 %v630, %v664
        %v666 = vrot.slane %v665, 2
        %v667 = vmax.f32 %v665, %v666
        %v668 = vrot.slane %v667, 1
        %v669 = vmax.f32 %v667, %v668
        %v670 = vrot.slane %v633, 4
        %v671 = vmax.f32 %v633, %v670
        %v672 = vrot.slane %v671, 2
        %v673 = vmax.f32 %v671, %v672
        %v674 = vrot.slane %v673, 1
        %v675 = vmax.f32 %v673, %v674
        %v676 = vrot.slane %v636, 4
        %v677 = vmax.f32 %v636, %v676
        %v678 = vrot.slane %v677, 2
        %v679 = vmax.f32 %v677, %v678
        %v680 = vrot.slane %v679, 1
        %v681 = vmax.f32 %v679, %v680
        %v682 = vrot.slane %v639, 4
        %v683 = vmax.f32 %v639, %v682
        %v684 = vrot.slane %v683, 2
        %v685 = vmax.f32 %v683, %v684
        %v686 = vrot.slane %v685, 1
        %v687 = vmax.f32 %v685, %v686
        %v688 = vsub.f32 %v618, %v645
        %v689 = vsub.f32 %v621, %v651
        %v690 = vsub.f32 %v624, %v657
        %v691 = vsub.f32 %v627, %v663
        %v692 = vsub.f32 %v630, %v669
        %v693 = vsub.f32 %v633, %v675
        %v694 = vsub.f32 %v636, %v681
        %v695 = vsub.f32 %v639, %v687
        %v696 = vmul.f32 %v688, 1.442695
        %v697 = vpow.pop %v696
        %v698 = vmul.f32 %v689, 1.442695
        %v699 = vpow.pop %v698
        %v700 = vmul.f32 %v690, 1.442695
        %v701 = vpow.pop %v700
        %v702 = vmul.f32 %v691, 1.442695
        %v703 = vpow.pop %v702
        %v704 = vmul.f32 %v692, 1.442695
        %v705 = vpow.pop %v704
        %v706 = vmul.f32 %v693, 1.442695
        %v707 = vpow.pop %v706
        %v708 = vmul.f32 %v694, 1.442695
        %v709 = vpow.pop %v708
        %v710 = vmul.f32 %v695, 1.442695
        %v711 = vpow.pop %v710
        %v712 = vrot.slane %v697, 4
        %v713 = vadd.f32 %v697, %v712
        %v714 = vrot.slane %v713, 2
        %v715 = vadd.f32 %v713, %v714
        %v716 = vrot.slane %v715, 1
        %v717 = vadd.f32 %v715, %v716
        %v718 = vrot.slane %v699, 4
        %v719 = vadd.f32 %v699, %v718
        %v720 = vrot.slane %v719, 2
        %v721 = vadd.f32 %v719, %v720
        %v722 = vrot.slane %v721, 1
        %v723 = vadd.f32 %v721, %v722
        %v724 = vrot.slane %v701, 4
        %v725 = vadd.f32 %v701, %v724
        %v726 = vrot.slane %v725, 2
        %v727 = vadd.f32 %v725, %v726
        %v728 = vrot.slane %v727, 1
        %v729 = vadd.f32 %v727, %v728
        %v730 = vrot.slane %v703, 4
        %v731 = vadd.f32 %v703, %v730
        %v732 = vrot.slane %v731, 2
        %v733 = vadd.f32 %v731, %v732
        %v734 = vrot.slane %v733, 1
        %v735 = vadd.f32 %v733, %v734
        %v736 = vrot.slane %v705, 4
        %v737 = vadd.f32 %v705, %v736
        %v738 = vrot.slane %v737, 2
        %v739 = vadd.f32 %v737, %v738
        %v740 = vrot.slane %v739, 1
        %v741 = vadd.f32 %v739, %v740
        %v742 = vrot.slane %v707, 4
        %v743 = vadd.f32 %v707, %v742
        %v744 = vrot.slane %v743, 2
        %v745 = vadd.f32 %v743, %v744
        %v746 = vrot.slane %v745, 1
        %v747 = vadd.f32 %v745, %v746
        %v748 = vrot.slane %v709, 4
        %v749 = vadd.f32 %v709, %v748
        %v750 = vrot.slane %v749, 2
        %v751 = vadd.f32 %v749, %v750
        %v752 = vrot.slane %v751, 1
        %v753 = vadd.f32 %v751, %v752
        %v754 = vrot.slane %v711, 4
        %v755 = vadd.f32 %v711, %v754
        %v756 = vrot.slane %v755, 2
        %v757 = vadd.f32 %v755, %v756
        %v758 = vrot.slane %v757, 1
        %v759 = vadd.f32 %v757, %v758
        %v760 = vrcp.pop %v717
        %v761 = vrcp.pop %v723
        %v762 = vrcp.pop %v729
        %v763 = vrcp.pop %v735
        %v764 = vrcp.pop %v741
        %v765 = vrcp.pop %v747
        %v766 = vrcp.pop %v753
        %v767 = vrcp.pop %v759
        %v768 = vmul.f32 %v697, %v760
        %v769 = vmul.f32 %v699, %v761
        %v770 = vmul.f32 %v701, %v762
        %v771 = vmul.f32 %v703, %v763
        %v772 = vmul.f32 %v705, %v764
        %v773 = vmul.f32 %v707, %v765
        %v774 = vmul.f32 %v709, %v766
        %v775 = vmul.f32 %v711, %v767
        %v776 = vmul.f32 %v768, %v448
        %v777 = vmul.f32 %v769, %v449
        %v778 = vmul.f32 %v770, %v450
        %v779 = vmul.f32 %v771, %v451
        %v780 = vmul.f32 %v772, %v452
        %v781 = vmul.f32 %v773, %v453
        %v782 = vmul.f32 %v774, %v454
        %v783 = vmul.f32 %v775, %v455
        %v784 = vsel %vm465, %v776, 0.0
        %v785 = vrot.slane %v784, 4
        %v786 = vadd.f32 %v784, %v785
        %v787 = vrot.slane %v786, 2
        %v788 = vadd.f32 %v786, %v787
        %v789 = vrot.slane %v788, 1
        %v790 = vadd.f32 %v788, %v789
        %v791 = vsel %vm465, %v777, 0.0
        %v792 = vrot.slane %v791, 4
        %v793 = vadd.f32 %v791, %v792
        %v794 = vrot.slane %v793, 2
        %v795 = vadd.f32 %v793, %v794
        %v796 = vrot.slane %v795, 1
        %v797 = vadd.f32 %v795, %v796
        %v798 = vsel %vm465, %v778, 0.0
        %v799 = vrot.slane %v798, 4
        %v800 = vadd.f32 %v798, %v799
        %v801 = vrot.slane %v800, 2
        %v802 = vadd.f32 %v800, %v801
        %v803 = vrot.slane %v802, 1
        %v804 = vadd.f32 %v802, %v803
        %v805 = vsel %vm465, %v779, 0.0
        %v806 = vrot.slane %v805, 4
        %v807 = vadd.f32 %v805, %v806
        %v808 = vrot.slane %v807, 2
        %v809 = vadd.f32 %v807, %v808
        %v810 = vrot.slane %v809, 1
        %v811 = vadd.f32 %v809, %v810
        %v812 = vsel %vm465, %v780, 0.0
        %v813 = vrot.slane %v812, 4
        %v814 = vadd.f32 %v812, %v813
        %v815 = vrot.slane %v814, 2
        %v816 = vadd.f32 %v814, %v815
        %v817 = vrot.slane %v816, 1
        %v818 = vadd.f32 %v816, %v817
        %v819 = vsel %vm465, %v781, 0.0
        %v820 = vrot.slane %v819, 4
        %v821 = vadd.f32 %v819, %v820
        %v822 = vrot.slane %v821, 2
        %v823 = vadd.f32 %v821, %v822
        %v824 = vrot.slane %v823, 1
        %v825 = vadd.f32 %v823, %v824
        %v826 = vsel %vm465, %v782, 0.0
        %v827 = vrot.slane %v826, 4
        %v828 = vadd.f32 %v826, %v827
        %v829 = vrot.slane %v828, 2
        %v830 = vadd.f32 %v828, %v829
        %v831 = vrot.slane %v830, 1
        %v832 = vadd.f32 %v830, %v831
        %v833 = vsel %vm465, %v783, 0.0
        %v834 = vrot.slane %v833, 4
        %v835 = vadd.f32 %v833, %v834
        %v836 = vrot.slane %v835, 2
        %v837 = vadd.f32 %v835, %v836
        %v838 = vrot.slane %v837, 1
        %v839 = vadd.f32 %v837, %v838
        %v840 = vld [vmem:[%s447] sm:$0xff]
        %v841 = vld [vmem:[#allocation7] sm:$0x7f]
        %v842 = vld [vmem:[#allocation2 + $0x2] sm:$0x1]
        %v843 = vlaneseq
        %v844 = vshrl.u32 %v843, 7
        %v845 = vsub.s32 0, %v844
        %v846 = vrot.slane %v842, %v845
        %vm847 = vcmask 56320
        %v849 = vsel %vm847, %v840, 0
        %vm851 = vcmask 1046528
        %v853 = vsel %vm851, %v841, 0
        %855 = vmatprep.subr.mxu0 0.0
        %856 = vmatpush1.msra.mxu0 %v853
        %857 = vmatprep.subr.mxu0 0.0
        %858 = vmatpush1.msra.mxu0 0.0
        %859 = vmatprep.subr.mxu0 0.0
        %860 = vmatpush1.msra.mxu0 0.0
        %861 = vmatprep.subr.mxu0 0.0
        %862 = vmatpush1.msra.mxu0 0.0
        %863 = vmatprep.subr.mxu0 0.0
        %864 = vmatpush1.msra.mxu0 0.0
        %865 = vmatprep.subr.mxu0 0.0
        %866 = vmatpush1.msra.mxu0 0.0
        %867 = vmatprep.subr.mxu0 0.0
        %868 = vmatpush1.msra.mxu0 0.0
        %869 = vmatprep.subr.mxu0 0.0
        %870 = vmatpush1.msra.mxu0 0.0
        %871 = vmatprep.subr.mxu0 0.0
        %872 = vmatpush1.msra.mxu0 0.0
        %873 = vmatprep.subr.mxu0 0.0
        %874 = vmatpush1.msra.mxu0 0.0
        %875 = vmatprep.subr.mxu0 0.0
        %876 = vmatpush1.msra.mxu0 0.0
        %877 = vmatprep.subr.mxu0 0.0
        %878 = vmatpush1.msra.mxu0 0.0
        %879 = vmatprep.subr.mxu0 0.0
        %880 = vmatpush1.msra.mxu0 0.0
        %881 = vmatprep.subr.mxu0 0.0
        %882 = vmatpush1.msra.mxu0 0.0
        %883 = vmatprep.subr.mxu0 0.0
        %884 = vmatpush1.msra.mxu0 0.0
        %885 = vmatprep.subr.mxu0 0.0
        %886 = vmatpush1.msra.mxu0 0.0
        %887 = vmatprep.subr.mxu0 0.0
        %888 = vmatpush1.msra.mxu0 0.0
        %889 = vmatprep.subr.mxu0 0.0
        %890 = vmatpush1.msra.mxu0 0.0
        %891 = vmatprep.subr.mxu0 0.0
        %892 = vmatpush1.msra.mxu0 0.0
        %893 = vmatprep.subr.mxu0 0.0
        %894 = vmatpush1.msra.mxu0 0.0
        %895 = vmatprep.subr.mxu0 0.0
        %896 = vmatpush1.msra.mxu0 0.0
        %897 = vmatprep.subr.mxu0 0.0
        %898 = vmatpush1.msra.mxu0 0.0
        %899 = vmatprep.subr.mxu0 0.0
        %900 = vmatpush1.msra.mxu0 0.0
        %901 = vmatprep.subr.mxu0 0.0
        %902 = vmatpush1.msra.mxu0 0.0
        %903 = vmatprep.subr.mxu0 0.0
        %904 = vmatpush1.msra.mxu0 0.0
        %905 = vmatprep.subr.mxu0 0.0
        %906 = vmatpush1.msra.mxu0 0.0
        %907 = vmatprep.subr.mxu0 0.0
        %908 = vmatpush1.msra.mxu0 0.0
        %909 = vmatprep.subr.mxu0 0.0
        %910 = vmatpush1.msra.mxu0 0.0
        %911 = vmatprep.subr.mxu0 0.0
        %912 = vmatpush1.msra.mxu0 0.0
        %913 = vmatprep.subr.mxu0 0.0
        %914 = vmatpush1.msra.mxu0 0.0
        %915 = vmatprep.subr.mxu0 0.0
        %916 = vmatpush1.msra.mxu0 0.0
        %917 = vmatprep.subr.mxu0 0.0
        %918 = vmatpush1.msra.mxu0 0.0
        %919 = vmatprep.mubr.f32.mxu0 0.0
        %920 = vmatmul.mubr.f32.gmra.mrb[0].mxu0 %v849
        %v921 = vpop.f32.mrb[0].mxu0
        %v922 = vadd.f32 %v846, %v921
        %v923 = vpop.f32.mrb[0].mxu0
        %924 = vdwg.mxu0
        %v925 = vld [vmem:[#allocation2 + $0x3] sm:$0x1]
        %v926 = vld [vmem:[#allocation2 + $0x4] sm:$0x1]
        %vm927 = vcmask 523264
        %v928 = vsel %vm927, %v922, 0.0
        %929 = vadd.xlane.f32.xlu0 %v928
        %v930 = vpop.xlane.xlu0 %929
        %v931 = vrcp.pop 64.0
        %v932 = vmul.f32 %v930, %v931
        %v933 = vsub.f32 %v922, %v932
        %v934 = vmul.f32 %v933, %v933
        %v935 = vsel %vm927, %v934, 0.0
        %936 = vadd.xlane.f32.xlu0 %v935
        %v937 = vpop.xlane.xlu0 %936
        %v938 = vmul.f32 %v937, %v931
        %v939 = vadd.f32 %v938, 1e-05
        %v940 = vrsqrt.pop %v939
        %v941 = vmul.f32 %v933, %v940
        %v942 = vlaneseq
        %v943 = vshrl.u32 %v942, 7
        %v944 = vsub.s32 0, %v943
        %v945 = vrot.slane %v925, %v944
        %v946 = vmul.f32 %v941, %v945
        %v947 = vlaneseq
        %v948 = vshrl.u32 %v947, 7
        %v949 = vsub.s32 0, %v948
        %v950 = vrot.slane %v926, %v949
        %v951 = vadd.f32 %v946, %v950
        %v952 = vmax.f32 %v951, 0.0
        %v953 = vld [vmem:[%s5] sm:$0xff]
        %v954 = vld [vmem:[%s5 + $0x8] sm:$0xff]
        %v955 = vld [vmem:[%s5 + $0x10] sm:$0xff]
        %v956 = vld [vmem:[%s5 + $0x18] sm:$0xff]
        %v957 = vld [vmem:[%s5 + $0x20] sm:$0xff]
        %v958 = vld [vmem:[%s5 + $0x28] sm:$0xff]
        %v959 = vld [vmem:[%s5 + $0x30] sm:$0xff]
        %v960 = vld [vmem:[%s5 + $0x38] sm:$0xff]
        %v961 = vld [vmem:[#allocation2 + $0x5] sm:$0x1]
        %v962 = vlaneseq
        %v963 = vshrl.u32 %v962, 7
        %v964 = vsub.s32 0, %v963
        %v965 = vrot.slane %v961, %v964
        %v967 = vsel %vm927, %v952, 0
        %969 = vmatprep.subr.mxu0 0.0
        %970 = vmatpush1.msra.mxu0 %v953
        %971 = vmatprep.subr.mxu0 0.0
        %972 = vmatpush1.msra.mxu0 %v954
        %973 = vmatprep.subr.mxu0 0.0
        %974 = vmatpush1.msra.mxu0 %v955
        %975 = vmatprep.subr.mxu0 0.0
        %976 = vmatpush1.msra.mxu0 %v956
        %977 = vmatprep.subr.mxu0 0.0
        %978 = vmatpush1.msra.mxu0 %v957
        %979 = vmatprep.subr.mxu0 0.0
        %980 = vmatpush1.msra.mxu0 %v958
        %981 = vmatprep.subr.mxu0 0.0
        %982 = vmatpush1.msra.mxu0 %v959
        %983 = vmatprep.subr.mxu0 0.0
        %984 = vmatpush1.msra.mxu0 %v960
        %985 = vmatprep.subr.mxu0 0.0
        %986 = vmatpush1.msra.mxu0 0.0
        %987 = vmatprep.subr.mxu0 0.0
        %988 = vmatpush1.msra.mxu0 0.0
        %989 = vmatprep.subr.mxu0 0.0
        %990 = vmatpush1.msra.mxu0 0.0
        %991 = vmatprep.subr.mxu0 0.0
        %992 = vmatpush1.msra.mxu0 0.0
        %993 = vmatprep.subr.mxu0 0.0
        %994 = vmatpush1.msra.mxu0 0.0
        %995 = vmatprep.subr.mxu0 0.0
        %996 = vmatpush1.msra.mxu0 0.0
        %997 = vmatprep.subr.mxu0 0.0
        %998 = vmatpush1.msra.mxu0 0.0
        %999 = vmatprep.subr.mxu0 0.0
        %1000 = vmatpush1.msra.mxu0 0.0
        %1001 = vmatprep.subr.mxu0 0.0
        %1002 = vmatpush1.msra.mxu0 0.0
        %1003 = vmatprep.subr.mxu0 0.0
        %1004 = vmatpush1.msra.mxu0 0.0
        %1005 = vmatprep.subr.mxu0 0.0
        %1006 = vmatpush1.msra.mxu0 0.0
        %1007 = vmatprep.subr.mxu0 0.0
        %1008 = vmatpush1.msra.mxu0 0.0
        %1009 = vmatprep.subr.mxu0 0.0
        %1010 = vmatpush1.msra.mxu0 0.0
        %1011 = vmatprep.subr.mxu0 0.0
        %1012 = vmatpush1.msra.mxu0 0.0
        %1013 = vmatprep.subr.mxu0 0.0
        %1014 = vmatpush1.msra.mxu0 0.0
        %1015 = vmatprep.subr.mxu0 0.0
        %1016 = vmatpush1.msra.mxu0 0.0
        %1017 = vmatprep.subr.mxu0 0.0
        %1018 = vmatpush1.msra.mxu0 0.0
        %1019 = vmatprep.subr.mxu0 0.0
        %1020 = vmatpush1.msra.mxu0 0.0
        %1021 = vmatprep.subr.mxu0 0.0
        %1022 = vmatpush1.msra.mxu0 0.0
        %1023 = vmatprep.subr.mxu0 0.0
        %1024 = vmatpush1.msra.mxu0 0.0
        %1025 = vmatprep.subr.mxu0 0.0
        %1026 = vmatpush1.msra.mxu0 0.0
        %1027 = vmatprep.subr.mxu0 0.0
        %1028 = vmatpush1.msra.mxu0 0.0
        %1029 = vmatprep.subr.mxu0 0.0
        %1030 = vmatpush1.msra.mxu0 0.0
        %1031 = vmatprep.subr.mxu0 0.0
        %1032 = vmatpush1.msra.mxu0 0.0
        %1033 = vmatprep.mubr.f32.mxu0 0.0
        %1034 = vmatmul.mubr.f32.gmra.mrb[0].mxu0 %v967
        %v1035 = vpop.f32.mrb[0].mxu0
        %v1036 = vadd.f32 %v965, %v1035
        %v1037 = vpop.f32.mrb[0].mxu0
        %1038 = vdwg.mxu0
        %v1039 = vld [vmem:[#allocation2 + $0x6] sm:$0x1]
        %v1040 = vld [vmem:[#allocation2 + $0x7] sm:$0x1]
        %v1041 = vsel %vm465, %v1036, 0.0
        %1042 = vadd.xlane.f32.xlu0 %v1041
        %v1043 = vpop.xlane.xlu0 %1042
        %v1044 = vrcp.pop 32.0
        %v1045 = vmul.f32 %v1043, %v1044
        %v1046 = vsub.f32 %v1036, %v1045
        %v1047 = vmul.f32 %v1046, %v1046
        %v1048 = vsel %vm465, %v1047, 0.0
        %1049 = vadd.xlane.f32.xlu0 %v1048
        %v1050 = vpop.xlane.xlu0 %1049
        %v1051 = vmul.f32 %v1050, %v1044
        %v1052 = vadd.f32 %v1051, 1e-05
        %v1053 = vrsqrt.pop %v1052
        %v1054 = vmul.f32 %v1046, %v1053
        %v1055 = vlaneseq
        %v1056 = vshrl.u32 %v1055, 7
        %v1057 = vsub.s32 0, %v1056
        %v1058 = vrot.slane %v1039, %v1057
        %v1059 = vmul.f32 %v1054, %v1058
        %v1060 = vlaneseq
        %v1061 = vshrl.u32 %v1060, 7
        %v1062 = vsub.s32 0, %v1061
        %v1063 = vrot.slane %v1040, %v1062
        %v1064 = vadd.f32 %v1059, %v1063
        %v1065 = vmax.f32 %v1064, 0.0
        %v1066 = vld [vmem:[#allocation8] sm:$0xff]
        %v1067 = vld [vmem:[#allocation8 + $0x8] sm:$0xff]
        %v1068 = vld [vmem:[#allocation8 + $0x10] sm:$0xff]
        %v1069 = vld [vmem:[#allocation8 + $0x18] sm:$0xff]
        %v1070 = vld [vmem:[%s7] sm:$0xff]
        %v1071 = vld [vmem:[%s7 + $0x8] sm:$0xff]
        %v1072 = vld [vmem:[%s7 + $0x10] sm:$0xff]
        %v1073 = vld [vmem:[%s7 + $0x18] sm:$0xff]
        %v1075 = vsel %vm465, %v1065, 0
        %1077 = vmatprep.subr.mxu0 0.0
        %1078 = vmatpush1.msra.mxu0 %v1070
        %1079 = vmatprep.subr.mxu0 0.0
        %1080 = vmatpush1.msra.mxu0 %v1071
        %1081 = vmatprep.subr.mxu0 0.0
        %1082 = vmatpush1.msra.mxu0 %v1072
        %1083 = vmatprep.subr.mxu0 0.0
        %1084 = vmatpush1.msra.mxu0 %v1073
        %1085 = vmatprep.subr.mxu0 0.0
        %1086 = vmatpush1.msra.mxu0 0.0
        %1087 = vmatprep.subr.mxu0 0.0
        %1088 = vmatpush1.msra.mxu0 0.0
        %1089 = vmatprep.subr.mxu0 0.0
        %1090 = vmatpush1.msra.mxu0 0.0
        %1091 = vmatprep.subr.mxu0 0.0
        %1092 = vmatpush1.msra.mxu0 0.0
        %1093 = vmatprep.subr.mxu0 0.0
        %1094 = vmatpush1.msra.mxu0 0.0
        %1095 = vmatprep.subr.mxu0 0.0
        %1096 = vmatpush1.msra.mxu0 0.0
        %1097 = vmatprep.subr.mxu0 0.0
        %1098 = vmatpush1.msra.mxu0 0.0
        %1099 = vmatprep.subr.mxu0 0.0
        %1100 = vmatpush1.msra.mxu0 0.0
        %1101 = vmatprep.subr.mxu0 0.0
        %1102 = vmatpush1.msra.mxu0 0.0
        %1103 = vmatprep.subr.mxu0 0.0
        %1104 = vmatpush1.msra.mxu0 0.0
        %1105 = vmatprep.subr.mxu0 0.0
        %1106 = vmatpush1.msra.mxu0 0.0
        %1107 = vmatprep.subr.mxu0 0.0
        %1108 = vmatpush1.msra.mxu0 0.0
        %1109 = vmatprep.subr.mxu0 0.0
        %1110 = vmatpush1.msra.mxu0 0.0
        %1111 = vmatprep.subr.mxu0 0.0
        %1112 = vmatpush1.msra.mxu0 0.0
        %1113 = vmatprep.subr.mxu0 0.0
        %1114 = vmatpush1.msra.mxu0 0.0
        %1115 = vmatprep.subr.mxu0 0.0
        %1116 = vmatpush1.msra.mxu0 0.0
        %1117 = vmatprep.subr.mxu0 0.0
        %1118 = vmatpush1.msra.mxu0 0.0
        %1119 = vmatprep.subr.mxu0 0.0
        %1120 = vmatpush1.msra.mxu0 0.0
        %1121 = vmatprep.subr.mxu0 0.0
        %1122 = vmatpush1.msra.mxu0 0.0
        %1123 = vmatprep.subr.mxu0 0.0
        %1124 = vmatpush1.msra.mxu0 0.0
        %1125 = vmatprep.subr.mxu0 0.0
        %1126 = vmatpush1.msra.mxu0 0.0
        %1127 = vmatprep.subr.mxu0 0.0
        %1128 = vmatpush1.msra.mxu0 0.0
        %1129 = vmatprep.subr.mxu0 0.0
        %1130 = vmatpush1.msra.mxu0 0.0
        %1131 = vmatprep.subr.mxu0 0.0
        %1132 = vmatpush1.msra.mxu0 0.0
        %1133 = vmatprep.subr.mxu0 0.0
        %1134 = vmatpush1.msra.mxu0 0.0
        %1135 = vmatprep.subr.mxu0 0.0
        %1136 = vmatpush1.msra.mxu0 0.0
        %1137 = vmatprep.subr.mxu0 0.0
        %1138 = vmatpush1.msra.mxu0 0.0
        %1139 = vmatprep.subr.mxu0 0.0
        %1140 = vmatpush1.msra.mxu0 0.0
        %1141 = vmatprep.mubr.f32.mxu0 0.0
        %1142 = vmatmul.mubr.f32.gmra.mrb[0].mxu0 %v1075
        %v1143 = vpop.f32.mrb[0].mxu0
        %v1144 = vadd.f32 0.0, %v1143
        %v1145 = vpop.f32.mrb[0].mxu0
        %1146 = vdwg.mxu0
        %vm1155 = vcmask 1041409
        %v1156 = vsel %vm1155, %v797, %v790
        %vm1157 = vcmask 1042434
        %v1158 = vsel %vm1157, %v804, %v1156
        %vm1159 = vcmask 1043459
        %v1160 = vsel %vm1159, %v811, %v1158
        %vm1161 = vcmask 1044484
        %v1162 = vsel %vm1161, %v818, %v1160
        %vm1163 = vcmask 1045509
        %v1164 = vsel %vm1163, %v825, %v1162
        %vm1165 = vcmask 1046534
        %v1166 = vsel %vm1165, %v832, %v1164
        %vm1167 = vcmask 1047559
        %v1168 = vsel %vm1167, %v839, %v1166
        %v1169 = vsel %vm465, %v1168, 0
        %1171 = vmatprep.subr.mxu0 0.0
        %1172 = vmatpush1.msra.mxu0 %v1066
        %1173 = vmatprep.subr.mxu0 0.0
        %1174 = vmatpush1.msra.mxu0 %v1067
        %1175 = vmatprep.subr.mxu0 0.0
        %1176 = vmatpush1.msra.mxu0 %v1068
        %1177 = vmatprep.subr.mxu0 0.0
        %1178 = vmatpush1.msra.mxu0 %v1069
        %1179 = vmatprep.subr.mxu0 0.0
        %1180 = vmatpush1.msra.mxu0 0.0
        %1181 = vmatprep.subr.mxu0 0.0
        %1182 = vmatpush1.msra.mxu0 0.0
        %1183 = vmatprep.subr.mxu0 0.0
        %1184 = vmatpush1.msra.mxu0 0.0
        %1185 = vmatprep.subr.mxu0 0.0
        %1186 = vmatpush1.msra.mxu0 0.0
        %1187 = vmatprep.subr.mxu0 0.0
        %1188 = vmatpush1.msra.mxu0 0.0
        %1189 = vmatprep.subr.mxu0 0.0
        %1190 = vmatpush1.msra.mxu0 0.0
        %1191 = vmatprep.subr.mxu0 0.0
        %1192 = vmatpush1.msra.mxu0 0.0
        %1193 = vmatprep.subr.mxu0 0.0
        %1194 = vmatpush1.msra.mxu0 0.0
        %1195 = vmatprep.subr.mxu0 0.0
        %1196 = vmatpush1.msra.mxu0 0.0
        %1197 = vmatprep.subr.mxu0 0.0
        %1198 = vmatpush1.msra.mxu0 0.0
        %1199 = vmatprep.subr.mxu0 0.0
        %1200 = vmatpush1.msra.mxu0 0.0
        %1201 = vmatprep.subr.mxu0 0.0
        %1202 = vmatpush1.msra.mxu0 0.0
        %1203 = vmatprep.subr.mxu0 0.0
        %1204 = vmatpush1.msra.mxu0 0.0
        %1205 = vmatprep.subr.mxu0 0.0
        %1206 = vmatpush1.msra.mxu0 0.0
        %1207 = vmatprep.subr.mxu0 0.0
        %1208 = vmatpush1.msra.mxu0 0.0
        %1209 = vmatprep.subr.mxu0 0.0
        %1210 = vmatpush1.msra.mxu0 0.0
        %1211 = vmatprep.subr.mxu0 0.0
        %1212 = vmatpush1.msra.mxu0 0.0
        %1213 = vmatprep.subr.mxu0 0.0
        %1214 = vmatpush1.msra.mxu0 0.0
        %1215 = vmatprep.subr.mxu0 0.0
        %1216 = vmatpush1.msra.mxu0 0.0
        %1217 = vmatprep.subr.mxu0 0.0
        %1218 = vmatpush1.msra.mxu0 0.0
        %1219 = vmatprep.subr.mxu0 0.0
        %1220 = vmatpush1.msra.mxu0 0.0
        %1221 = vmatprep.subr.mxu0 0.0
        %1222 = vmatpush1.msra.mxu0 0.0
        %1223 = vmatprep.subr.mxu0 0.0
        %1224 = vmatpush1.msra.mxu0 0.0
        %1225 = vmatprep.subr.mxu0 0.0
        %1226 = vmatpush1.msra.mxu0 0.0
        %1227 = vmatprep.subr.mxu0 0.0
        %1228 = vmatpush1.msra.mxu0 0.0
        %1229 = vmatprep.subr.mxu0 0.0
        %1230 = vmatpush1.msra.mxu0 0.0
        %1231 = vmatprep.subr.mxu0 0.0
        %1232 = vmatpush1.msra.mxu0 0.0
        %1233 = vmatprep.subr.mxu0 0.0
        %1234 = vmatpush1.msra.mxu0 0.0
        %1235 = vmatprep.mubr.f32.mxu0 0.0
        %1236 = vmatmul.mubr.f32.gmra.mrb[0].mxu0 %v1169
        %v1237 = vpop.f32.mrb[0].mxu0
        %v1238 = vadd.f32 %v1144, %v1237
        %v1239 = vpop.f32.mrb[0].mxu0
        %1240 = vdwg.mxu0
        %v1241 = vld [vmem:[#allocation2 + $0x8] sm:$0x1]
        %v1242 = vlaneseq
        %v1243 = vshrl.u32 %v1242, 7
        %v1244 = vsub.s32 0, %v1243
        %v1245 = vrot.slane %v1241, %v1244
        %v1246 = vadd.f32 %v1238, %v1245
        %v1247 = vld [vmem:[#allocation2 + $0x9] sm:$0x1]
        %v1248 = vld [vmem:[#allocation2 + $0xa] sm:$0x1]
        %v1249 = vsel %vm465, %v1246, 0.0
        %1250 = vadd.xlane.f32.xlu0 %v1249
        %v1251 = vpop.xlane.xlu0 %1250
        %v1252 = vmul.f32 %v1251, %v1044
        %v1253 = vsub.f32 %v1246, %v1252
        %v1254 = vmul.f32 %v1253, %v1253
        %v1255 = vsel %vm465, %v1254, 0.0
        %1256 = vadd.xlane.f32.xlu0 %v1255
        %v1257 = vpop.xlane.xlu0 %1256
        %v1258 = vmul.f32 %v1257, %v1044
        %v1259 = vadd.f32 %v1258, 1e-05
        %v1260 = vrsqrt.pop %v1259
        %v1261 = vmul.f32 %v1253, %v1260
        %v1262 = vlaneseq
        %v1263 = vshrl.u32 %v1262, 7
        %v1264 = vsub.s32 0, %v1263
        %v1265 = vrot.slane %v1247, %v1264
        %v1266 = vmul.f32 %v1261, %v1265
        %v1267 = vlaneseq
        %v1268 = vshrl.u32 %v1267, 7
        %v1269 = vsub.s32 0, %v1268
        %v1270 = vrot.slane %v1248, %v1269
        %v1271 = vadd.f32 %v1266, %v1270
        %v1272 = vmax.f32 %v1271, 0.0
        %v1273 = vld [vmem:[%s8] sm:$0xff]
        %v1274 = vld [vmem:[%s8 + $0x8] sm:$0xff]
        %v1275 = vld [vmem:[%s8 + $0x10] sm:$0xff]
        %v1276 = vld [vmem:[%s8 + $0x18] sm:$0xff]
        %v1277 = vld [vmem:[#allocation2 + $0xb] sm:$0x1]
        %v1278 = vlaneseq
        %v1279 = vshrl.u32 %v1278, 7
        %v1280 = vsub.s32 0, %v1279
        %v1281 = vrot.slane %v1277, %v1280
        %v1283 = vsel %vm465, %v1272, 0
        %1285 = vmatprep.subr.mxu0 0.0
        %1286 = vmatpush1.msra.mxu0 %v1273
        %1287 = vmatprep.subr.mxu0 0.0
        %1288 = vmatpush1.msra.mxu0 %v1274
        %1289 = vmatprep.subr.mxu0 0.0
        %1290 = vmatpush1.msra.mxu0 %v1275
        %1291 = vmatprep.subr.mxu0 0.0
        %1292 = vmatpush1.msra.mxu0 %v1276
        %1293 = vmatprep.subr.mxu0 0.0
        %1294 = vmatpush1.msra.mxu0 0.0
        %1295 = vmatprep.subr.mxu0 0.0
        %1296 = vmatpush1.msra.mxu0 0.0
        %1297 = vmatprep.subr.mxu0 0.0
        %1298 = vmatpush1.msra.mxu0 0.0
        %1299 = vmatprep.subr.mxu0 0.0
        %1300 = vmatpush1.msra.mxu0 0.0
        %1301 = vmatprep.subr.mxu0 0.0
        %1302 = vmatpush1.msra.mxu0 0.0
        %1303 = vmatprep.subr.mxu0 0.0
        %1304 = vmatpush1.msra.mxu0 0.0
        %1305 = vmatprep.subr.mxu0 0.0
        %1306 = vmatpush1.msra.mxu0 0.0
        %1307 = vmatprep.subr.mxu0 0.0
        %1308 = vmatpush1.msra.mxu0 0.0
        %1309 = vmatprep.subr.mxu0 0.0
        %1310 = vmatpush1.msra.mxu0 0.0
        %1311 = vmatprep.subr.mxu0 0.0
        %1312 = vmatpush1.msra.mxu0 0.0
        %1313 = vmatprep.subr.mxu0 0.0
        %1314 = vmatpush1.msra.mxu0 0.0
        %1315 = vmatprep.subr.mxu0 0.0
        %1316 = vmatpush1.msra.mxu0 0.0
        %1317 = vmatprep.subr.mxu0 0.0
        %1318 = vmatpush1.msra.mxu0 0.0
        %1319 = vmatprep.subr.mxu0 0.0
        %1320 = vmatpush1.msra.mxu0 0.0
        %1321 = vmatprep.subr.mxu0 0.0
        %1322 = vmatpush1.msra.mxu0 0.0
        %1323 = vmatprep.subr.mxu0 0.0
        %1324 = vmatpush1.msra.mxu0 0.0
        %1325 = vmatprep.subr.mxu0 0.0
        %1326 = vmatpush1.msra.mxu0 0.0
        %1327 = vmatprep.subr.mxu0 0.0
        %1328 = vmatpush1.msra.mxu0 0.0
        %1329 = vmatprep.subr.mxu0 0.0
        %1330 = vmatpush1.msra.mxu0 0.0
        %1331 = vmatprep.subr.mxu0 0.0
        %1332 = vmatpush1.msra.mxu0 0.0
        %1333 = vmatprep.subr.mxu0 0.0
        %1334 = vmatpush1.msra.mxu0 0.0
        %1335 = vmatprep.subr.mxu0 0.0
        %1336 = vmatpush1.msra.mxu0 0.0
        %1337 = vmatprep.subr.mxu0 0.0
        %1338 = vmatpush1.msra.mxu0 0.0
        %1339 = vmatprep.subr.mxu0 0.0
        %1340 = vmatpush1.msra.mxu0 0.0
        %1341 = vmatprep.subr.mxu0 0.0
        %1342 = vmatpush1.msra.mxu0 0.0
        %1343 = vmatprep.subr.mxu0 0.0
        %1344 = vmatpush1.msra.mxu0 0.0
        %1345 = vmatprep.subr.mxu0 0.0
        %1346 = vmatpush1.msra.mxu0 0.0
        %1347 = vmatprep.subr.mxu0 0.0
        %1348 = vmatpush1.msra.mxu0 0.0
        %1349 = vmatprep.mubr.f32.mxu0 0.0
        %1350 = vmatmul.mubr.f32.gmra.mrb[0].mxu0 %v1283
        %v1351 = vpop.f32.mrb[0].mxu0
        %v1352 = vadd.f32 %v1281, %v1351
        %v1353 = vpop.f32.mrb[0].mxu0
        %1354 = vdwg.mxu0
        %v1355 = vld [vmem:[#allocation2 + $0xc] sm:$0x1]
        %v1356 = vld [vmem:[#allocation2 + $0xd] sm:$0x1]
        %vm1357 = vcmask 130048
        %v1358 = vsel %vm1357, %v1352, 0.0
        %1359 = vadd.xlane.f32.xlu0 %v1358
        %v1360 = vpop.xlane.xlu0 %1359
        %v1361 = vrcp.pop 16.0
        %v1362 = vmul.f32 %v1360, %v1361
        %v1363 = vsub.f32 %v1352, %v1362
        %v1364 = vmul.f32 %v1363, %v1363
        %v1365 = vsel %vm1357, %v1364, 0.0
        %1366 = vadd.xlane.f32.xlu0 %v1365
        %v1367 = vpop.xlane.xlu0 %1366
        %v1368 = vmul.f32 %v1367, %v1361
        %v1369 = vadd.f32 %v1368, 1e-05
        %v1370 = vrsqrt.pop %v1369
        %v1371 = vmul.f32 %v1363, %v1370
        %v1372 = vlaneseq
        %v1373 = vshrl.u32 %v1372, 7
        %v1374 = vsub.s32 0, %v1373
        %v1375 = vrot.slane %v1355, %v1374
        %v1376 = vmul.f32 %v1371, %v1375
        %v1377 = vlaneseq
        %v1378 = vshrl.u32 %v1377, 7
        %v1379 = vsub.s32 0, %v1378
        %v1380 = vrot.slane %v1356, %v1379
        %v1381 = vadd.f32 %v1376, %v1380
        %v1382 = vmax.f32 %v1381, 0.0
        %v1383 = vld [vmem:[#allocation10] sm:$0xff]
        %v1384 = vld [vmem:[#allocation10 + $0x8] sm:$0xff]
        %v1385 = vld [vmem:[#allocation2 + $0xe] sm:$0x1]
        %v1386 = vlaneseq
        %v1387 = vshrl.u32 %v1386, 7
        %v1388 = vsub.s32 0, %v1387
        %v1389 = vrot.slane %v1385, %v1388
        %v1391 = vsel %vm1357, %v1382, 0
        %1393 = vmatprep.subr.mxu0 0.0
        %1394 = vmatpush1.msra.mxu0 %v1383
        %1395 = vmatprep.subr.mxu0 0.0
        %1396 = vmatpush1.msra.mxu0 %v1384
        %1397 = vmatprep.subr.mxu0 0.0
        %1398 = vmatpush1.msra.mxu0 0.0
        %1399 = vmatprep.subr.mxu0 0.0
        %1400 = vmatpush1.msra.mxu0 0.0
        %1401 = vmatprep.subr.mxu0 0.0
        %1402 = vmatpush1.msra.mxu0 0.0
        %1403 = vmatprep.subr.mxu0 0.0
        %1404 = vmatpush1.msra.mxu0 0.0
        %1405 = vmatprep.subr.mxu0 0.0
        %1406 = vmatpush1.msra.mxu0 0.0
        %1407 = vmatprep.subr.mxu0 0.0
        %1408 = vmatpush1.msra.mxu0 0.0
        %1409 = vmatprep.subr.mxu0 0.0
        %1410 = vmatpush1.msra.mxu0 0.0
        %1411 = vmatprep.subr.mxu0 0.0
        %1412 = vmatpush1.msra.mxu0 0.0
        %1413 = vmatprep.subr.mxu0 0.0
        %1414 = vmatpush1.msra.mxu0 0.0
        %1415 = vmatprep.subr.mxu0 0.0
        %1416 = vmatpush1.msra.mxu0 0.0
        %1417 = vmatprep.subr.mxu0 0.0
        %1418 = vmatpush1.msra.mxu0 0.0
        %1419 = vmatprep.subr.mxu0 0.0
        %1420 = vmatpush1.msra.mxu0 0.0
        %1421 = vmatprep.subr.mxu0 0.0
        %1422 = vmatpush1.msra.mxu0 0.0
        %1423 = vmatprep.subr.mxu0 0.0
        %1424 = vmatpush1.msra.mxu0 0.0
        %1425 = vmatprep.subr.mxu0 0.0
        %1426 = vmatpush1.msra.mxu0 0.0
        %1427 = vmatprep.subr.mxu0 0.0
        %1428 = vmatpush1.msra.mxu0 0.0
        %1429 = vmatprep.subr.mxu0 0.0
        %1430 = vmatpush1.msra.mxu0 0.0
        %1431 = vmatprep.subr.mxu0 0.0
        %1432 = vmatpush1.msra.mxu0 0.0
        %1433 = vmatprep.subr.mxu0 0.0
        %1434 = vmatpush1.msra.mxu0 0.0
        %1435 = vmatprep.subr.mxu0 0.0
        %1436 = vmatpush1.msra.mxu0 0.0
        %1437 = vmatprep.subr.mxu0 0.0
        %1438 = vmatpush1.msra.mxu0 0.0
        %1439 = vmatprep.subr.mxu0 0.0
        %1440 = vmatpush1.msra.mxu0 0.0
        %1441 = vmatprep.subr.mxu0 0.0
        %1442 = vmatpush1.msra.mxu0 0.0
        %1443 = vmatprep.subr.mxu0 0.0
        %1444 = vmatpush1.msra.mxu0 0.0
        %1445 = vmatprep.subr.mxu0 0.0
        %1446 = vmatpush1.msra.mxu0 0.0
        %1447 = vmatprep.subr.mxu0 0.0
        %1448 = vmatpush1.msra.mxu0 0.0
        %1449 = vmatprep.subr.mxu0 0.0
        %1450 = vmatpush1.msra.mxu0 0.0
        %1451 = vmatprep.subr.mxu0 0.0
        %1452 = vmatpush1.msra.mxu0 0.0
        %1453 = vmatprep.subr.mxu0 0.0
        %1454 = vmatpush1.msra.mxu0 0.0
        %1455 = vmatprep.subr.mxu0 0.0
        %1456 = vmatpush1.msra.mxu0 0.0
        %1457 = vmatprep.mubr.f32.mxu0 0.0
        %1458 = vmatmul.mubr.f32.gmra.mrb[0].mxu0 %v1391
        %v1459 = vpop.f32.mrb[0].mxu0
        %v1460 = vadd.f32 %v1389, %v1459
        %v1461 = vpop.f32.mrb[0].mxu0
        %1462 = vdwg.mxu0
        %1463 = vst [vmem:[%s437] sm:$0xff] %v1460
        %s1464 = sand.u32 %s255, 1
        %s1465 = scalar_lea.sflag [#allocation4], %s1464
        %s1466 = sand.u32 %s255, 1
        %s1467 = smul.addr %s1466, 8
        %s1468 = scalar_lea.vmem [#allocation11], %s1467
        // Predicated region
        $region81: #{tpu_custom_call.1} parent=59 // pred_check
          %p1469 = pneg %p265
        $region82: #{tpu_custom_call.1} parent=59 // pred_check_branch
          %1471 = sbr.rel (%p1469) target = $region84
        $region83: #{tpu_custom_call.1} parent=59 // pred_region
          %s1473 = ssub.s32 128, 128
          %1474 = vsyncadd %s1465, %s1473
          %s1475 = smul.addr %s27, 128
          %s1476 = scalar_lea.hbm %s10, %s1475
          %s1478 = sshll.u32 %s1468, 4
          %s1479 = int_to_ptr.vmem [resolvable:$true] %s1478
          %1481 = dma.vmem_to_hbm [thread:$0]  %s1479, 128, %s1476, %s1465
        $region84: #{tpu_custom_call.1} parent=59 // pred_fallthru
          _
      $region60: #{tpu_custom_call.1} parent=5 // pred_fallthru
        _
      %p1482 = scmp.le.s32.totalorder 2, %s22
      // Predicated region
      $region85: #{tpu_custom_call.1} parent=5 // pred_check
        %p1483 = pneg %p1482
      $region86: #{tpu_custom_call.1} parent=5 // pred_check_branch
        %1485 = sbr.rel (%p1483) target = $region88
      $region87: #{tpu_custom_call.1} parent=5 // pred_region
        %s1486 = ssub.s32 %s22, 2
        // Predicated region
        $region89: #{tpu_custom_call.1} parent=87 // pred_check
          %p1487 = pneg %p271
        $region90: #{tpu_custom_call.1} parent=87 // pred_check_branch
          %1489 = sbr.rel (%p1487) target = $region92
        $region91: #{tpu_custom_call.1} parent=87 // pred_region
          %s1490 = sand.u32 %s256, 1
          %s1491 = scalar_lea.sflag [#allocation4], %s1490
          %s1492 = sand.u32 %s256, 1
          %s1493 = smul.addr %s1492, 8
          %s1494 = scalar_lea.vmem [#allocation11], %s1493
          %1495 = dma.done %s1491, 128
        $region92: #{tpu_custom_call.1} parent=87 // pred_fallthru
          _
      $region88: #{tpu_custom_call.1} parent=5 // pred_fallthru
        _
    $region6: #{tpu_custom_call.1} parent=1 // loop_footer
      %s26 = sadd.s32 1, %s22
    $region7: #{tpu_custom_call.1} parent=1 // loop_footer_branch
      %21 = sbr.rel target = $region3
    $region8: #{tpu_custom_call.1} parent=1 // loop_exit
      _
    %1496 = vsyncpa [#allocation3], 1
    %s1497 = scalar_lea.sflag [#allocation3], 1
    %1498 = vsyncpa %s1497, 1
    %1499 = vsyncpa [#allocation6], 1
    %1500 = vsyncpa [#allocation9], 1
    %1501 = vsyncpa [#allocation4], 1
    %s1502 = scalar_lea.sflag [#allocation4], 1
    %1503 = vsyncpa %s1502, 1

</llo_original>
